<compile_context>
chip_gen: v7x
topology: tpu7x:2x2x1
jax: 0.10.0
libtpu: 0.0.40
codegen_flags: <defaults>
</compile_context>

<pallas_src>
import functools
import math

import jax
import jax.numpy as jnp
from jax import lax
from jax.experimental import pallas as pl
from jax.experimental.pallas import tpu as pltpu

# ----------------------------- config -----------------------------
DIM = 32
HEAD_DIM = 16
NUM_HEAD = 2
HIDDEN_DIM = 64
NUM_LAYERS = 2
SHARED_WEIGHT = False
HASHCODE_LEN = 8
LN_EPS = 1e-5

HDH = NUM_HEAD * HEAD_DIM          # 32
QKV_DIM = 3 * HDH                  # 96
VEC_ROWS = 8                       # packed per-layer vector rows
VEC_LANES = 128                    # lane-padded row width

B, N = 2, 8   # batch, sequence length (small test shapes)


# ---------------- in-kernel math helpers (Mosaic-friendly, f32-accurate) ----------------
def _asin_poly(z):
    # Cephes asinf polynomial; valid for z = x*x with |x| <= 0.5
    p = jnp.float32(4.2163199048e-2)
    p = p * z + jnp.float32(2.4181311049e-2)
    p = p * z + jnp.float32(4.5470025998e-2)
    p = p * z + jnp.float32(7.4953002686e-2)
    p = p * z + jnp.float32(1.6666752422e-1)
    return p


def _acos(x):
    # float32-accurate arccos using only sqrt / mul / add / select
    half_pi = jnp.float32(math.pi / 2.0)
    pi = jnp.float32(math.pi)
    ax = jnp.abs(x)
    # |x| <= 0.5 : acos(x) = pi/2 - asin(x)
    z = x * x
    small = half_pi - (x + x * z * _asin_poly(z))
    # |x| > 0.5 : acos(|x|) = 2 asin(sqrt((1-|x|)/2)) ; acos(-|x|) = pi - acos(|x|)
    w = jnp.float32(0.5) * (jnp.float32(1.0) - ax)
    s = jnp.sqrt(w)
    big_pos = jnp.float32(2.0) * (s + s * w * _asin_poly(w))
    big = jnp.where(x >= 0, big_pos, pi - big_pos)
    return jnp.where(ax <= jnp.float32(0.5), small, big)


def _erf(x):
    # Abramowitz & Stegun 7.1.26 (max abs error ~1.5e-7)
    a1 = jnp.float32(0.254829592)
    a2 = jnp.float32(-0.284496736)
    a3 = jnp.float32(1.421413741)
    a4 = jnp.float32(-1.453152027)
    a5 = jnp.float32(1.061405429)
    p = jnp.float32(0.3275911)
    ax = jnp.abs(x)
    t = jnp.float32(1.0) / (jnp.float32(1.0) + p * ax)
    poly = ((((a5 * t + a4) * t + a3) * t + a2) * t + a1) * t
    y = jnp.float32(1.0) - poly * jnp.exp(-ax * ax)
    return jnp.where(x >= 0, y, -y)


def _gelu(x):
    # exact (erf-based) GELU, matching torch nn.GELU() default
    return jnp.float32(0.5) * x * (jnp.float32(1.0) + _erf(x * jnp.float32(1.0 / math.sqrt(2.0))))


def _int_pow(x, n: int):
    # exponentiation by repeated squaring (static python int n >= 1) -> pure VPU multiplies
    assert n >= 1
    result = None
    base = x
    while n:
        if n & 1:
            result = base if result is None else result * base
        n >>= 1
        if n:
            base = base * base
    return result


def _ln(x, g, b):
    mu = jnp.mean(x, axis=-1, keepdims=True)
    xc = x - mu
    var = jnp.mean(xc * xc, axis=-1, keepdims=True)
    return xc * lax.rsqrt(var + jnp.float32(LN_EPS)) * g + b


# ----------------------------- fused backbone kernel -----------------------------
def _backbone_kernel(mask_ref, x_ref, wqkv_ref, wo_ref, w1_ref, w2_ref, vec_ref,
                     o_ref, *, nb, ns):
    x = x_ref[...]                 # (B*N, D)  flattened activation slab
    mcol = mask_ref[...]           # (B*N, 1)  sublane-dense token mask (no in-kernel build)

    inv_pi = jnp.float32(1.0 / math.pi)
    num_layers = wqkv_ref.shape[0]

    # Static unroll over layers (L == 2).
    # TODO(synk): switch to lax.fori_loop with dynamic ref indexing if NUM_LAYERS grows.
    for l in range(num_layers):
        # packed per-layer vectors: one (8, 128) slab, static row/lane slices
        vec = vec_ref[l]
        ln1_g = vec[0:1, :DIM]
        ln1_b = vec[1:2, :DIM]
        bqkv = vec[2:3, :QKV_DIM]
        bo = vec[3:4, :DIM]
        ln2_g = vec[4:5, :DIM]
        ln2_b = vec[5:6, :DIM]
        b1 = vec[6:7, :HIDDEN_DIM]
        b2 = vec[7:8, :DIM]

        # ---------------- attention sublayer ----------------
        xn = _ln(x, ln1_g, ln1_b)
        qkv = jnp.dot(xn, wqkv_ref[l], preferred_element_type=jnp.float32) + bqkv
        qkv = qkv * mcol                             # mask token rows of Q|K|V at once

        # NOTE: with D=32 no head slice can be 128-lane aligned; slices stay within one vreg.
        heads = []
        for h in range(NUM_HEAD):                    # static head loop
            q = qkv[:, h * HEAD_DIM:(h + 1) * HEAD_DIM]
            k = qkv[:, HDH + h * HEAD_DIM: HDH + (h + 1) * HEAD_DIM]
            v = qkv[:, 2 * HDH + h * HEAD_DIM: 2 * HDH + (h + 1) * HEAD_DIM]
            # F.normalize(p=2): rsqrt keeps this on the EUP slot; zero rows stay zero.
            q = q * lax.rsqrt(jnp.sum(q * q, axis=-1, keepdims=True) + jnp.float32(1e-24))
            k = k * lax.rsqrt(jnp.sum(k * k, axis=-1, keepdims=True) + jnp.float32(1e-24))
            # batched per-example attention: (B, N, Dh) views of the flattened slab
            q3 = q.reshape(nb, ns, HEAD_DIM)
            k3 = k.reshape(nb, ns, HEAD_DIM)
            v3 = v.reshape(nb, ns, HEAD_DIM)
            qk = jnp.einsum('bqd,bkd->bqk', q3, k3, preferred_element_type=jnp.float32)
            qk = jnp.minimum(jnp.maximum(qk, jnp.float32(-1.0)), jnp.float32(1.0))
            prob = _int_pow(jnp.float32(1.0) - _acos(qk) * inv_pi, HASHCODE_LEN)
            # TODO(synk): for production N, tile this prob @ v flash-style over KV blocks
            # (prob is elementwise, no online softmax needed) instead of a resident (N,N) tile.
            out3 = jnp.einsum('bqk,bkd->bqd', prob, v3, preferred_element_type=jnp.float32)
            heads.append(out3.reshape(nb * ns, HEAD_DIM))

        # single output projection over the lane-concatenated heads
        attn = jnp.concatenate(heads, axis=-1)       # (B*N, HDH)
        x = jnp.dot(attn, wo_ref[l], preferred_element_type=jnp.float32) + bo + x  # dropout1=id

        # ---------------- MLP sublayer ----------------
        xn2 = _ln(x, ln2_g, ln2_b)
        hid = _gelu(jnp.dot(xn2, w1_ref[l], preferred_element_type=jnp.float32) + b1)
        x = jnp.dot(hid, w2_ref[l], preferred_element_type=jnp.float32) + b2 + x

    # final LayerNorm * mask
    vecf = vec_ref[num_layers]
    o_ref[...] = _ln(x, vecf[0:1, :DIM], vecf[1:2, :DIM]) * mcol


def backbone(params, x, mask):
    b, n, d = x.shape
    m_rows = b * n
    layers = params["layers"]
    L = len(layers)

    # stacked weight matrices (kept as real matmul operands)
    wqkv = jnp.stack([jnp.concatenate([lp["wq"], lp["wk"], lp["wv"]], axis=1) for lp in layers])
    wo = jnp.stack([lp["wo"] for lp in layers])
    w1 = jnp.stack([lp["w1"] for lp in layers])
    w2 = jnp.stack([lp["w2"] for lp in layers])

    # pack all tiny per-layer vectors into one lane-padded (L+1, 8, 128) array
    def row(v):
        v = v.astype(jnp.float32)
        return jnp.pad(v, (0, VEC_LANES - v.shape[0]))

    vec_layers = [
        jnp.stack([
            row(lp["ln1_g"]), row(lp["ln1_b"]),
            row(jnp.concatenate([lp["bq"], lp["bk"], lp["bv"]])),
            row(lp["bo"]),
            row(lp["ln2_g"]), row(lp["ln2_b"]),
            row(lp["b1"]), row(lp["b2"]),
        ])
        for lp in layers
    ]
    vec_final = jnp.zeros((VEC_ROWS, VEC_LANES), jnp.float32)
    vec_final = vec_final.at[0, :d].set(params["lnf_g"]).at[1, :d].set(params["lnf_b"])
    vecs = jnp.stack(vec_layers + [vec_final])          # (L+1, 8, 128)

    # flatten batch: LN / projections / MLP are row-wise; attention re-batches in-kernel
    x_flat = x.reshape(m_rows, d).astype(jnp.float32)
    mask_col = mask.reshape(m_rows, 1).astype(jnp.float32)

    kernel = functools.partial(_backbone_kernel, nb=b, ns=n)

    out_flat = pl.pallas_call(
        kernel,
        out_shape=jax.ShapeDtypeStruct((m_rows, d), jnp.float32),
        grid=(1,),                                       # single grid step; whole problem in VMEM
        in_specs=[
            pl.BlockSpec((m_rows, 1), lambda i: (0, 0)),           # token mask (B*N, 1)
            pl.BlockSpec((m_rows, d), lambda i: (0, 0)),           # activations (B*N, D)
            pl.BlockSpec((L, d, QKV_DIM), lambda i: (0, 0, 0)),    # fused QKV proj
            pl.BlockSpec((L, HDH, d), lambda i: (0, 0, 0)),        # output proj
            pl.BlockSpec((L, d, HIDDEN_DIM), lambda i: (0, 0, 0)), # MLP fc1
            pl.BlockSpec((L, HIDDEN_DIM, d), lambda i: (0, 0, 0)), # MLP fc2
            pl.BlockSpec((L + 1, VEC_ROWS, VEC_LANES), lambda i: (0, 0, 0)),  # packed vectors
        ],
        out_specs=pl.BlockSpec((m_rows, d), lambda i: (0, 0)),
        compiler_params=pltpu.CompilerParams(dimension_semantics=("arbitrary",)),
    )(mask_col, x_flat, wqkv, wo, w1, w2, vecs)

    return out_flat.reshape(b, n, d)


# ----------------------------- pure-JAX reference -----------------------------
def split_heads(x, b, n):
    return x.reshape(b, n, NUM_HEAD, HEAD_DIM).transpose(0, 2, 1, 3)


def combine_heads(x):
    b, h, n, dh = x.shape
    return x.transpose(0, 2, 1, 3).reshape(b, n, h * dh)


def ref_layernorm(x, g, b):
    mu = x.mean(-1, keepdims=True)
    var = ((x - mu) ** 2).mean(-1, keepdims=True)
    return (x - mu) / jnp.sqrt(var + LN_EPS) * g + b


def ref_yoso(q, k, v, mask):
    m = mask[:, None, :, None]
    q = q * m
    k = k * m
    v = v * m
    q = q / jnp.maximum(jnp.sqrt((q * q).sum(-1, keepdims=True)), 1e-12)
    k = k / jnp.maximum(jnp.sqrt((k * k).sum(-1, keepdims=True)), 1e-12)
    qk = jnp.clip(jnp.einsum("bhqd,bhkd->bhqk", q, k), -1.0, 1.0)
    prob = (1.0 - jnp.arccos(qk) / math.pi) ** HASHCODE_LEN
    return jnp.einsum("bhqk,bhkd->bhqd", prob, v)


def ref_block(p, x, mask):
    b, n, d = x.shape
    xn = ref_layernorm(x, p["ln1_g"], p["ln1_b"])
    q = split_heads(xn @ p["wq"] + p["bq"], b, n)
    k = split_heads(xn @ p["wk"] + p["bk"], b, n)
    v = split_heads(xn @ p["wv"] + p["bv"], b, n)
    a = combine_heads(ref_yoso(q, k, v, mask))
    x = (a @ p["wo"] + p["bo"]) + x
    xn2 = ref_layernorm(x, p["ln2_g"], p["ln2_b"])
    h = jax.nn.gelu(xn2 @ p["w1"] + p["b1"], approximate=False)
    x = (h @ p["w2"] + p["b2"]) + x
    return x


def ref_backbone(params, x, mask):
    for lp in params["layers"]:
        x = ref_block(lp, x, mask)
    return ref_layernorm(x, params["lnf_g"], params["lnf_b"]) * mask[:, :, None]


# ----------------------------- deterministic parameter init -----------------------------
def init_linear(key, din, dout):
    k1, k2 = jax.random.split(key)
    bound = 1.0 / math.sqrt(din)
    w = jax.random.uniform(k1, (din, dout), jnp.float32, -bound, bound)
    b = jax.random.uniform(k2, (dout,), jnp.float32, -bound, bound)
    return w, b


def init_block(key):
    ks = jax.random.split(key, 6)
    wq, bq = init_linear(ks[0], DIM, HDH)
    wk, bk = init_linear(ks[1], DIM, HDH)
    wv, bv = init_linear(ks[2], DIM, HDH)
    wo, bo = init_linear(ks[3], HDH, DIM)
    w1, b1 = init_linear(ks[4], DIM, HIDDEN_DIM)
    w2, b2 = init_linear(ks[5], HIDDEN_DIM, DIM)
    return dict(
        ln1_g=jnp.ones((DIM,), jnp.float32), ln1_b=jnp.zeros((DIM,), jnp.float32),
        wq=wq, bq=bq, wk=wk, bk=bk, wv=wv, bv=bv, wo=wo, bo=bo,
        ln2_g=jnp.ones((DIM,), jnp.float32), ln2_b=jnp.zeros((DIM,), jnp.float32),
        w1=w1, b1=b1, w2=w2, b2=b2,
    )


def init_params(key):
    keys = jax.random.split(key, NUM_LAYERS)
    if SHARED_WEIGHT:
        blk = init_block(keys[0])
        layers = [blk] * NUM_LAYERS   # NOTE: stacks identical weights (wasteful but correct)
    else:
        layers = [init_block(k) for k in keys]
    return dict(layers=layers,
                lnf_g=jnp.ones((DIM,), jnp.float32),
                lnf_b=jnp.zeros((DIM,), jnp.float32))


# ----------------------------- main -----------------------------
if __name__ == "__main__":
    root = jax.random.PRNGKey(0)
    kp, kx = jax.random.split(root)
    params = init_params(kp)

    x = jax.random.normal(kx, (B, N, DIM), jnp.float32)
    mask = jnp.concatenate(
        [jnp.ones((1, N), jnp.float32),
         jnp.concatenate([jnp.ones((1, N - 3), jnp.float32),
                          jnp.zeros((1, 3), jnp.float32)], axis=1)], axis=0)

    out = backbone(params, x, mask)
    out = jax.block_until_ready(out)

    ref = ref_backbone(params, x, mask)
    err = float(jnp.max(jnp.abs(out - ref)))
    assert out.shape == (B, N, DIM) and out.dtype == jnp.float32
    assert err < 2e-3, f"mismatch vs reference: max abs err = {err}"
    print("KERNEL_OK")
</pallas_src>

<mosaic_0001>
module attributes {stable_mosaic.version = 11 : i64} {
  func.func @_backbone_kernel(%arg0: i32, %arg1: memref<16x1xf32, #tpu.memory_space<vmem>>, %arg2: memref<16x32xf32, #tpu.memory_space<vmem>>, %arg3: memref<2x32x96xf32, #tpu.memory_space<vmem>>, %arg4: memref<2x32x32xf32, #tpu.memory_space<vmem>>, %arg5: memref<2x32x64xf32, #tpu.memory_space<vmem>>, %arg6: memref<2x64x32xf32, #tpu.memory_space<vmem>>, %arg7: memref<3x8x128xf32, #tpu.memory_space<vmem>>, %arg8: memref<16x32xf32, #tpu.memory_space<vmem>>) attributes {dimension_semantics = [#tpu.dimension_semantics<arbitrary>], iteration_bounds = array<i64: 1>, scalar_prefetch = 0 : i64, scratch_operands = 0 : i64, tpu.core_type = #tpu.core_type<tc>, window_params = [{pipeline_mode = #tpu.pipeline_mode<synchronous>, transform_indices = @transform_0, window_bounds = array<i64: 16, 1>}, {pipeline_mode = #tpu.pipeline_mode<synchronous>, transform_indices = @transform_1, window_bounds = array<i64: 16, 32>}, {pipeline_mode = #tpu.pipeline_mode<synchronous>, transform_indices = @transform_2, window_bounds = array<i64: 2, 32, 96>}, {pipeline_mode = #tpu.pipeline_mode<synchronous>, transform_indices = @transform_3, window_bounds = array<i64: 2, 32, 32>}, {pipeline_mode = #tpu.pipeline_mode<synchronous>, transform_indices = @transform_4, window_bounds = array<i64: 2, 32, 64>}, {pipeline_mode = #tpu.pipeline_mode<synchronous>, transform_indices = @transform_5, window_bounds = array<i64: 2, 64, 32>}, {pipeline_mode = #tpu.pipeline_mode<synchronous>, transform_indices = @transform_6, window_bounds = array<i64: 3, 8, 128>}, {pipeline_mode = #tpu.pipeline_mode<synchronous>, transform_indices = @transform_7, window_bounds = array<i64: 16, 32>}]} {
    %c0 = arith.constant 0 : index
    %c0_0 = arith.constant 0 : index
    %0 = vector.load %arg2[%c0, %c0_0] : memref<16x32xf32, #tpu.memory_space<vmem>>, vector<16x32xf32>
    %c0_1 = arith.constant 0 : index
    %c0_2 = arith.constant 0 : index
    %1 = vector.load %arg1[%c0_1, %c0_2] : memref<16x1xf32, #tpu.memory_space<vmem>>, vector<16x1xf32>
    %c0_3 = arith.constant 0 : index
    %c0_4 = arith.constant 0 : index
    %c0_5 = arith.constant 0 : index
    %2 = vector.load %arg7[%c0_3, %c0_4, %c0_5] : memref<3x8x128xf32, #tpu.memory_space<vmem>>, vector<1x8x128xf32>
    %3 = vector.shape_cast %2 : vector<1x8x128xf32> to vector<8x128xf32>
    %4 = vector.extract_strided_slice %3 {offsets = [0, 0], sizes = [1, 32], strides = [1, 1]} : vector<8x128xf32> to vector<1x32xf32>
    %5 = vector.extract_strided_slice %3 {offsets = [1, 0], sizes = [1, 32], strides = [1, 1]} : vector<8x128xf32> to vector<1x32xf32>
    %6 = vector.extract_strided_slice %3 {offsets = [2, 0], sizes = [1, 96], strides = [1, 1]} : vector<8x128xf32> to vector<1x96xf32>
    %7 = vector.extract_strided_slice %3 {offsets = [3, 0], sizes = [1, 32], strides = [1, 1]} : vector<8x128xf32> to vector<1x32xf32>
    %8 = vector.extract_strided_slice %3 {offsets = [4, 0], sizes = [1, 32], strides = [1, 1]} : vector<8x128xf32> to vector<1x32xf32>
    %9 = vector.extract_strided_slice %3 {offsets = [5, 0], sizes = [1, 32], strides = [1, 1]} : vector<8x128xf32> to vector<1x32xf32>
    %10 = vector.extract_strided_slice %3 {offsets = [6, 0], sizes = [1, 64], strides = [1, 1]} : vector<8x128xf32> to vector<1x64xf32>
    %11 = vector.extract_strided_slice %3 {offsets = [7, 0], sizes = [1, 32], strides = [1, 1]} : vector<8x128xf32> to vector<1x32xf32>
    %cst = arith.constant dense<0.000000e+00> : vector<16xf32>
    %12 = vector.multi_reduction <add>, %0, %cst [1] : vector<16x32xf32> to vector<16xf32>
    %13 = vector.shape_cast %12 : vector<16xf32> to vector<16x1xf32>
    %cst_6 = arith.constant 3.200000e+01 : f32
    %14 = vector.broadcast %cst_6 : f32 to vector<16x1xf32>
    %15 = arith.divf %13, %14 : vector<16x1xf32>
    %16 = vector.broadcast %15 : vector<16x1xf32> to vector<16x32xf32>
    %17 = arith.subf %0, %16 : vector<16x32xf32>
    %18 = arith.mulf %17, %17 : vector<16x32xf32>
    %cst_7 = arith.constant dense<0.000000e+00> : vector<16xf32>
    %19 = vector.multi_reduction <add>, %18, %cst_7 [1] : vector<16x32xf32> to vector<16xf32>
    %20 = vector.shape_cast %19 : vector<16xf32> to vector<16x1xf32>
    %cst_8 = arith.constant 3.200000e+01 : f32
    %21 = vector.broadcast %cst_8 : f32 to vector<16x1xf32>
    %22 = arith.divf %20, %21 : vector<16x1xf32>
    %cst_9 = arith.constant 9.99999974E-6 : f32
    %23 = vector.broadcast %cst_9 : f32 to vector<16x1xf32>
    %24 = arith.addf %22, %23 : vector<16x1xf32>
    %25 = math.rsqrt %24 : vector<16x1xf32>
    %26 = vector.broadcast %25 : vector<16x1xf32> to vector<16x32xf32>
    %27 = arith.mulf %17, %26 : vector<16x32xf32>
    %28 = vector.broadcast %4 : vector<1x32xf32> to vector<16x32xf32>
    %29 = arith.mulf %27, %28 : vector<16x32xf32>
    %30 = vector.broadcast %5 : vector<1x32xf32> to vector<16x32xf32>
    %31 = arith.addf %29, %30 : vector<16x32xf32>
    %c0_10 = arith.constant 0 : index
    %c0_11 = arith.constant 0 : index
    %c0_12 = arith.constant 0 : index
    %32 = vector.load %arg3[%c0_10, %c0_11, %c0_12] : memref<2x32x96xf32, #tpu.memory_space<vmem>>, vector<1x32x96xf32>
    %33 = vector.shape_cast %32 : vector<1x32x96xf32> to vector<32x96xf32>
    %cst_13 = arith.constant dense<0.000000e+00> : vector<16x96xf32>
    %34 = tpu.matmul %31, %33, %cst_13 {dimension_numbers = #tpu.dot_dimension_numbers<[1], [0], [0], [1], [0, 0, 1, 1], [], []>} : vector<16x32xf32>, vector<32x96xf32>, vector<16x96xf32> -> vector<16x96xf32>
    %35 = vector.broadcast %6 : vector<1x96xf32> to vector<16x96xf32>
    %36 = arith.addf %34, %35 : vector<16x96xf32>
    %37 = vector.broadcast %1 : vector<16x1xf32> to vector<16x96xf32>
    %38 = arith.mulf %36, %37 : vector<16x96xf32>
    %39 = vector.extract_strided_slice %38 {offsets = [0, 0], sizes = [16, 16], strides = [1, 1]} : vector<16x96xf32> to vector<16x16xf32>
    %40 = vector.extract_strided_slice %38 {offsets = [0, 32], sizes = [16, 16], strides = [1, 1]} : vector<16x96xf32> to vector<16x16xf32>
    %41 = vector.extract_strided_slice %38 {offsets = [0, 64], sizes = [16, 16], strides = [1, 1]} : vector<16x96xf32> to vector<16x16xf32>
    %42 = arith.mulf %39, %39 : vector<16x16xf32>
    %cst_14 = arith.constant dense<0.000000e+00> : vector<16xf32>
    %43 = vector.multi_reduction <add>, %42, %cst_14 [1] : vector<16x16xf32> to vector<16xf32>
    %44 = vector.shape_cast %43 : vector<16xf32> to vector<16x1xf32>
    %cst_15 = arith.constant 1.000000e-24 : f32
    %45 = vector.broadcast %cst_15 : f32 to vector<16x1xf32>
    %46 = arith.addf %44, %45 : vector<16x1xf32>
    %47 = math.rsqrt %46 : vector<16x1xf32>
    %48 = vector.broadcast %47 : vector<16x1xf32> to vector<16x16xf32>
    %49 = arith.mulf %39, %48 : vector<16x16xf32>
    %50 = arith.mulf %40, %40 : vector<16x16xf32>
    %cst_16 = arith.constant dense<0.000000e+00> : vector<16xf32>
    %51 = vector.multi_reduction <add>, %50, %cst_16 [1] : vector<16x16xf32> to vector<16xf32>
    %52 = vector.shape_cast %51 : vector<16xf32> to vector<16x1xf32>
    %cst_17 = arith.constant 1.000000e-24 : f32
    %53 = vector.broadcast %cst_17 : f32 to vector<16x1xf32>
    %54 = arith.addf %52, %53 : vector<16x1xf32>
    %55 = math.rsqrt %54 : vector<16x1xf32>
    %56 = vector.broadcast %55 : vector<16x1xf32> to vector<16x16xf32>
    %57 = arith.mulf %40, %56 : vector<16x16xf32>
    %58 = vector.shape_cast %49 : vector<16x16xf32> to vector<2x8x16xf32>
    %59 = vector.shape_cast %57 : vector<16x16xf32> to vector<2x8x16xf32>
    %60 = vector.shape_cast %41 : vector<16x16xf32> to vector<2x8x16xf32>
    "tpu.trace_start"() <{level = 10 : i32, message = "bqd,bkd->bqk"}> : () -> ()
    %cst_18 = arith.constant dense<0.000000e+00> : vector<2x8x8xf32>
    %61 = tpu.matmul %58, %59, %cst_18 {dimension_numbers = #tpu.dot_dimension_numbers<[2], [2], [1], [1], [0, 0, 0, 1, 1, 1], [0], [0]>} : vector<2x8x16xf32>, vector<2x8x16xf32>, vector<2x8x8xf32> -> vector<2x8x8xf32>
    "tpu.trace_stop"() : () -> ()
    %cst_19 = arith.constant -1.000000e+00 : f32
    %62 = vector.broadcast %cst_19 : f32 to vector<2x8x8xf32>
    %63 = arith.maximumf %61, %62 : vector<2x8x8xf32>
    %cst_20 = arith.constant 1.000000e+00 : f32
    %64 = vector.broadcast %cst_20 : f32 to vector<2x8x8xf32>
    %65 = arith.minimumf %63, %64 : vector<2x8x8xf32>
    %66 = math.absf %65 : vector<2x8x8xf32>
    %67 = arith.mulf %65, %65 : vector<2x8x8xf32>
    %68 = arith.mulf %65, %67 : vector<2x8x8xf32>
    %cst_21 = arith.constant 4.216320e-02 : f32
    %69 = vector.broadcast %cst_21 : f32 to vector<2x8x8xf32>
    %70 = arith.mulf %69, %67 : vector<2x8x8xf32>
    %cst_22 = arith.constant 0.024181312 : f32
    %71 = vector.broadcast %cst_22 : f32 to vector<2x8x8xf32>
    %72 = arith.addf %70, %71 : vector<2x8x8xf32>
    %73 = arith.mulf %72, %67 : vector<2x8x8xf32>
    %cst_23 = arith.constant 0.0454700254 : f32
    %74 = vector.broadcast %cst_23 : f32 to vector<2x8x8xf32>
    %75 = arith.addf %73, %74 : vector<2x8x8xf32>
    %76 = arith.mulf %75, %67 : vector<2x8x8xf32>
    %cst_24 = arith.constant 0.0749530047 : f32
    %77 = vector.broadcast %cst_24 : f32 to vector<2x8x8xf32>
    %78 = arith.addf %76, %77 : vector<2x8x8xf32>
    %79 = arith.mulf %78, %67 : vector<2x8x8xf32>
    %cst_25 = arith.constant 0.166667521 : f32
    %80 = vector.broadcast %cst_25 : f32 to vector<2x8x8xf32>
    %81 = arith.addf %79, %80 : vector<2x8x8xf32>
    %82 = arith.mulf %68, %81 : vector<2x8x8xf32>
    %83 = arith.addf %65, %82 : vector<2x8x8xf32>
    %cst_26 = arith.constant 1.57079637 : f32
    %84 = vector.broadcast %cst_26 : f32 to vector<2x8x8xf32>
    %85 = arith.subf %84, %83 : vector<2x8x8xf32>
    %cst_27 = arith.constant 1.000000e+00 : f32
    %86 = vector.broadcast %cst_27 : f32 to vector<2x8x8xf32>
    %87 = arith.subf %86, %66 : vector<2x8x8xf32>
    %cst_28 = arith.constant 5.000000e-01 : f32
    %88 = vector.broadcast %cst_28 : f32 to vector<2x8x8xf32>
    %89 = arith.mulf %88, %87 : vector<2x8x8xf32>
    %90 = math.sqrt %89 : vector<2x8x8xf32>
    %91 = arith.mulf %90, %89 : vector<2x8x8xf32>
    %cst_29 = arith.constant 4.216320e-02 : f32
    %92 = vector.broadcast %cst_29 : f32 to vector<2x8x8xf32>
    %93 = arith.mulf %92, %89 : vector<2x8x8xf32>
    %cst_30 = arith.constant 0.024181312 : f32
    %94 = vector.broadcast %cst_30 : f32 to vector<2x8x8xf32>
    %95 = arith.addf %93, %94 : vector<2x8x8xf32>
    %96 = arith.mulf %95, %89 : vector<2x8x8xf32>
    %cst_31 = arith.constant 0.0454700254 : f32
    %97 = vector.broadcast %cst_31 : f32 to vector<2x8x8xf32>
    %98 = arith.addf %96, %97 : vector<2x8x8xf32>
    %99 = arith.mulf %98, %89 : vector<2x8x8xf32>
    %cst_32 = arith.constant 0.0749530047 : f32
    %100 = vector.broadcast %cst_32 : f32 to vector<2x8x8xf32>
    %101 = arith.addf %99, %100 : vector<2x8x8xf32>
    %102 = arith.mulf %101, %89 : vector<2x8x8xf32>
    %cst_33 = arith.constant 0.166667521 : f32
    %103 = vector.broadcast %cst_33 : f32 to vector<2x8x8xf32>
    %104 = arith.addf %102, %103 : vector<2x8x8xf32>
    %105 = arith.mulf %91, %104 : vector<2x8x8xf32>
    %106 = arith.addf %90, %105 : vector<2x8x8xf32>
    %cst_34 = arith.constant 2.000000e+00 : f32
    %107 = vector.broadcast %cst_34 : f32 to vector<2x8x8xf32>
    %108 = arith.mulf %107, %106 : vector<2x8x8xf32>
    %cst_35 = arith.constant 0.000000e+00 : f32
    %109 = vector.broadcast %cst_35 : f32 to vector<2x8x8xf32>
    %110 = arith.cmpf oge, %65, %109 : vector<2x8x8xf32>
    %cst_36 = arith.constant 3.14159274 : f32
    %111 = vector.broadcast %cst_36 : f32 to vector<2x8x8xf32>
    %112 = arith.subf %111, %108 : vector<2x8x8xf32>
    %113 = arith.select %110, %108, %112 : vector<2x8x8xi1>, vector<2x8x8xf32>
    %cst_37 = arith.constant 5.000000e-01 : f32
    %114 = vector.broadcast %cst_37 : f32 to vector<2x8x8xf32>
    %115 = arith.cmpf ole, %66, %114 : vector<2x8x8xf32>
    %116 = arith.select %115, %85, %113 : vector<2x8x8xi1>, vector<2x8x8xf32>
    %cst_38 = arith.constant 0.318309873 : f32
    %117 = vector.broadcast %cst_38 : f32 to vector<2x8x8xf32>
    %118 = arith.mulf %116, %117 : vector<2x8x8xf32>
    %cst_39 = arith.constant 1.000000e+00 : f32
    %119 = vector.broadcast %cst_39 : f32 to vector<2x8x8xf32>
    %120 = arith.subf %119, %118 : vector<2x8x8xf32>
    %121 = arith.mulf %120, %120 : vector<2x8x8xf32>
    %122 = arith.mulf %121, %121 : vector<2x8x8xf32>
    %123 = arith.mulf %122, %122 : vector<2x8x8xf32>
    "tpu.trace_start"() <{level = 10 : i32, message = "bqk,bkd->bqd"}> : () -> ()
    %cst_40 = arith.constant dense<0.000000e+00> : vector<2x8x16xf32>
    %124 = tpu.matmul %123, %60, %cst_40 {dimension_numbers = #tpu.dot_dimension_numbers<[2], [1], [1], [2], [0, 0, 0, 1, 1, 2], [0], [0]>} : vector<2x8x8xf32>, vector<2x8x16xf32>, vector<2x8x16xf32> -> vector<2x8x16xf32>
    "tpu.trace_stop"() : () -> ()
    %125 = vector.shape_cast %124 : vector<2x8x16xf32> to vector<16x16xf32>
    %126 = vector.extract_strided_slice %38 {offsets = [0, 16], sizes = [16, 16], strides = [1, 1]} : vector<16x96xf32> to vector<16x16xf32>
    %127 = vector.extract_strided_slice %38 {offsets = [0, 48], sizes = [16, 16], strides = [1, 1]} : vector<16x96xf32> to vector<16x16xf32>
    %128 = vector.extract_strided_slice %38 {offsets = [0, 80], sizes = [16, 16], strides = [1, 1]} : vector<16x96xf32> to vector<16x16xf32>
    %129 = arith.mulf %126, %126 : vector<16x16xf32>
    %cst_41 = arith.constant dense<0.000000e+00> : vector<16xf32>
    %130 = vector.multi_reduction <add>, %129, %cst_41 [1] : vector<16x16xf32> to vector<16xf32>
    %131 = vector.shape_cast %130 : vector<16xf32> to vector<16x1xf32>
    %cst_42 = arith.constant 1.000000e-24 : f32
    %132 = vector.broadcast %cst_42 : f32 to vector<16x1xf32>
    %133 = arith.addf %131, %132 : vector<16x1xf32>
    %134 = math.rsqrt %133 : vector<16x1xf32>
    %135 = vector.broadcast %134 : vector<16x1xf32> to vector<16x16xf32>
    %136 = arith.mulf %126, %135 : vector<16x16xf32>
    %137 = arith.mulf %127, %127 : vector<16x16xf32>
    %cst_43 = arith.constant dense<0.000000e+00> : vector<16xf32>
    %138 = vector.multi_reduction <add>, %137, %cst_43 [1] : vector<16x16xf32> to vector<16xf32>
    %139 = vector.shape_cast %138 : vector<16xf32> to vector<16x1xf32>
    %cst_44 = arith.constant 1.000000e-24 : f32
    %140 = vector.broadcast %cst_44 : f32 to vector<16x1xf32>
    %141 = arith.addf %139, %140 : vector<16x1xf32>
    %142 = math.rsqrt %141 : vector<16x1xf32>
    %143 = vector.broadcast %142 : vector<16x1xf32> to vector<16x16xf32>
    %144 = arith.mulf %127, %143 : vector<16x16xf32>
    %145 = vector.shape_cast %136 : vector<16x16xf32> to vector<2x8x16xf32>
    %146 = vector.shape_cast %144 : vector<16x16xf32> to vector<2x8x16xf32>
    %147 = vector.shape_cast %128 : vector<16x16xf32> to vector<2x8x16xf32>
    "tpu.trace_start"() <{level = 10 : i32, message = "bqd,bkd->bqk"}> : () -> ()
    %cst_45 = arith.constant dense<0.000000e+00> : vector<2x8x8xf32>
    %148 = tpu.matmul %145, %146, %cst_45 {dimension_numbers = #tpu.dot_dimension_numbers<[2], [2], [1], [1], [0, 0, 0, 1, 1, 1], [0], [0]>} : vector<2x8x16xf32>, vector<2x8x16xf32>, vector<2x8x8xf32> -> vector<2x8x8xf32>
    "tpu.trace_stop"() : () -> ()
    %cst_46 = arith.constant -1.000000e+00 : f32
    %149 = vector.broadcast %cst_46 : f32 to vector<2x8x8xf32>
    %150 = arith.maximumf %148, %149 : vector<2x8x8xf32>
    %cst_47 = arith.constant 1.000000e+00 : f32
    %151 = vector.broadcast %cst_47 : f32 to vector<2x8x8xf32>
    %152 = arith.minimumf %150, %151 : vector<2x8x8xf32>
    %153 = math.absf %152 : vector<2x8x8xf32>
    %154 = arith.mulf %152, %152 : vector<2x8x8xf32>
    %155 = arith.mulf %152, %154 : vector<2x8x8xf32>
    %cst_48 = arith.constant 4.216320e-02 : f32
    %156 = vector.broadcast %cst_48 : f32 to vector<2x8x8xf32>
    %157 = arith.mulf %156, %154 : vector<2x8x8xf32>
    %cst_49 = arith.constant 0.024181312 : f32
    %158 = vector.broadcast %cst_49 : f32 to vector<2x8x8xf32>
    %159 = arith.addf %157, %158 : vector<2x8x8xf32>
    %160 = arith.mulf %159, %154 : vector<2x8x8xf32>
    %cst_50 = arith.constant 0.0454700254 : f32
    %161 = vector.broadcast %cst_50 : f32 to vector<2x8x8xf32>
    %162 = arith.addf %160, %161 : vector<2x8x8xf32>
    %163 = arith.mulf %162, %154 : vector<2x8x8xf32>
    %cst_51 = arith.constant 0.0749530047 : f32
    %164 = vector.broadcast %cst_51 : f32 to vector<2x8x8xf32>
    %165 = arith.addf %163, %164 : vector<2x8x8xf32>
    %166 = arith.mulf %165, %154 : vector<2x8x8xf32>
    %cst_52 = arith.constant 0.166667521 : f32
    %167 = vector.broadcast %cst_52 : f32 to vector<2x8x8xf32>
    %168 = arith.addf %166, %167 : vector<2x8x8xf32>
    %169 = arith.mulf %155, %168 : vector<2x8x8xf32>
    %170 = arith.addf %152, %169 : vector<2x8x8xf32>
    %cst_53 = arith.constant 1.57079637 : f32
    %171 = vector.broadcast %cst_53 : f32 to vector<2x8x8xf32>
    %172 = arith.subf %171, %170 : vector<2x8x8xf32>
    %cst_54 = arith.constant 1.000000e+00 : f32
    %173 = vector.broadcast %cst_54 : f32 to vector<2x8x8xf32>
    %174 = arith.subf %173, %153 : vector<2x8x8xf32>
    %cst_55 = arith.constant 5.000000e-01 : f32
    %175 = vector.broadcast %cst_55 : f32 to vector<2x8x8xf32>
    %176 = arith.mulf %175, %174 : vector<2x8x8xf32>
    %177 = math.sqrt %176 : vector<2x8x8xf32>
    %178 = arith.mulf %177, %176 : vector<2x8x8xf32>
    %cst_56 = arith.constant 4.216320e-02 : f32
    %179 = vector.broadcast %cst_56 : f32 to vector<2x8x8xf32>
    %180 = arith.mulf %179, %176 : vector<2x8x8xf32>
    %cst_57 = arith.constant 0.024181312 : f32
    %181 = vector.broadcast %cst_57 : f32 to vector<2x8x8xf32>
    %182 = arith.addf %180, %181 : vector<2x8x8xf32>
    %183 = arith.mulf %182, %176 : vector<2x8x8xf32>
    %cst_58 = arith.constant 0.0454700254 : f32
    %184 = vector.broadcast %cst_58 : f32 to vector<2x8x8xf32>
    %185 = arith.addf %183, %184 : vector<2x8x8xf32>
    %186 = arith.mulf %185, %176 : vector<2x8x8xf32>
    %cst_59 = arith.constant 0.0749530047 : f32
    %187 = vector.broadcast %cst_59 : f32 to vector<2x8x8xf32>
    %188 = arith.addf %186, %187 : vector<2x8x8xf32>
    %189 = arith.mulf %188, %176 : vector<2x8x8xf32>
    %cst_60 = arith.constant 0.166667521 : f32
    %190 = vector.broadcast %cst_60 : f32 to vector<2x8x8xf32>
    %191 = arith.addf %189, %190 : vector<2x8x8xf32>
    %192 = arith.mulf %178, %191 : vector<2x8x8xf32>
    %193 = arith.addf %177, %192 : vector<2x8x8xf32>
    %cst_61 = arith.constant 2.000000e+00 : f32
    %194 = vector.broadcast %cst_61 : f32 to vector<2x8x8xf32>
    %195 = arith.mulf %194, %193 : vector<2x8x8xf32>
    %cst_62 = arith.constant 0.000000e+00 : f32
    %196 = vector.broadcast %cst_62 : f32 to vector<2x8x8xf32>
    %197 = arith.cmpf oge, %152, %196 : vector<2x8x8xf32>
    %cst_63 = arith.constant 3.14159274 : f32
    %198 = vector.broadcast %cst_63 : f32 to vector<2x8x8xf32>
    %199 = arith.subf %198, %195 : vector<2x8x8xf32>
    %200 = arith.select %197, %195, %199 : vector<2x8x8xi1>, vector<2x8x8xf32>
    %cst_64 = arith.constant 5.000000e-01 : f32
    %201 = vector.broadcast %cst_64 : f32 to vector<2x8x8xf32>
    %202 = arith.cmpf ole, %153, %201 : vector<2x8x8xf32>
    %203 = arith.select %202, %172, %200 : vector<2x8x8xi1>, vector<2x8x8xf32>
    %cst_65 = arith.constant 0.318309873 : f32
    %204 = vector.broadcast %cst_65 : f32 to vector<2x8x8xf32>
    %205 = arith.mulf %203, %204 : vector<2x8x8xf32>
    %cst_66 = arith.constant 1.000000e+00 : f32
    %206 = vector.broadcast %cst_66 : f32 to vector<2x8x8xf32>
    %207 = arith.subf %206, %205 : vector<2x8x8xf32>
    %208 = arith.mulf %207, %207 : vector<2x8x8xf32>
    %209 = arith.mulf %208, %208 : vector<2x8x8xf32>
    %210 = arith.mulf %209, %209 : vector<2x8x8xf32>
    "tpu.trace_start"() <{level = 10 : i32, message = "bqk,bkd->bqd"}> : () -> ()
    %cst_67 = arith.constant dense<0.000000e+00> : vector<2x8x16xf32>
    %211 = tpu.matmul %210, %147, %cst_67 {dimension_numbers = #tpu.dot_dimension_numbers<[2], [1], [1], [2], [0, 0, 0, 1, 1, 2], [0], [0]>} : vector<2x8x8xf32>, vector<2x8x16xf32>, vector<2x8x16xf32> -> vector<2x8x16xf32>
    "tpu.trace_stop"() : () -> ()
    %212 = vector.shape_cast %211 : vector<2x8x16xf32> to vector<16x16xf32>
    %213 = tpu.concatenate %125, %212 in 1 : vector<16x16xf32>, vector<16x16xf32> -> vector<16x32xf32>
    %c0_68 = arith.constant 0 : index
    %c0_69 = arith.constant 0 : index
    %c0_70 = arith.constant 0 : index
    %214 = vector.load %arg4[%c0_68, %c0_69, %c0_70] : memref<2x32x32xf32, #tpu.memory_space<vmem>>, vector<1x32x32xf32>
    %215 = vector.shape_cast %214 : vector<1x32x32xf32> to vector<32x32xf32>
    %cst_71 = arith.constant dense<0.000000e+00> : vector<16x32xf32>
    %216 = tpu.matmul %213, %215, %cst_71 {dimension_numbers = #tpu.dot_dimension_numbers<[1], [0], [0], [1], [0, 0, 1, 1], [], []>} : vector<16x32xf32>, vector<32x32xf32>, vector<16x32xf32> -> vector<16x32xf32>
    %217 = vector.broadcast %7 : vector<1x32xf32> to vector<16x32xf32>
    %218 = arith.addf %216, %217 : vector<16x32xf32>
    %219 = arith.addf %218, %0 : vector<16x32xf32>
    %cst_72 = arith.constant dense<0.000000e+00> : vector<16xf32>
    %220 = vector.multi_reduction <add>, %219, %cst_72 [1] : vector<16x32xf32> to vector<16xf32>
    %221 = vector.shape_cast %220 : vector<16xf32> to vector<16x1xf32>
    %cst_73 = arith.constant 3.200000e+01 : f32
    %222 = vector.broadcast %cst_73 : f32 to vector<16x1xf32>
    %223 = arith.divf %221, %222 : vector<16x1xf32>
    %224 = vector.broadcast %223 : vector<16x1xf32> to vector<16x32xf32>
    %225 = arith.subf %219, %224 : vector<16x32xf32>
    %226 = arith.mulf %225, %225 : vector<16x32xf32>
    %cst_74 = arith.constant dense<0.000000e+00> : vector<16xf32>
    %227 = vector.multi_reduction <add>, %226, %cst_74 [1] : vector<16x32xf32> to vector<16xf32>
    %228 = vector.shape_cast %227 : vector<16xf32> to vector<16x1xf32>
    %cst_75 = arith.constant 3.200000e+01 : f32
    %229 = vector.broadcast %cst_75 : f32 to vector<16x1xf32>
    %230 = arith.divf %228, %229 : vector<16x1xf32>
    %cst_76 = arith.constant 9.99999974E-6 : f32
    %231 = vector.broadcast %cst_76 : f32 to vector<16x1xf32>
    %232 = arith.addf %230, %231 : vector<16x1xf32>
    %233 = math.rsqrt %232 : vector<16x1xf32>
    %234 = vector.broadcast %233 : vector<16x1xf32> to vector<16x32xf32>
    %235 = arith.mulf %225, %234 : vector<16x32xf32>
    %236 = vector.broadcast %8 : vector<1x32xf32> to vector<16x32xf32>
    %237 = arith.mulf %235, %236 : vector<16x32xf32>
    %238 = vector.broadcast %9 : vector<1x32xf32> to vector<16x32xf32>
    %239 = arith.addf %237, %238 : vector<16x32xf32>
    %c0_77 = arith.constant 0 : index
    %c0_78 = arith.constant 0 : index
    %c0_79 = arith.constant 0 : index
    %240 = vector.load %arg5[%c0_77, %c0_78, %c0_79] : memref<2x32x64xf32, #tpu.memory_space<vmem>>, vector<1x32x64xf32>
    %241 = vector.shape_cast %240 : vector<1x32x64xf32> to vector<32x64xf32>
    %cst_80 = arith.constant dense<0.000000e+00> : vector<16x64xf32>
    %242 = tpu.matmul %239, %241, %cst_80 {dimension_numbers = #tpu.dot_dimension_numbers<[1], [0], [0], [1], [0, 0, 1, 1], [], []>} : vector<16x32xf32>, vector<32x64xf32>, vector<16x64xf32> -> vector<16x64xf32>
    %243 = vector.broadcast %10 : vector<1x64xf32> to vector<16x64xf32>
    %244 = arith.addf %242, %243 : vector<16x64xf32>
    %cst_81 = arith.constant 5.000000e-01 : f32
    %245 = vector.broadcast %cst_81 : f32 to vector<16x64xf32>
    %246 = arith.mulf %245, %244 : vector<16x64xf32>
    %cst_82 = arith.constant 0.707106769 : f32
    %247 = vector.broadcast %cst_82 : f32 to vector<16x64xf32>
    %248 = arith.mulf %244, %247 : vector<16x64xf32>
    %249 = math.absf %248 : vector<16x64xf32>
    %cst_83 = arith.constant 0.327591091 : f32
    %250 = vector.broadcast %cst_83 : f32 to vector<16x64xf32>
    %251 = arith.mulf %250, %249 : vector<16x64xf32>
    %cst_84 = arith.constant 1.000000e+00 : f32
    %252 = vector.broadcast %cst_84 : f32 to vector<16x64xf32>
    %253 = arith.addf %252, %251 : vector<16x64xf32>
    %cst_85 = arith.constant 1.000000e+00 : f32
    %254 = vector.broadcast %cst_85 : f32 to vector<16x64xf32>
    %255 = arith.divf %254, %253 : vector<16x64xf32>
    %cst_86 = arith.constant 1.06140542 : f32
    %256 = vector.broadcast %cst_86 : f32 to vector<16x64xf32>
    %257 = arith.mulf %256, %255 : vector<16x64xf32>
    %cst_87 = arith.constant -1.45315206 : f32
    %258 = vector.broadcast %cst_87 : f32 to vector<16x64xf32>
    %259 = arith.addf %257, %258 : vector<16x64xf32>
    %260 = arith.mulf %259, %255 : vector<16x64xf32>
    %cst_88 = arith.constant 1.42141378 : f32
    %261 = vector.broadcast %cst_88 : f32 to vector<16x64xf32>
    %262 = arith.addf %260, %261 : vector<16x64xf32>
    %263 = arith.mulf %262, %255 : vector<16x64xf32>
    %cst_89 = arith.constant -0.284496725 : f32
    %264 = vector.broadcast %cst_89 : f32 to vector<16x64xf32>
    %265 = arith.addf %263, %264 : vector<16x64xf32>
    %266 = arith.mulf %265, %255 : vector<16x64xf32>
    %cst_90 = arith.constant 0.254829586 : f32
    %267 = vector.broadcast %cst_90 : f32 to vector<16x64xf32>
    %268 = arith.addf %266, %267 : vector<16x64xf32>
    %269 = arith.mulf %268, %255 : vector<16x64xf32>
    %cst_91 = arith.constant 0.000000e+00 : f32
    %270 = vector.broadcast %cst_91 : f32 to vector<16x64xf32>
    %271 = arith.subf %270, %249 : vector<16x64xf32>
    %272 = arith.mulf %271, %249 : vector<16x64xf32>
    %273 = math.exp %272 : vector<16x64xf32>
    %274 = arith.mulf %269, %273 : vector<16x64xf32>
    %cst_92 = arith.constant 1.000000e+00 : f32
    %275 = vector.broadcast %cst_92 : f32 to vector<16x64xf32>
    %276 = arith.subf %275, %274 : vector<16x64xf32>
    %cst_93 = arith.constant 0.000000e+00 : f32
    %277 = vector.broadcast %cst_93 : f32 to vector<16x64xf32>
    %278 = arith.cmpf oge, %248, %277 : vector<16x64xf32>
    %cst_94 = arith.constant 0.000000e+00 : f32
    %279 = vector.broadcast %cst_94 : f32 to vector<16x64xf32>
    %280 = arith.subf %279, %276 : vector<16x64xf32>
    %281 = arith.select %278, %276, %280 : vector<16x64xi1>, vector<16x64xf32>
    %cst_95 = arith.constant 1.000000e+00 : f32
    %282 = vector.broadcast %cst_95 : f32 to vector<16x64xf32>
    %283 = arith.addf %282, %281 : vector<16x64xf32>
    %284 = arith.mulf %246, %283 : vector<16x64xf32>
    %c0_96 = arith.constant 0 : index
    %c0_97 = arith.constant 0 : index
    %c0_98 = arith.constant 0 : index
    %285 = vector.load %arg6[%c0_96, %c0_97, %c0_98] : memref<2x64x32xf32, #tpu.memory_space<vmem>>, vector<1x64x32xf32>
    %286 = vector.shape_cast %285 : vector<1x64x32xf32> to vector<64x32xf32>
    %cst_99 = arith.constant dense<0.000000e+00> : vector<16x32xf32>
    %287 = tpu.matmul %284, %286, %cst_99 {dimension_numbers = #tpu.dot_dimension_numbers<[1], [0], [0], [1], [0, 0, 1, 1], [], []>} : vector<16x64xf32>, vector<64x32xf32>, vector<16x32xf32> -> vector<16x32xf32>
    %288 = vector.broadcast %11 : vector<1x32xf32> to vector<16x32xf32>
    %289 = arith.addf %287, %288 : vector<16x32xf32>
    %290 = arith.addf %289, %219 : vector<16x32xf32>
    %c1 = arith.constant 1 : index
    %c0_100 = arith.constant 0 : index
    %c0_101 = arith.constant 0 : index
    %291 = vector.load %arg7[%c1, %c0_100, %c0_101] : memref<3x8x128xf32, #tpu.memory_space<vmem>>, vector<1x8x128xf32>
    %292 = vector.shape_cast %291 : vector<1x8x128xf32> to vector<8x128xf32>
    %293 = vector.extract_strided_slice %292 {offsets = [0, 0], sizes = [1, 32], strides = [1, 1]} : vector<8x128xf32> to vector<1x32xf32>
    %294 = vector.extract_strided_slice %292 {offsets = [1, 0], sizes = [1, 32], strides = [1, 1]} : vector<8x128xf32> to vector<1x32xf32>
    %295 = vector.extract_strided_slice %292 {offsets = [2, 0], sizes = [1, 96], strides = [1, 1]} : vector<8x128xf32> to vector<1x96xf32>
    %296 = vector.extract_strided_slice %292 {offsets = [3, 0], sizes = [1, 32], strides = [1, 1]} : vector<8x128xf32> to vector<1x32xf32>
    %297 = vector.extract_strided_slice %292 {offsets = [4, 0], sizes = [1, 32], strides = [1, 1]} : vector<8x128xf32> to vector<1x32xf32>
    %298 = vector.extract_strided_slice %292 {offsets = [5, 0], sizes = [1, 32], strides = [1, 1]} : vector<8x128xf32> to vector<1x32xf32>
    %299 = vector.extract_strided_slice %292 {offsets = [6, 0], sizes = [1, 64], strides = [1, 1]} : vector<8x128xf32> to vector<1x64xf32>
    %300 = vector.extract_strided_slice %292 {offsets = [7, 0], sizes = [1, 32], strides = [1, 1]} : vector<8x128xf32> to vector<1x32xf32>
    %cst_102 = arith.constant dense<0.000000e+00> : vector<16xf32>
    %301 = vector.multi_reduction <add>, %290, %cst_102 [1] : vector<16x32xf32> to vector<16xf32>
    %302 = vector.shape_cast %301 : vector<16xf32> to vector<16x1xf32>
    %cst_103 = arith.constant 3.200000e+01 : f32
    %303 = vector.broadcast %cst_103 : f32 to vector<16x1xf32>
    %304 = arith.divf %302, %303 : vector<16x1xf32>
    %305 = vector.broadcast %304 : vector<16x1xf32> to vector<16x32xf32>
    %306 = arith.subf %290, %305 : vector<16x32xf32>
    %307 = arith.mulf %306, %306 : vector<16x32xf32>
    %cst_104 = arith.constant dense<0.000000e+00> : vector<16xf32>
    %308 = vector.multi_reduction <add>, %307, %cst_104 [1] : vector<16x32xf32> to vector<16xf32>
    %309 = vector.shape_cast %308 : vector<16xf32> to vector<16x1xf32>
    %cst_105 = arith.constant 3.200000e+01 : f32
    %310 = vector.broadcast %cst_105 : f32 to vector<16x1xf32>
    %311 = arith.divf %309, %310 : vector<16x1xf32>
    %cst_106 = arith.constant 9.99999974E-6 : f32
    %312 = vector.broadcast %cst_106 : f32 to vector<16x1xf32>
    %313 = arith.addf %311, %312 : vector<16x1xf32>
    %314 = math.rsqrt %313 : vector<16x1xf32>
    %315 = vector.broadcast %314 : vector<16x1xf32> to vector<16x32xf32>
    %316 = arith.mulf %306, %315 : vector<16x32xf32>
    %317 = vector.broadcast %293 : vector<1x32xf32> to vector<16x32xf32>
    %318 = arith.mulf %316, %317 : vector<16x32xf32>
    %319 = vector.broadcast %294 : vector<1x32xf32> to vector<16x32xf32>
    %320 = arith.addf %318, %319 : vector<16x32xf32>
    %c1_107 = arith.constant 1 : index
    %c0_108 = arith.constant 0 : index
    %c0_109 = arith.constant 0 : index
    %321 = vector.load %arg3[%c1_107, %c0_108, %c0_109] : memref<2x32x96xf32, #tpu.memory_space<vmem>>, vector<1x32x96xf32>
    %322 = vector.shape_cast %321 : vector<1x32x96xf32> to vector<32x96xf32>
    %cst_110 = arith.constant dense<0.000000e+00> : vector<16x96xf32>
    %323 = tpu.matmul %320, %322, %cst_110 {dimension_numbers = #tpu.dot_dimension_numbers<[1], [0], [0], [1], [0, 0, 1, 1], [], []>} : vector<16x32xf32>, vector<32x96xf32>, vector<16x96xf32> -> vector<16x96xf32>
    %324 = vector.broadcast %295 : vector<1x96xf32> to vector<16x96xf32>
    %325 = arith.addf %323, %324 : vector<16x96xf32>
    %326 = vector.broadcast %1 : vector<16x1xf32> to vector<16x96xf32>
    %327 = arith.mulf %325, %326 : vector<16x96xf32>
    %328 = vector.extract_strided_slice %327 {offsets = [0, 0], sizes = [16, 16], strides = [1, 1]} : vector<16x96xf32> to vector<16x16xf32>
    %329 = vector.extract_strided_slice %327 {offsets = [0, 32], sizes = [16, 16], strides = [1, 1]} : vector<16x96xf32> to vector<16x16xf32>
    %330 = vector.extract_strided_slice %327 {offsets = [0, 64], sizes = [16, 16], strides = [1, 1]} : vector<16x96xf32> to vector<16x16xf32>
    %331 = arith.mulf %328, %328 : vector<16x16xf32>
    %cst_111 = arith.constant dense<0.000000e+00> : vector<16xf32>
    %332 = vector.multi_reduction <add>, %331, %cst_111 [1] : vector<16x16xf32> to vector<16xf32>
    %333 = vector.shape_cast %332 : vector<16xf32> to vector<16x1xf32>
    %cst_112 = arith.constant 1.000000e-24 : f32
    %334 = vector.broadcast %cst_112 : f32 to vector<16x1xf32>
    %335 = arith.addf %333, %334 : vector<16x1xf32>
    %336 = math.rsqrt %335 : vector<16x1xf32>
    %337 = vector.broadcast %336 : vector<16x1xf32> to vector<16x16xf32>
    %338 = arith.mulf %328, %337 : vector<16x16xf32>
    %339 = arith.mulf %329, %329 : vector<16x16xf32>
    %cst_113 = arith.constant dense<0.000000e+00> : vector<16xf32>
    %340 = vector.multi_reduction <add>, %339, %cst_113 [1] : vector<16x16xf32> to vector<16xf32>
    %341 = vector.shape_cast %340 : vector<16xf32> to vector<16x1xf32>
    %cst_114 = arith.constant 1.000000e-24 : f32
    %342 = vector.broadcast %cst_114 : f32 to vector<16x1xf32>
    %343 = arith.addf %341, %342 : vector<16x1xf32>
    %344 = math.rsqrt %343 : vector<16x1xf32>
    %345 = vector.broadcast %344 : vector<16x1xf32> to vector<16x16xf32>
    %346 = arith.mulf %329, %345 : vector<16x16xf32>
    %347 = vector.shape_cast %338 : vector<16x16xf32> to vector<2x8x16xf32>
    %348 = vector.shape_cast %346 : vector<16x16xf32> to vector<2x8x16xf32>
    %349 = vector.shape_cast %330 : vector<16x16xf32> to vector<2x8x16xf32>
    "tpu.trace_start"() <{level = 10 : i32, message = "bqd,bkd->bqk"}> : () -> ()
    %cst_115 = arith.constant dense<0.000000e+00> : vector<2x8x8xf32>
    %350 = tpu.matmul %347, %348, %cst_115 {dimension_numbers = #tpu.dot_dimension_numbers<[2], [2], [1], [1], [0, 0, 0, 1, 1, 1], [0], [0]>} : vector<2x8x16xf32>, vector<2x8x16xf32>, vector<2x8x8xf32> -> vector<2x8x8xf32>
    "tpu.trace_stop"() : () -> ()
    %cst_116 = arith.constant -1.000000e+00 : f32
    %351 = vector.broadcast %cst_116 : f32 to vector<2x8x8xf32>
    %352 = arith.maximumf %350, %351 : vector<2x8x8xf32>
    %cst_117 = arith.constant 1.000000e+00 : f32
    %353 = vector.broadcast %cst_117 : f32 to vector<2x8x8xf32>
    %354 = arith.minimumf %352, %353 : vector<2x8x8xf32>
    %355 = math.absf %354 : vector<2x8x8xf32>
    %356 = arith.mulf %354, %354 : vector<2x8x8xf32>
    %357 = arith.mulf %354, %356 : vector<2x8x8xf32>
    %cst_118 = arith.constant 4.216320e-02 : f32
    %358 = vector.broadcast %cst_118 : f32 to vector<2x8x8xf32>
    %359 = arith.mulf %358, %356 : vector<2x8x8xf32>
    %cst_119 = arith.constant 0.024181312 : f32
    %360 = vector.broadcast %cst_119 : f32 to vector<2x8x8xf32>
    %361 = arith.addf %359, %360 : vector<2x8x8xf32>
    %362 = arith.mulf %361, %356 : vector<2x8x8xf32>
    %cst_120 = arith.constant 0.0454700254 : f32
    %363 = vector.broadcast %cst_120 : f32 to vector<2x8x8xf32>
    %364 = arith.addf %362, %363 : vector<2x8x8xf32>
    %365 = arith.mulf %364, %356 : vector<2x8x8xf32>
    %cst_121 = arith.constant 0.0749530047 : f32
    %366 = vector.broadcast %cst_121 : f32 to vector<2x8x8xf32>
    %367 = arith.addf %365, %366 : vector<2x8x8xf32>
    %368 = arith.mulf %367, %356 : vector<2x8x8xf32>
    %cst_122 = arith.constant 0.166667521 : f32
    %369 = vector.broadcast %cst_122 : f32 to vector<2x8x8xf32>
    %370 = arith.addf %368, %369 : vector<2x8x8xf32>
    %371 = arith.mulf %357, %370 : vector<2x8x8xf32>
    %372 = arith.addf %354, %371 : vector<2x8x8xf32>
    %cst_123 = arith.constant 1.57079637 : f32
    %373 = vector.broadcast %cst_123 : f32 to vector<2x8x8xf32>
    %374 = arith.subf %373, %372 : vector<2x8x8xf32>
    %cst_124 = arith.constant 1.000000e+00 : f32
    %375 = vector.broadcast %cst_124 : f32 to vector<2x8x8xf32>
    %376 = arith.subf %375, %355 : vector<2x8x8xf32>
    %cst_125 = arith.constant 5.000000e-01 : f32
    %377 = vector.broadcast %cst_125 : f32 to vector<2x8x8xf32>
    %378 = arith.mulf %377, %376 : vector<2x8x8xf32>
    %379 = math.sqrt %378 : vector<2x8x8xf32>
    %380 = arith.mulf %379, %378 : vector<2x8x8xf32>
    %cst_126 = arith.constant 4.216320e-02 : f32
    %381 = vector.broadcast %cst_126 : f32 to vector<2x8x8xf32>
    %382 = arith.mulf %381, %378 : vector<2x8x8xf32>
    %cst_127 = arith.constant 0.024181312 : f32
    %383 = vector.broadcast %cst_127 : f32 to vector<2x8x8xf32>
    %384 = arith.addf %382, %383 : vector<2x8x8xf32>
    %385 = arith.mulf %384, %378 : vector<2x8x8xf32>
    %cst_128 = arith.constant 0.0454700254 : f32
    %386 = vector.broadcast %cst_128 : f32 to vector<2x8x8xf32>
    %387 = arith.addf %385, %386 : vector<2x8x8xf32>
    %388 = arith.mulf %387, %378 : vector<2x8x8xf32>
    %cst_129 = arith.constant 0.0749530047 : f32
    %389 = vector.broadcast %cst_129 : f32 to vector<2x8x8xf32>
    %390 = arith.addf %388, %389 : vector<2x8x8xf32>
    %391 = arith.mulf %390, %378 : vector<2x8x8xf32>
    %cst_130 = arith.constant 0.166667521 : f32
    %392 = vector.broadcast %cst_130 : f32 to vector<2x8x8xf32>
    %393 = arith.addf %391, %392 : vector<2x8x8xf32>
    %394 = arith.mulf %380, %393 : vector<2x8x8xf32>
    %395 = arith.addf %379, %394 : vector<2x8x8xf32>
    %cst_131 = arith.constant 2.000000e+00 : f32
    %396 = vector.broadcast %cst_131 : f32 to vector<2x8x8xf32>
    %397 = arith.mulf %396, %395 : vector<2x8x8xf32>
    %cst_132 = arith.constant 0.000000e+00 : f32
    %398 = vector.broadcast %cst_132 : f32 to vector<2x8x8xf32>
    %399 = arith.cmpf oge, %354, %398 : vector<2x8x8xf32>
    %cst_133 = arith.constant 3.14159274 : f32
    %400 = vector.broadcast %cst_133 : f32 to vector<2x8x8xf32>
    %401 = arith.subf %400, %397 : vector<2x8x8xf32>
    %402 = arith.select %399, %397, %401 : vector<2x8x8xi1>, vector<2x8x8xf32>
    %cst_134 = arith.constant 5.000000e-01 : f32
    %403 = vector.broadcast %cst_134 : f32 to vector<2x8x8xf32>
    %404 = arith.cmpf ole, %355, %403 : vector<2x8x8xf32>
    %405 = arith.select %404, %374, %402 : vector<2x8x8xi1>, vector<2x8x8xf32>
    %cst_135 = arith.constant 0.318309873 : f32
    %406 = vector.broadcast %cst_135 : f32 to vector<2x8x8xf32>
    %407 = arith.mulf %405, %406 : vector<2x8x8xf32>
    %cst_136 = arith.constant 1.000000e+00 : f32
    %408 = vector.broadcast %cst_136 : f32 to vector<2x8x8xf32>
    %409 = arith.subf %408, %407 : vector<2x8x8xf32>
    %410 = arith.mulf %409, %409 : vector<2x8x8xf32>
    %411 = arith.mulf %410, %410 : vector<2x8x8xf32>
    %412 = arith.mulf %411, %411 : vector<2x8x8xf32>
    "tpu.trace_start"() <{level = 10 : i32, message = "bqk,bkd->bqd"}> : () -> ()
    %cst_137 = arith.constant dense<0.000000e+00> : vector<2x8x16xf32>
    %413 = tpu.matmul %412, %349, %cst_137 {dimension_numbers = #tpu.dot_dimension_numbers<[2], [1], [1], [2], [0, 0, 0, 1, 1, 2], [0], [0]>} : vector<2x8x8xf32>, vector<2x8x16xf32>, vector<2x8x16xf32> -> vector<2x8x16xf32>
    "tpu.trace_stop"() : () -> ()
    %414 = vector.shape_cast %413 : vector<2x8x16xf32> to vector<16x16xf32>
    %415 = vector.extract_strided_slice %327 {offsets = [0, 16], sizes = [16, 16], strides = [1, 1]} : vector<16x96xf32> to vector<16x16xf32>
    %416 = vector.extract_strided_slice %327 {offsets = [0, 48], sizes = [16, 16], strides = [1, 1]} : vector<16x96xf32> to vector<16x16xf32>
    %417 = vector.extract_strided_slice %327 {offsets = [0, 80], sizes = [16, 16], strides = [1, 1]} : vector<16x96xf32> to vector<16x16xf32>
    %418 = arith.mulf %415, %415 : vector<16x16xf32>
    %cst_138 = arith.constant dense<0.000000e+00> : vector<16xf32>
    %419 = vector.multi_reduction <add>, %418, %cst_138 [1] : vector<16x16xf32> to vector<16xf32>
    %420 = vector.shape_cast %419 : vector<16xf32> to vector<16x1xf32>
    %cst_139 = arith.constant 1.000000e-24 : f32
    %421 = vector.broadcast %cst_139 : f32 to vector<16x1xf32>
    %422 = arith.addf %420, %421 : vector<16x1xf32>
    %423 = math.rsqrt %422 : vector<16x1xf32>
    %424 = vector.broadcast %423 : vector<16x1xf32> to vector<16x16xf32>
    %425 = arith.mulf %415, %424 : vector<16x16xf32>
    %426 = arith.mulf %416, %416 : vector<16x16xf32>
    %cst_140 = arith.constant dense<0.000000e+00> : vector<16xf32>
    %427 = vector.multi_reduction <add>, %426, %cst_140 [1] : vector<16x16xf32> to vector<16xf32>
    %428 = vector.shape_cast %427 : vector<16xf32> to vector<16x1xf32>
    %cst_141 = arith.constant 1.000000e-24 : f32
    %429 = vector.broadcast %cst_141 : f32 to vector<16x1xf32>
    %430 = arith.addf %428, %429 : vector<16x1xf32>
    %431 = math.rsqrt %430 : vector<16x1xf32>
    %432 = vector.broadcast %431 : vector<16x1xf32> to vector<16x16xf32>
    %433 = arith.mulf %416, %432 : vector<16x16xf32>
    %434 = vector.shape_cast %425 : vector<16x16xf32> to vector<2x8x16xf32>
    %435 = vector.shape_cast %433 : vector<16x16xf32> to vector<2x8x16xf32>
    %436 = vector.shape_cast %417 : vector<16x16xf32> to vector<2x8x16xf32>
    "tpu.trace_start"() <{level = 10 : i32, message = "bqd,bkd->bqk"}> : () -> ()
    %cst_142 = arith.constant dense<0.000000e+00> : vector<2x8x8xf32>
    %437 = tpu.matmul %434, %435, %cst_142 {dimension_numbers = #tpu.dot_dimension_numbers<[2], [2], [1], [1], [0, 0, 0, 1, 1, 1], [0], [0]>} : vector<2x8x16xf32>, vector<2x8x16xf32>, vector<2x8x8xf32> -> vector<2x8x8xf32>
    "tpu.trace_stop"() : () -> ()
    %cst_143 = arith.constant -1.000000e+00 : f32
    %438 = vector.broadcast %cst_143 : f32 to vector<2x8x8xf32>
    %439 = arith.maximumf %437, %438 : vector<2x8x8xf32>
    %cst_144 = arith.constant 1.000000e+00 : f32
    %440 = vector.broadcast %cst_144 : f32 to vector<2x8x8xf32>
    %441 = arith.minimumf %439, %440 : vector<2x8x8xf32>
    %442 = math.absf %441 : vector<2x8x8xf32>
    %443 = arith.mulf %441, %441 : vector<2x8x8xf32>
    %444 = arith.mulf %441, %443 : vector<2x8x8xf32>
    %cst_145 = arith.constant 4.216320e-02 : f32
    %445 = vector.broadcast %cst_145 : f32 to vector<2x8x8xf32>
    %446 = arith.mulf %445, %443 : vector<2x8x8xf32>
    %cst_146 = arith.constant 0.024181312 : f32
    %447 = vector.broadcast %cst_146 : f32 to vector<2x8x8xf32>
    %448 = arith.addf %446, %447 : vector<2x8x8xf32>
    %449 = arith.mulf %448, %443 : vector<2x8x8xf32>
    %cst_147 = arith.constant 0.0454700254 : f32
    %450 = vector.broadcast %cst_147 : f32 to vector<2x8x8xf32>
    %451 = arith.addf %449, %450 : vector<2x8x8xf32>
    %452 = arith.mulf %451, %443 : vector<2x8x8xf32>
    %cst_148 = arith.constant 0.0749530047 : f32
    %453 = vector.broadcast %cst_148 : f32 to vector<2x8x8xf32>
    %454 = arith.addf %452, %453 : vector<2x8x8xf32>
    %455 = arith.mulf %454, %443 : vector<2x8x8xf32>
    %cst_149 = arith.constant 0.166667521 : f32
    %456 = vector.broadcast %cst_149 : f32 to vector<2x8x8xf32>
    %457 = arith.addf %455, %456 : vector<2x8x8xf32>
    %458 = arith.mulf %444, %457 : vector<2x8x8xf32>
    %459 = arith.addf %441, %458 : vector<2x8x8xf32>
    %cst_150 = arith.constant 1.57079637 : f32
    %460 = vector.broadcast %cst_150 : f32 to vector<2x8x8xf32>
    %461 = arith.subf %460, %459 : vector<2x8x8xf32>
    %cst_151 = arith.constant 1.000000e+00 : f32
    %462 = vector.broadcast %cst_151 : f32 to vector<2x8x8xf32>
    %463 = arith.subf %462, %442 : vector<2x8x8xf32>
    %cst_152 = arith.constant 5.000000e-01 : f32
    %464 = vector.broadcast %cst_152 : f32 to vector<2x8x8xf32>
    %465 = arith.mulf %464, %463 : vector<2x8x8xf32>
    %466 = math.sqrt %465 : vector<2x8x8xf32>
    %467 = arith.mulf %466, %465 : vector<2x8x8xf32>
    %cst_153 = arith.constant 4.216320e-02 : f32
    %468 = vector.broadcast %cst_153 : f32 to vector<2x8x8xf32>
    %469 = arith.mulf %468, %465 : vector<2x8x8xf32>
    %cst_154 = arith.constant 0.024181312 : f32
    %470 = vector.broadcast %cst_154 : f32 to vector<2x8x8xf32>
    %471 = arith.addf %469, %470 : vector<2x8x8xf32>
    %472 = arith.mulf %471, %465 : vector<2x8x8xf32>
    %cst_155 = arith.constant 0.0454700254 : f32
    %473 = vector.broadcast %cst_155 : f32 to vector<2x8x8xf32>
    %474 = arith.addf %472, %473 : vector<2x8x8xf32>
    %475 = arith.mulf %474, %465 : vector<2x8x8xf32>
    %cst_156 = arith.constant 0.0749530047 : f32
    %476 = vector.broadcast %cst_156 : f32 to vector<2x8x8xf32>
    %477 = arith.addf %475, %476 : vector<2x8x8xf32>
    %478 = arith.mulf %477, %465 : vector<2x8x8xf32>
    %cst_157 = arith.constant 0.166667521 : f32
    %479 = vector.broadcast %cst_157 : f32 to vector<2x8x8xf32>
    %480 = arith.addf %478, %479 : vector<2x8x8xf32>
    %481 = arith.mulf %467, %480 : vector<2x8x8xf32>
    %482 = arith.addf %466, %481 : vector<2x8x8xf32>
    %cst_158 = arith.constant 2.000000e+00 : f32
    %483 = vector.broadcast %cst_158 : f32 to vector<2x8x8xf32>
    %484 = arith.mulf %483, %482 : vector<2x8x8xf32>
    %cst_159 = arith.constant 0.000000e+00 : f32
    %485 = vector.broadcast %cst_159 : f32 to vector<2x8x8xf32>
    %486 = arith.cmpf oge, %441, %485 : vector<2x8x8xf32>
    %cst_160 = arith.constant 3.14159274 : f32
    %487 = vector.broadcast %cst_160 : f32 to vector<2x8x8xf32>
    %488 = arith.subf %487, %484 : vector<2x8x8xf32>
    %489 = arith.select %486, %484, %488 : vector<2x8x8xi1>, vector<2x8x8xf32>
    %cst_161 = arith.constant 5.000000e-01 : f32
    %490 = vector.broadcast %cst_161 : f32 to vector<2x8x8xf32>
    %491 = arith.cmpf ole, %442, %490 : vector<2x8x8xf32>
    %492 = arith.select %491, %461, %489 : vector<2x8x8xi1>, vector<2x8x8xf32>
    %cst_162 = arith.constant 0.318309873 : f32
    %493 = vector.broadcast %cst_162 : f32 to vector<2x8x8xf32>
    %494 = arith.mulf %492, %493 : vector<2x8x8xf32>
    %cst_163 = arith.constant 1.000000e+00 : f32
    %495 = vector.broadcast %cst_163 : f32 to vector<2x8x8xf32>
    %496 = arith.subf %495, %494 : vector<2x8x8xf32>
    %497 = arith.mulf %496, %496 : vector<2x8x8xf32>
    %498 = arith.mulf %497, %497 : vector<2x8x8xf32>
    %499 = arith.mulf %498, %498 : vector<2x8x8xf32>
    "tpu.trace_start"() <{level = 10 : i32, message = "bqk,bkd->bqd"}> : () -> ()
    %cst_164 = arith.constant dense<0.000000e+00> : vector<2x8x16xf32>
    %500 = tpu.matmul %499, %436, %cst_164 {dimension_numbers = #tpu.dot_dimension_numbers<[2], [1], [1], [2], [0, 0, 0, 1, 1, 2], [0], [0]>} : vector<2x8x8xf32>, vector<2x8x16xf32>, vector<2x8x16xf32> -> vector<2x8x16xf32>
    "tpu.trace_stop"() : () -> ()
    %501 = vector.shape_cast %500 : vector<2x8x16xf32> to vector<16x16xf32>
    %502 = tpu.concatenate %414, %501 in 1 : vector<16x16xf32>, vector<16x16xf32> -> vector<16x32xf32>
    %c1_165 = arith.constant 1 : index
    %c0_166 = arith.constant 0 : index
    %c0_167 = arith.constant 0 : index
    %503 = vector.load %arg4[%c1_165, %c0_166, %c0_167] : memref<2x32x32xf32, #tpu.memory_space<vmem>>, vector<1x32x32xf32>
    %504 = vector.shape_cast %503 : vector<1x32x32xf32> to vector<32x32xf32>
    %cst_168 = arith.constant dense<0.000000e+00> : vector<16x32xf32>
    %505 = tpu.matmul %502, %504, %cst_168 {dimension_numbers = #tpu.dot_dimension_numbers<[1], [0], [0], [1], [0, 0, 1, 1], [], []>} : vector<16x32xf32>, vector<32x32xf32>, vector<16x32xf32> -> vector<16x32xf32>
    %506 = vector.broadcast %296 : vector<1x32xf32> to vector<16x32xf32>
    %507 = arith.addf %505, %506 : vector<16x32xf32>
    %508 = arith.addf %507, %290 : vector<16x32xf32>
    %cst_169 = arith.constant dense<0.000000e+00> : vector<16xf32>
    %509 = vector.multi_reduction <add>, %508, %cst_169 [1] : vector<16x32xf32> to vector<16xf32>
    %510 = vector.shape_cast %509 : vector<16xf32> to vector<16x1xf32>
    %cst_170 = arith.constant 3.200000e+01 : f32
    %511 = vector.broadcast %cst_170 : f32 to vector<16x1xf32>
    %512 = arith.divf %510, %511 : vector<16x1xf32>
    %513 = vector.broadcast %512 : vector<16x1xf32> to vector<16x32xf32>
    %514 = arith.subf %508, %513 : vector<16x32xf32>
    %515 = arith.mulf %514, %514 : vector<16x32xf32>
    %cst_171 = arith.constant dense<0.000000e+00> : vector<16xf32>
    %516 = vector.multi_reduction <add>, %515, %cst_171 [1] : vector<16x32xf32> to vector<16xf32>
    %517 = vector.shape_cast %516 : vector<16xf32> to vector<16x1xf32>
    %cst_172 = arith.constant 3.200000e+01 : f32
    %518 = vector.broadcast %cst_172 : f32 to vector<16x1xf32>
    %519 = arith.divf %517, %518 : vector<16x1xf32>
    %cst_173 = arith.constant 9.99999974E-6 : f32
    %520 = vector.broadcast %cst_173 : f32 to vector<16x1xf32>
    %521 = arith.addf %519, %520 : vector<16x1xf32>
    %522 = math.rsqrt %521 : vector<16x1xf32>
    %523 = vector.broadcast %522 : vector<16x1xf32> to vector<16x32xf32>
    %524 = arith.mulf %514, %523 : vector<16x32xf32>
    %525 = vector.broadcast %297 : vector<1x32xf32> to vector<16x32xf32>
    %526 = arith.mulf %524, %525 : vector<16x32xf32>
    %527 = vector.broadcast %298 : vector<1x32xf32> to vector<16x32xf32>
    %528 = arith.addf %526, %527 : vector<16x32xf32>
    %c1_174 = arith.constant 1 : index
    %c0_175 = arith.constant 0 : index
    %c0_176 = arith.constant 0 : index
    %529 = vector.load %arg5[%c1_174, %c0_175, %c0_176] : memref<2x32x64xf32, #tpu.memory_space<vmem>>, vector<1x32x64xf32>
    %530 = vector.shape_cast %529 : vector<1x32x64xf32> to vector<32x64xf32>
    %cst_177 = arith.constant dense<0.000000e+00> : vector<16x64xf32>
    %531 = tpu.matmul %528, %530, %cst_177 {dimension_numbers = #tpu.dot_dimension_numbers<[1], [0], [0], [1], [0, 0, 1, 1], [], []>} : vector<16x32xf32>, vector<32x64xf32>, vector<16x64xf32> -> vector<16x64xf32>
    %532 = vector.broadcast %299 : vector<1x64xf32> to vector<16x64xf32>
    %533 = arith.addf %531, %532 : vector<16x64xf32>
    %cst_178 = arith.constant 5.000000e-01 : f32
    %534 = vector.broadcast %cst_178 : f32 to vector<16x64xf32>
    %535 = arith.mulf %534, %533 : vector<16x64xf32>
    %cst_179 = arith.constant 0.707106769 : f32
    %536 = vector.broadcast %cst_179 : f32 to vector<16x64xf32>
    %537 = arith.mulf %533, %536 : vector<16x64xf32>
    %538 = math.absf %537 : vector<16x64xf32>
    %cst_180 = arith.constant 0.327591091 : f32
    %539 = vector.broadcast %cst_180 : f32 to vector<16x64xf32>
    %540 = arith.mulf %539, %538 : vector<16x64xf32>
    %cst_181 = arith.constant 1.000000e+00 : f32
    %541 = vector.broadcast %cst_181 : f32 to vector<16x64xf32>
    %542 = arith.addf %541, %540 : vector<16x64xf32>
    %cst_182 = arith.constant 1.000000e+00 : f32
    %543 = vector.broadcast %cst_182 : f32 to vector<16x64xf32>
    %544 = arith.divf %543, %542 : vector<16x64xf32>
    %cst_183 = arith.constant 1.06140542 : f32
    %545 = vector.broadcast %cst_183 : f32 to vector<16x64xf32>
    %546 = arith.mulf %545, %544 : vector<16x64xf32>
    %cst_184 = arith.constant -1.45315206 : f32
    %547 = vector.broadcast %cst_184 : f32 to vector<16x64xf32>
    %548 = arith.addf %546, %547 : vector<16x64xf32>
    %549 = arith.mulf %548, %544 : vector<16x64xf32>
    %cst_185 = arith.constant 1.42141378 : f32
    %550 = vector.broadcast %cst_185 : f32 to vector<16x64xf32>
    %551 = arith.addf %549, %550 : vector<16x64xf32>
    %552 = arith.mulf %551, %544 : vector<16x64xf32>
    %cst_186 = arith.constant -0.284496725 : f32
    %553 = vector.broadcast %cst_186 : f32 to vector<16x64xf32>
    %554 = arith.addf %552, %553 : vector<16x64xf32>
    %555 = arith.mulf %554, %544 : vector<16x64xf32>
    %cst_187 = arith.constant 0.254829586 : f32
    %556 = vector.broadcast %cst_187 : f32 to vector<16x64xf32>
    %557 = arith.addf %555, %556 : vector<16x64xf32>
    %558 = arith.mulf %557, %544 : vector<16x64xf32>
    %cst_188 = arith.constant 0.000000e+00 : f32
    %559 = vector.broadcast %cst_188 : f32 to vector<16x64xf32>
    %560 = arith.subf %559, %538 : vector<16x64xf32>
    %561 = arith.mulf %560, %538 : vector<16x64xf32>
    %562 = math.exp %561 : vector<16x64xf32>
    %563 = arith.mulf %558, %562 : vector<16x64xf32>
    %cst_189 = arith.constant 1.000000e+00 : f32
    %564 = vector.broadcast %cst_189 : f32 to vector<16x64xf32>
    %565 = arith.subf %564, %563 : vector<16x64xf32>
    %cst_190 = arith.constant 0.000000e+00 : f32
    %566 = vector.broadcast %cst_190 : f32 to vector<16x64xf32>
    %567 = arith.cmpf oge, %537, %566 : vector<16x64xf32>
    %cst_191 = arith.constant 0.000000e+00 : f32
    %568 = vector.broadcast %cst_191 : f32 to vector<16x64xf32>
    %569 = arith.subf %568, %565 : vector<16x64xf32>
    %570 = arith.select %567, %565, %569 : vector<16x64xi1>, vector<16x64xf32>
    %cst_192 = arith.constant 1.000000e+00 : f32
    %571 = vector.broadcast %cst_192 : f32 to vector<16x64xf32>
    %572 = arith.addf %571, %570 : vector<16x64xf32>
    %573 = arith.mulf %535, %572 : vector<16x64xf32>
    %c1_193 = arith.constant 1 : index
    %c0_194 = arith.constant 0 : index
    %c0_195 = arith.constant 0 : index
    %574 = vector.load %arg6[%c1_193, %c0_194, %c0_195] : memref<2x64x32xf32, #tpu.memory_space<vmem>>, vector<1x64x32xf32>
    %575 = vector.shape_cast %574 : vector<1x64x32xf32> to vector<64x32xf32>
    %cst_196 = arith.constant dense<0.000000e+00> : vector<16x32xf32>
    %576 = tpu.matmul %573, %575, %cst_196 {dimension_numbers = #tpu.dot_dimension_numbers<[1], [0], [0], [1], [0, 0, 1, 1], [], []>} : vector<16x64xf32>, vector<64x32xf32>, vector<16x32xf32> -> vector<16x32xf32>
    %577 = vector.broadcast %300 : vector<1x32xf32> to vector<16x32xf32>
    %578 = arith.addf %576, %577 : vector<16x32xf32>
    %579 = arith.addf %578, %508 : vector<16x32xf32>
    %c2 = arith.constant 2 : index
    %c0_197 = arith.constant 0 : index
    %c0_198 = arith.constant 0 : index
    %580 = vector.load %arg7[%c2, %c0_197, %c0_198] : memref<3x8x128xf32, #tpu.memory_space<vmem>>, vector<1x8x128xf32>
    %581 = vector.shape_cast %580 : vector<1x8x128xf32> to vector<8x128xf32>
    %582 = vector.extract_strided_slice %581 {offsets = [0, 0], sizes = [1, 32], strides = [1, 1]} : vector<8x128xf32> to vector<1x32xf32>
    %583 = vector.extract_strided_slice %581 {offsets = [1, 0], sizes = [1, 32], strides = [1, 1]} : vector<8x128xf32> to vector<1x32xf32>
    %cst_199 = arith.constant dense<0.000000e+00> : vector<16xf32>
    %584 = vector.multi_reduction <add>, %579, %cst_199 [1] : vector<16x32xf32> to vector<16xf32>
    %585 = vector.shape_cast %584 : vector<16xf32> to vector<16x1xf32>
    %cst_200 = arith.constant 3.200000e+01 : f32
    %586 = vector.broadcast %cst_200 : f32 to vector<16x1xf32>
    %587 = arith.divf %585, %586 : vector<16x1xf32>
    %588 = vector.broadcast %587 : vector<16x1xf32> to vector<16x32xf32>
    %589 = arith.subf %579, %588 : vector<16x32xf32>
    %590 = arith.mulf %589, %589 : vector<16x32xf32>
    %cst_201 = arith.constant dense<0.000000e+00> : vector<16xf32>
    %591 = vector.multi_reduction <add>, %590, %cst_201 [1] : vector<16x32xf32> to vector<16xf32>
    %592 = vector.shape_cast %591 : vector<16xf32> to vector<16x1xf32>
    %cst_202 = arith.constant 3.200000e+01 : f32
    %593 = vector.broadcast %cst_202 : f32 to vector<16x1xf32>
    %594 = arith.divf %592, %593 : vector<16x1xf32>
    %cst_203 = arith.constant 9.99999974E-6 : f32
    %595 = vector.broadcast %cst_203 : f32 to vector<16x1xf32>
    %596 = arith.addf %594, %595 : vector<16x1xf32>
    %597 = math.rsqrt %596 : vector<16x1xf32>
    %598 = vector.broadcast %597 : vector<16x1xf32> to vector<16x32xf32>
    %599 = arith.mulf %589, %598 : vector<16x32xf32>
    %600 = vector.broadcast %582 : vector<1x32xf32> to vector<16x32xf32>
    %601 = arith.mulf %599, %600 : vector<16x32xf32>
    %602 = vector.broadcast %583 : vector<1x32xf32> to vector<16x32xf32>
    %603 = arith.addf %601, %602 : vector<16x32xf32>
    %604 = vector.broadcast %1 : vector<16x1xf32> to vector<16x32xf32>
    %605 = arith.mulf %603, %604 : vector<16x32xf32>
    %c0_204 = arith.constant 0 : index
    %c0_205 = arith.constant 0 : index
    %606 = vector.load %arg8[%c0_204, %c0_205] : memref<16x32xf32, #tpu.memory_space<vmem>>, vector<16x32xf32>
    tpu.vector_store %arg8[%c0_204, %c0_205], %605 {strides = array<i32>} : memref<16x32xf32, #tpu.memory_space<vmem>>, vector<16x32xf32>,
    return
  }
  func.func @transform_0(%arg0: i32) -> (i32, i32) {
    %c0_i32 = arith.constant 0 : i32
    %c0_i32_0 = arith.constant 0 : i32
    %c0_i32_1 = arith.constant 0 : i32
    return %c0_i32, %c0_i32_0 : i32, i32
  }
  func.func @transform_1(%arg0: i32) -> (i32, i32) {
    %c0_i32 = arith.constant 0 : i32
    %c0_i32_0 = arith.constant 0 : i32
    %c0_i32_1 = arith.constant 0 : i32
    return %c0_i32, %c0_i32_0 : i32, i32
  }
  func.func @transform_2(%arg0: i32) -> (i32, i32, i32) {
    %c0_i32 = arith.constant 0 : i32
    %c0_i32_0 = arith.constant 0 : i32
    %c0_i32_1 = arith.constant 0 : i32
    %c0_i32_2 = arith.constant 0 : i32
    return %c0_i32, %c0_i32_0, %c0_i32_1 : i32, i32, i32
  }
  func.func @transform_3(%arg0: i32) -> (i32, i32, i32) {
    %c0_i32 = arith.constant 0 : i32
    %c0_i32_0 = arith.constant 0 : i32
    %c0_i32_1 = arith.constant 0 : i32
    %c0_i32_2 = arith.constant 0 : i32
    return %c0_i32, %c0_i32_0, %c0_i32_1 : i32, i32, i32
  }
  func.func @transform_4(%arg0: i32) -> (i32, i32, i32) {
    %c0_i32 = arith.constant 0 : i32
    %c0_i32_0 = arith.constant 0 : i32
    %c0_i32_1 = arith.constant 0 : i32
    %c0_i32_2 = arith.constant 0 : i32
    return %c0_i32, %c0_i32_0, %c0_i32_1 : i32, i32, i32
  }
  func.func @transform_5(%arg0: i32) -> (i32, i32, i32) {
    %c0_i32 = arith.constant 0 : i32
    %c0_i32_0 = arith.constant 0 : i32
    %c0_i32_1 = arith.constant 0 : i32
    %c0_i32_2 = arith.constant 0 : i32
    return %c0_i32, %c0_i32_0, %c0_i32_1 : i32, i32, i32
  }
  func.func @transform_6(%arg0: i32) -> (i32, i32, i32) {
    %c0_i32 = arith.constant 0 : i32
    %c0_i32_0 = arith.constant 0 : i32
    %c0_i32_1 = arith.constant 0 : i32
    %c0_i32_2 = arith.constant 0 : i32
    return %c0_i32, %c0_i32_0, %c0_i32_1 : i32, i32, i32
  }
  func.func @transform_7(%arg0: i32) -> (i32, i32) {
    %c0_i32 = arith.constant 0 : i32
    %c0_i32_0 = arith.constant 0 : i32
    %c0_i32_1 = arith.constant 0 : i32
    return %c0_i32, %c0_i32_0 : i32, i32
  }
}

</mosaic_0001>

<llo_original>
// kernel: tpu_custom_call.1
$region0: #{tpu_custom_call.1}
  #allocation0 [shape = 'u32[]', space=smem, size = 0x4, offset = 0x4, fixed_abs, tag = 'smem constant byte address 0x4 - core index']
  #allocation1 [shape = 'u32[144,128]{1,0:T(1,128)}', space=vmem, size = 0x12000, scoped, tag = 'internal scratch']
  %s0 = inlined_call_operand.vmem [shape: f32[16,1], index: 0, kind: input, shape index: {}]
  %s1 = inlined_call_operand.hbm [shape: f32[16,32], index: 1, kind: input, shape index: {}]
  %s2 = inlined_call_operand.vmem [shape: f32[2,32,96], index: 2, kind: input, shape index: {}]
  %s3 = inlined_call_operand.vmem [shape: f32[2,32,32], index: 3, kind: input, shape index: {}]
  %s4 = inlined_call_operand.vmem [shape: f32[2,32,64], index: 4, kind: input, shape index: {}]
  %s5 = inlined_call_operand.vmem [shape: f32[2,64,32], index: 5, kind: input, shape index: {}]
  %s6 = inlined_call_operand.vmem [shape: f32[3,8,128], index: 6, kind: input, shape index: {}]
  %s7 = inlined_call_operand.hbm [shape: f32[16,32], index: 7, kind: output, shape index: {}]
  %s8 = sld [smem:[#allocation0]]
  $region42: #{tpu_custom_call.1} parent=0
    _
  %s10 = ssub.s32 1, %s8
  %s11 = scalar_select 0, %s10, %s8
  $region1: #{tpu_custom_call.1} parent=0
    #allocation2 [shape = 'u8[8192]{0}', space=vmem, size = 0x2000, scoped, tag = 'input window, operand 1, single buffered']
    #allocation3 [shape = 's32[1]{0}', space=sflag, size = 0x4, scoped, tag = 'scoped memory for tpu_custom_call.1']
    #allocation4 [shape = 's32[1]{0}', space=sflag, size = 0x4, scoped, tag = 'scoped memory for tpu_custom_call.1']
    #allocation5 [shape = 'u8[8192]{0}', space=vmem, size = 0x2000, scoped, tag = 'output window, operand 0, single buffered']
    %12 = vsyncpa [#allocation3], 0
    %13 = vsyncpa [#allocation4], 0
    // Predicated region
    $region2: #{tpu_custom_call.1} parent=1 // pred_check
      _
    $region3: #{tpu_custom_call.1} parent=1 // pred_check_branch
      %15 = sbr.rel (0) target = $region5
    $region4: #{tpu_custom_call.1} parent=1 // pred_region
      _
    $region5: #{tpu_custom_call.1} parent=1 // pred_fallthru
      _
    // Predicated region
    $region6: #{tpu_custom_call.1} parent=1 // pred_check
      _
    $region7: #{tpu_custom_call.1} parent=1 // pred_check_branch
      %17 = sbr.rel (0) target = $region9
    $region8: #{tpu_custom_call.1} parent=1 // pred_region
      %s19 = ssub.s32 256, 256
      %20 = vsyncadd [#allocation3], %s19
      %s21 = sshll.u32 [#allocation2], 4
      %s22 = int_to_ptr.vmem [resolvable:$true] %s21
      %27 = dma.hbm_to_vmem [thread:$0]  %s1, 256, %s22, [#allocation3], 128, 128, 8
    $region9: #{tpu_custom_call.1} parent=1 // pred_fallthru
      _
    // Predicated region
    $region10: #{tpu_custom_call.1} parent=1 // pred_check
      _
    $region11: #{tpu_custom_call.1} parent=1 // pred_check_branch
      %29 = sbr.rel (0) target = $region13
    $region12: #{tpu_custom_call.1} parent=1 // pred_region
      _
    $region13: #{tpu_custom_call.1} parent=1 // pred_fallthru
      _
    // Predicated region
    $region14: #{tpu_custom_call.1} parent=1 // pred_check
      _
    $region15: #{tpu_custom_call.1} parent=1 // pred_check_branch
      %31 = sbr.rel (0) target = $region17
    $region16: #{tpu_custom_call.1} parent=1 // pred_region
      _
    $region17: #{tpu_custom_call.1} parent=1 // pred_fallthru
      _
    // Predicated region
    $region18: #{tpu_custom_call.1} parent=1 // pred_check
      _
    $region19: #{tpu_custom_call.1} parent=1 // pred_check_branch
      %33 = sbr.rel (0) target = $region21
    $region20: #{tpu_custom_call.1} parent=1 // pred_region
      _
    $region21: #{tpu_custom_call.1} parent=1 // pred_fallthru
      _
    // Predicated region
    $region22: #{tpu_custom_call.1} parent=1 // pred_check
      _
    $region23: #{tpu_custom_call.1} parent=1 // pred_check_branch
      %35 = sbr.rel (0) target = $region25
    $region24: #{tpu_custom_call.1} parent=1 // pred_region
      _
    $region25: #{tpu_custom_call.1} parent=1 // pred_fallthru
      _
    // Predicated region
    $region26: #{tpu_custom_call.1} parent=1 // pred_check
      _
    $region27: #{tpu_custom_call.1} parent=1 // pred_check_branch
      %37 = sbr.rel (0) target = $region29
    $region28: #{tpu_custom_call.1} parent=1 // pred_region
      _
    $region29: #{tpu_custom_call.1} parent=1 // pred_fallthru
      _
    // Predicated region
    $region30: #{tpu_custom_call.1} parent=1 // pred_check
      _
    $region31: #{tpu_custom_call.1} parent=1 // pred_check_branch
      %39 = sbr.rel (0) target = $region33
    $region32: #{tpu_custom_call.1} parent=1 // pred_region
      %40 = dma.done [#allocation3], 256
    $region33: #{tpu_custom_call.1} parent=1 // pred_fallthru
      _
    %v41 = vld [vmem:[#allocation2] sm:$0xff]
    %v42 = vld [vmem:[#allocation2 + $0x8] sm:$0xff]
    %v43 = vld [vmem:[%s0] sm:$0xff]
    %v44 = vld [vmem:[%s0 + $0x8] sm:$0xff]
    %v45 = vld [vmem:[%s6] sm:$0xff]
    %vm46 = vcmask 261120
    %v47 = vsel %vm46, %v41, 0.0
    %48 = vadd.xlane.f32.xlu0 %v47
    %v49 = vpop.xlane.xlu0 %48
    %v50 = vsel %vm46, %v42, 0.0
    %51 = vadd.xlane.f32.xlu0 %v50
    %v52 = vpop.xlane.xlu0 %51
    %v53 = vrcp.pop 32.0
    %v54 = vmul.f32 %v49, %v53
    %v55 = vmul.f32 %v52, %v53
    %v56 = vsub.f32 %v41, %v54
    %v57 = vsub.f32 %v42, %v55
    %v58 = vmul.f32 %v56, %v56
    %v59 = vmul.f32 %v57, %v57
    %v60 = vsel %vm46, %v58, 0.0
    %61 = vadd.xlane.f32.xlu0 %v60
    %v62 = vpop.xlane.xlu0 %61
    %v63 = vsel %vm46, %v59, 0.0
    %64 = vadd.xlane.f32.xlu0 %v63
    %v65 = vpop.xlane.xlu0 %64
    %v66 = vmul.f32 %v62, %v53
    %v67 = vmul.f32 %v65, %v53
    %v68 = vadd.f32 %v66, 1e-05
    %v69 = vadd.f32 %v67, 1e-05
    %v70 = vrsqrt.pop %v68
    %v71 = vrsqrt.pop %v69
    %v72 = vmul.f32 %v56, %v70
    %v73 = vmul.f32 %v57, %v71
    %v74 = vlaneseq
    %v75 = vshrl.u32 %v74, 7
    %v76 = vsub.s32 0, %v75
    %v77 = vrot.slane %v45, %v76
    %v78 = vmul.f32 %v72, %v77
    %v79 = vmul.f32 %v73, %v77
    %v80 = vlaneseq
    %v81 = vshrl.u32 %v80, 7
    %v82 = vsub.s32 1, %v81
    %v83 = vrot.slane %v45, %v82
    %v84 = vadd.f32 %v78, %v83
    %v85 = vadd.f32 %v79, %v83
    %v86 = vld [vmem:[%s2] sm:$0xff]
    %v87 = vld [vmem:[%s2 + $0x8] sm:$0xff]
    %v88 = vld [vmem:[%s2 + $0x10] sm:$0xff]
    %v89 = vld [vmem:[%s2 + $0x18] sm:$0xff]
    %v90 = vlaneseq
    %v91 = vshrl.u32 %v90, 7
    %v92 = vsub.s32 2, %v91
    %v93 = vrot.slane %v45, %v92
    %v95 = vsel %vm46, %v84, 0
    %v98 = vsel %vm46, %v85, 0
    %100 = vmatprep.subr.mxu0 0.0
    %101 = vmatpush1.msra.mxu0 %v86
    %102 = vmatprep.subr.mxu0 0.0
    %103 = vmatpush1.msra.mxu0 %v87
    %104 = vmatprep.subr.mxu0 0.0
    %105 = vmatpush1.msra.mxu0 %v88
    %106 = vmatprep.subr.mxu0 0.0
    %107 = vmatpush1.msra.mxu0 %v89
    %108 = vmatprep.subr.mxu0 0.0
    %109 = vmatpush1.msra.mxu0 0.0
    %110 = vmatprep.subr.mxu0 0.0
    %111 = vmatpush1.msra.mxu0 0.0
    %112 = vmatprep.subr.mxu0 0.0
    %113 = vmatpush1.msra.mxu0 0.0
    %114 = vmatprep.subr.mxu0 0.0
    %115 = vmatpush1.msra.mxu0 0.0
    %116 = vmatprep.subr.mxu0 0.0
    %117 = vmatpush1.msra.mxu0 0.0
    %118 = vmatprep.subr.mxu0 0.0
    %119 = vmatpush1.msra.mxu0 0.0
    %120 = vmatprep.subr.mxu0 0.0
    %121 = vmatpush1.msra.mxu0 0.0
    %122 = vmatprep.subr.mxu0 0.0
    %123 = vmatpush1.msra.mxu0 0.0
    %124 = vmatprep.subr.mxu0 0.0
    %125 = vmatpush1.msra.mxu0 0.0
    %126 = vmatprep.subr.mxu0 0.0
    %127 = vmatpush1.msra.mxu0 0.0
    %128 = vmatprep.subr.mxu0 0.0
    %129 = vmatpush1.msra.mxu0 0.0
    %130 = vmatprep.subr.mxu0 0.0
    %131 = vmatpush1.msra.mxu0 0.0
    %132 = vmatprep.subr.mxu0 0.0
    %133 = vmatpush1.msra.mxu0 0.0
    %134 = vmatprep.subr.mxu0 0.0
    %135 = vmatpush1.msra.mxu0 0.0
    %136 = vmatprep.subr.mxu0 0.0
    %137 = vmatpush1.msra.mxu0 0.0
    %138 = vmatprep.subr.mxu0 0.0
    %139 = vmatpush1.msra.mxu0 0.0
    %140 = vmatprep.subr.mxu0 0.0
    %141 = vmatpush1.msra.mxu0 0.0
    %142 = vmatprep.subr.mxu0 0.0
    %143 = vmatpush1.msra.mxu0 0.0
    %144 = vmatprep.subr.mxu0 0.0
    %145 = vmatpush1.msra.mxu0 0.0
    %146 = vmatprep.subr.mxu0 0.0
    %147 = vmatpush1.msra.mxu0 0.0
    %148 = vmatprep.subr.mxu0 0.0
    %149 = vmatpush1.msra.mxu0 0.0
    %150 = vmatprep.subr.mxu0 0.0
    %151 = vmatpush1.msra.mxu0 0.0
    %152 = vmatprep.subr.mxu0 0.0
    %153 = vmatpush1.msra.mxu0 0.0
    %154 = vmatprep.subr.mxu0 0.0
    %155 = vmatpush1.msra.mxu0 0.0
    %156 = vmatprep.subr.mxu0 0.0
    %157 = vmatpush1.msra.mxu0 0.0
    %158 = vmatprep.subr.mxu0 0.0
    %159 = vmatpush1.msra.mxu0 0.0
    %160 = vmatprep.subr.mxu0 0.0
    %161 = vmatpush1.msra.mxu0 0.0
    %162 = vmatprep.subr.mxu0 0.0
    %163 = vmatpush1.msra.mxu0 0.0
    %164 = vmatprep.mubr.f32.mxu0 0.0
    %165 = vmatmul.mubr.f32.gmra.mrb[0].mxu0 %v95
    %v166 = vpop.f32.mrb[0].mxu0
    %v167 = vadd.f32 %v93, %v166
    %v168 = vpop.f32.mrb[0].mxu0
    %169 = vmatprep.mubr.f32.mxu0 0.0
    %170 = vmatmul.mubr.f32.gmra.mrb[0].mxu0 %v98
    %v171 = vpop.f32.mrb[0].mxu0
    %v172 = vadd.f32 %v93, %v171
    %v173 = vpop.f32.mrb[0].mxu0
    %174 = vdwg.mxu0
    %176 = vset.pattern.permute.xlu0 0
    %177 = vperm.xlu0 %176, %v43
    %v178 = vpop.permute.xlu0 %177
    %181 = vset.pattern.permute.xlu0 0
    %182 = vperm.xlu0 %181, %v44
    %v183 = vpop.permute.xlu0 %182
    %v185 = vmul.f32 %v167, %v178
    %v186 = vmul.f32 %v172, %v183
    %v187 = vmul.f32 %v185, %v185
    %v188 = vmul.f32 %v186, %v186
    %vm189 = vcmask 130048
    %v190 = vsel %vm189, %v187, 0.0
    %191 = vadd.xlane.f32.xlu0 %v190
    %v192 = vpop.xlane.xlu0 %191
    %v193 = vsel %vm189, %v188, 0.0
    %194 = vadd.xlane.f32.xlu0 %v193
    %v195 = vpop.xlane.xlu0 %194
    %v196 = vadd.f32 %v192, 1e-24
    %v197 = vadd.f32 %v195, 1e-24
    %v198 = vrsqrt.pop %v196
    %v199 = vrsqrt.pop %v197
    %v200 = vmul.f32 %v185, %v198
    %v201 = vmul.f32 %v186, %v199
    %204 = vrot.lane.b32.xlu0 %v187, 96
    %v205 = vpop.permute.xlu0 %204
    %206 = vrot.lane.b32.xlu0 %v188, 96
    %v207 = vpop.permute.xlu0 %206
    %v210 = vsel %vm189, %v205, 0.0
    %211 = vadd.xlane.f32.xlu0 %v210
    %v212 = vpop.xlane.xlu0 %211
    %v213 = vsel %vm189, %v207, 0.0
    %214 = vadd.xlane.f32.xlu0 %v213
    %v215 = vpop.xlane.xlu0 %214
    %v216 = vadd.f32 %v212, 1e-24
    %v217 = vadd.f32 %v215, 1e-24
    %v218 = vrsqrt.pop %v216
    %v219 = vrsqrt.pop %v217
    %v220 = vmul.f32 %v185, %v218
    %v221 = vmul.f32 %v186, %v219
    %223 = vrot.lane.b32.xlu0 %v220, 96
    %v224 = vpop.permute.xlu0 %223
    %v226 = vsel %vm189, %v200, 0
    %v228 = vsel %vm189, %v224, 0
    %230 = vmatprep.subr.mxu0 0.0
    %231 = vmatpush1.xpose.msra.mxu0 %v228
    %232 = vmatprep.subr.mxu0 0.0
    %233 = vmatpush1.xpose.msra.mxu0 0.0
    %234 = vmatprep.subr.mxu0 0.0
    %235 = vmatpush1.xpose.msra.mxu0 0.0
    %236 = vmatprep.subr.mxu0 0.0
    %237 = vmatpush1.xpose.msra.mxu0 0.0
    %238 = vmatprep.subr.mxu0 0.0
    %239 = vmatpush1.xpose.msra.mxu0 0.0
    %240 = vmatprep.subr.mxu0 0.0
    %241 = vmatpush1.xpose.msra.mxu0 0.0
    %242 = vmatprep.subr.mxu0 0.0
    %243 = vmatpush1.xpose.msra.mxu0 0.0
    %244 = vmatprep.subr.mxu0 0.0
    %245 = vmatpush1.xpose.msra.mxu0 0.0
    %246 = vmatprep.subr.mxu0 0.0
    %247 = vmatpush1.xpose.msra.mxu0 0.0
    %248 = vmatprep.subr.mxu0 0.0
    %249 = vmatpush1.xpose.msra.mxu0 0.0
    %250 = vmatprep.subr.mxu0 0.0
    %251 = vmatpush1.xpose.msra.mxu0 0.0
    %252 = vmatprep.subr.mxu0 0.0
    %253 = vmatpush1.xpose.msra.mxu0 0.0
    %254 = vmatprep.subr.mxu0 0.0
    %255 = vmatpush1.xpose.msra.mxu0 0.0
    %256 = vmatprep.subr.mxu0 0.0
    %257 = vmatpush1.xpose.msra.mxu0 0.0
    %258 = vmatprep.subr.mxu0 0.0
    %259 = vmatpush1.xpose.msra.mxu0 0.0
    %260 = vmatprep.subr.mxu0 0.0
    %261 = vmatpush1.xpose.msra.mxu0 0.0
    %262 = vmatprep.subr.mxu0 0.0
    %263 = vmatpush1.xpose.msra.mxu0 0.0
    %264 = vmatprep.subr.mxu0 0.0
    %265 = vmatpush1.xpose.msra.mxu0 0.0
    %266 = vmatprep.subr.mxu0 0.0
    %267 = vmatpush1.xpose.msra.mxu0 0.0
    %268 = vmatprep.subr.mxu0 0.0
    %269 = vmatpush1.xpose.msra.mxu0 0.0
    %270 = vmatprep.subr.mxu0 0.0
    %271 = vmatpush1.xpose.msra.mxu0 0.0
    %272 = vmatprep.subr.mxu0 0.0
    %273 = vmatpush1.xpose.msra.mxu0 0.0
    %274 = vmatprep.subr.mxu0 0.0
    %275 = vmatpush1.xpose.msra.mxu0 0.0
    %276 = vmatprep.subr.mxu0 0.0
    %277 = vmatpush1.xpose.msra.mxu0 0.0
    %278 = vmatprep.subr.mxu0 0.0
    %279 = vmatpush1.xpose.msra.mxu0 0.0
    %280 = vmatprep.subr.mxu0 0.0
    %281 = vmatpush1.xpose.msra.mxu0 0.0
    %282 = vmatprep.subr.mxu0 0.0
    %283 = vmatpush1.xpose.msra.mxu0 0.0
    %284 = vmatprep.subr.mxu0 0.0
    %285 = vmatpush1.xpose.msra.mxu0 0.0
    %286 = vmatprep.subr.mxu0 0.0
    %287 = vmatpush1.xpose.msra.mxu0 0.0
    %288 = vmatprep.subr.mxu0 0.0
    %289 = vmatpush1.xpose.msra.mxu0 0.0
    %290 = vmatprep.subr.mxu0 0.0
    %291 = vmatpush1.xpose.msra.mxu0 0.0
    %292 = vmatprep.subr.mxu0 0.0
    %293 = vmatpush1.xpose.msra.mxu0 0.0
    %294 = vmatprep.mubr.f32.mxu0 0.0
    %295 = vmatmul.mubr.f32.gmra.mrb[0].mxu0 %v226
    %v296 = vpop.f32.mrb[0].mxu0
    %v297 = vadd.f32 0.0, %v296
    %v298 = vpop.f32.mrb[0].mxu0
    %299 = vdwg.mxu0
    %301 = vrot.lane.b32.xlu0 %v221, 96
    %v302 = vpop.permute.xlu0 %301
    %v304 = vsel %vm189, %v201, 0
    %v306 = vsel %vm189, %v302, 0
    %308 = vmatprep.subr.mxu0 0.0
    %309 = vmatpush1.xpose.msra.mxu0 %v306
    %310 = vmatprep.subr.mxu0 0.0
    %311 = vmatpush1.xpose.msra.mxu0 0.0
    %312 = vmatprep.subr.mxu0 0.0
    %313 = vmatpush1.xpose.msra.mxu0 0.0
    %314 = vmatprep.subr.mxu0 0.0
    %315 = vmatpush1.xpose.msra.mxu0 0.0
    %316 = vmatprep.subr.mxu0 0.0
    %317 = vmatpush1.xpose.msra.mxu0 0.0
    %318 = vmatprep.subr.mxu0 0.0
    %319 = vmatpush1.xpose.msra.mxu0 0.0
    %320 = vmatprep.subr.mxu0 0.0
    %321 = vmatpush1.xpose.msra.mxu0 0.0
    %322 = vmatprep.subr.mxu0 0.0
    %323 = vmatpush1.xpose.msra.mxu0 0.0
    %324 = vmatprep.subr.mxu0 0.0
    %325 = vmatpush1.xpose.msra.mxu0 0.0
    %326 = vmatprep.subr.mxu0 0.0
    %327 = vmatpush1.xpose.msra.mxu0 0.0
    %328 = vmatprep.subr.mxu0 0.0
    %329 = vmatpush1.xpose.msra.mxu0 0.0
    %330 = vmatprep.subr.mxu0 0.0
    %331 = vmatpush1.xpose.msra.mxu0 0.0
    %332 = vmatprep.subr.mxu0 0.0
    %333 = vmatpush1.xpose.msra.mxu0 0.0
    %334 = vmatprep.subr.mxu0 0.0
    %335 = vmatpush1.xpose.msra.mxu0 0.0
    %336 = vmatprep.subr.mxu0 0.0
    %337 = vmatpush1.xpose.msra.mxu0 0.0
    %338 = vmatprep.subr.mxu0 0.0
    %339 = vmatpush1.xpose.msra.mxu0 0.0
    %340 = vmatprep.subr.mxu0 0.0
    %341 = vmatpush1.xpose.msra.mxu0 0.0
    %342 = vmatprep.subr.mxu0 0.0
    %343 = vmatpush1.xpose.msra.mxu0 0.0
    %344 = vmatprep.subr.mxu0 0.0
    %345 = vmatpush1.xpose.msra.mxu0 0.0
    %346 = vmatprep.subr.mxu0 0.0
    %347 = vmatpush1.xpose.msra.mxu0 0.0
    %348 = vmatprep.subr.mxu0 0.0
    %349 = vmatpush1.xpose.msra.mxu0 0.0
    %350 = vmatprep.subr.mxu0 0.0
    %351 = vmatpush1.xpose.msra.mxu0 0.0
    %352 = vmatprep.subr.mxu0 0.0
    %353 = vmatpush1.xpose.msra.mxu0 0.0
    %354 = vmatprep.subr.mxu0 0.0
    %355 = vmatpush1.xpose.msra.mxu0 0.0
    %356 = vmatprep.subr.mxu0 0.0
    %357 = vmatpush1.xpose.msra.mxu0 0.0
    %358 = vmatprep.subr.mxu0 0.0
    %359 = vmatpush1.xpose.msra.mxu0 0.0
    %360 = vmatprep.subr.mxu0 0.0
    %361 = vmatpush1.xpose.msra.mxu0 0.0
    %362 = vmatprep.subr.mxu0 0.0
    %363 = vmatpush1.xpose.msra.mxu0 0.0
    %364 = vmatprep.subr.mxu0 0.0
    %365 = vmatpush1.xpose.msra.mxu0 0.0
    %366 = vmatprep.subr.mxu0 0.0
    %367 = vmatpush1.xpose.msra.mxu0 0.0
    %368 = vmatprep.subr.mxu0 0.0
    %369 = vmatpush1.xpose.msra.mxu0 0.0
    %370 = vmatprep.subr.mxu0 0.0
    %371 = vmatpush1.xpose.msra.mxu0 0.0
    %372 = vmatprep.mubr.f32.mxu0 0.0
    %373 = vmatmul.mubr.f32.gmra.mrb[0].mxu0 %v304
    %v374 = vpop.f32.mrb[0].mxu0
    %v375 = vadd.f32 0.0, %v374
    %v376 = vpop.f32.mrb[0].mxu0
    %377 = vdwg.mxu0
    %v378 = vmax.f32 %v297, -1.0
    %v379 = vmax.f32 %v375, -1.0
    %v380 = vmin.f32 %v378, 1.0
    %v381 = vmin.f32 %v379, 1.0
    %v382 = vand.u32 2147483647, %v380
    %v383 = vand.u32 2147483647, %v381
    %v384 = vmul.f32 %v380, %v380
    %v385 = vmul.f32 %v381, %v381
    %v386 = vmul.f32 %v380, %v384
    %v387 = vmul.f32 %v381, %v385
    %v388 = vmul.f32 %v384, 0.0421632
    %v389 = vmul.f32 %v385, 0.0421632
    %v390 = vadd.f32 %v388, 0.024181312
    %v391 = vadd.f32 %v389, 0.024181312
    %v392 = vmul.f32 %v390, %v384
    %v393 = vmul.f32 %v391, %v385
    %v394 = vadd.f32 %v392, 0.045470025
    %v395 = vadd.f32 %v393, 0.045470025
    %v396 = vmul.f32 %v394, %v384
    %v397 = vmul.f32 %v395, %v385
    %v398 = vadd.f32 %v396, 0.074953005
    %v399 = vadd.f32 %v397, 0.074953005
    %v400 = vmul.f32 %v398, %v384
    %v401 = vmul.f32 %v399, %v385
    %v402 = vadd.f32 %v400, 0.16666752
    %v403 = vadd.f32 %v401, 0.16666752
    %v404 = vmul.f32 %v386, %v402
    %v405 = vmul.f32 %v387, %v403
    %v406 = vadd.f32 %v380, %v404
    %v407 = vadd.f32 %v381, %v405
    %v408 = vsub.f32 1.5707964, %v406
    %v409 = vsub.f32 1.5707964, %v407
    %v410 = vsub.f32 1.0, %v382
    %v411 = vsub.f32 1.0, %v383
    %v412 = vmul.f32 %v410, 0.5
    %v413 = vmul.f32 %v411, 0.5
    %v414 = vrsqrt.pop %v412
    %v415 = vmul.f32 %v412, %v414
    %vm416 = vcmp.eq.f32.partialorder %v412, inf
    %v417 = vsel %vm416, %v412, %v415
    %vm418 = vcmp.eq.f32.partialorder %v412, 0.0
    %v419 = vand.u32 %v412, 2147483648
    %v420 = vsel %vm418, %v419, %v417
    %v421 = vrsqrt.pop %v413
    %v422 = vmul.f32 %v413, %v421
    %vm423 = vcmp.eq.f32.partialorder %v413, inf
    %v424 = vsel %vm423, %v413, %v422
    %vm425 = vcmp.eq.f32.partialorder %v413, 0.0
    %v426 = vand.u32 %v413, 2147483648
    %v427 = vsel %vm425, %v426, %v424
    %v428 = vmul.f32 %v420, %v412
    %v429 = vmul.f32 %v427, %v413
    %v430 = vmul.f32 %v412, 0.0421632
    %v431 = vmul.f32 %v413, 0.0421632
    %v432 = vadd.f32 %v430, 0.024181312
    %v433 = vadd.f32 %v431, 0.024181312
    %v434 = vmul.f32 %v432, %v412
    %v435 = vmul.f32 %v433, %v413
    %v436 = vadd.f32 %v434, 0.045470025
    %v437 = vadd.f32 %v435, 0.045470025
    %v438 = vmul.f32 %v436, %v412
    %v439 = vmul.f32 %v437, %v413
    %v440 = vadd.f32 %v438, 0.074953005
    %v441 = vadd.f32 %v439, 0.074953005
    %v442 = vmul.f32 %v440, %v412
    %v443 = vmul.f32 %v441, %v413
    %v444 = vadd.f32 %v442, 0.16666752
    %v445 = vadd.f32 %v443, 0.16666752
    %v446 = vmul.f32 %v428, %v444
    %v447 = vmul.f32 %v429, %v445
    %v448 = vadd.f32 %v420, %v446
    %v449 = vadd.f32 %v427, %v447
    %v450 = vmul.f32 %v448, 2.0
    %v451 = vmul.f32 %v449, 2.0
    %vm452 = vcmp.ge.f32.partialorder %v380, 0.0
    %vm453 = vcmp.ge.f32.partialorder %v381, 0.0
    %v454 = vsub.f32 3.1415927, %v450
    %v455 = vsub.f32 3.1415927, %v451
    %v456 = vsel %vm452, %v450, %v454
    %v457 = vsel %vm453, %v451, %v455
    %vm458 = vcmp.le.f32.partialorder %v382, 0.5
    %vm459 = vcmp.le.f32.partialorder %v383, 0.5
    %v460 = vsel %vm458, %v408, %v456
    %v461 = vsel %vm459, %v409, %v457
    %v462 = vmul.f32 %v460, 0.31830987
    %v463 = vmul.f32 %v461, 0.31830987
    %v464 = vsub.f32 1.0, %v462
    %v465 = vsub.f32 1.0, %v463
    %v466 = vmul.f32 %v464, %v464
    %v467 = vmul.f32 %v465, %v465
    %v468 = vmul.f32 %v466, %v466
    %v469 = vmul.f32 %v467, %v467
    %v470 = vmul.f32 %v468, %v468
    %v471 = vmul.f32 %v469, %v469
    %473 = vrot.lane.b32.xlu0 %v185, 64
    %v474 = vpop.permute.xlu0 %473
    %vm476 = vcmask 64512
    %v478 = vsel %vm476, %v470, 0
    %480 = vmatprep.subr.mxu0 0.0
    %481 = vmatpush1.msra.mxu0 %v474
    %482 = vmatprep.subr.mxu0 0.0
    %483 = vmatpush1.msra.mxu0 0.0
    %484 = vmatprep.subr.mxu0 0.0
    %485 = vmatpush1.msra.mxu0 0.0
    %486 = vmatprep.subr.mxu0 0.0
    %487 = vmatpush1.msra.mxu0 0.0
    %488 = vmatprep.subr.mxu0 0.0
    %489 = vmatpush1.msra.mxu0 0.0
    %490 = vmatprep.subr.mxu0 0.0
    %491 = vmatpush1.msra.mxu0 0.0
    %492 = vmatprep.subr.mxu0 0.0
    %493 = vmatpush1.msra.mxu0 0.0
    %494 = vmatprep.subr.mxu0 0.0
    %495 = vmatpush1.msra.mxu0 0.0
    %496 = vmatprep.subr.mxu0 0.0
    %497 = vmatpush1.msra.mxu0 0.0
    %498 = vmatprep.subr.mxu0 0.0
    %499 = vmatpush1.msra.mxu0 0.0
    %500 = vmatprep.subr.mxu0 0.0
    %501 = vmatpush1.msra.mxu0 0.0
    %502 = vmatprep.subr.mxu0 0.0
    %503 = vmatpush1.msra.mxu0 0.0
    %504 = vmatprep.subr.mxu0 0.0
    %505 = vmatpush1.msra.mxu0 0.0
    %506 = vmatprep.subr.mxu0 0.0
    %507 = vmatpush1.msra.mxu0 0.0
    %508 = vmatprep.subr.mxu0 0.0
    %509 = vmatpush1.msra.mxu0 0.0
    %510 = vmatprep.subr.mxu0 0.0
    %511 = vmatpush1.msra.mxu0 0.0
    %512 = vmatprep.subr.mxu0 0.0
    %513 = vmatpush1.msra.mxu0 0.0
    %514 = vmatprep.subr.mxu0 0.0
    %515 = vmatpush1.msra.mxu0 0.0
    %516 = vmatprep.subr.mxu0 0.0
    %517 = vmatpush1.msra.mxu0 0.0
    %518 = vmatprep.subr.mxu0 0.0
    %519 = vmatpush1.msra.mxu0 0.0
    %520 = vmatprep.subr.mxu0 0.0
    %521 = vmatpush1.msra.mxu0 0.0
    %522 = vmatprep.subr.mxu0 0.0
    %523 = vmatpush1.msra.mxu0 0.0
    %524 = vmatprep.subr.mxu0 0.0
    %525 = vmatpush1.msra.mxu0 0.0
    %526 = vmatprep.subr.mxu0 0.0
    %527 = vmatpush1.msra.mxu0 0.0
    %528 = vmatprep.subr.mxu0 0.0
    %529 = vmatpush1.msra.mxu0 0.0
    %530 = vmatprep.subr.mxu0 0.0
    %531 = vmatpush1.msra.mxu0 0.0
    %532 = vmatprep.subr.mxu0 0.0
    %533 = vmatpush1.msra.mxu0 0.0
    %534 = vmatprep.subr.mxu0 0.0
    %535 = vmatpush1.msra.mxu0 0.0
    %536 = vmatprep.subr.mxu0 0.0
    %537 = vmatpush1.msra.mxu0 0.0
    %538 = vmatprep.subr.mxu0 0.0
    %539 = vmatpush1.msra.mxu0 0.0
    %540 = vmatprep.subr.mxu0 0.0
    %541 = vmatpush1.msra.mxu0 0.0
    %542 = vmatprep.subr.mxu0 0.0
    %543 = vmatpush1.msra.mxu0 0.0
    %544 = vmatprep.mubr.f32.mxu0 0.0
    %545 = vmatmul.mubr.f32.gmra.mrb[0].mxu0 %v478
    %v546 = vpop.f32.mrb[0].mxu0
    %v547 = vadd.f32 0.0, %v546
    %v548 = vpop.f32.mrb[0].mxu0
    %549 = vdwg.mxu0
    %551 = vrot.lane.b32.xlu0 %v186, 64
    %v552 = vpop.permute.xlu0 %551
    %v555 = vsel %vm476, %v471, 0
    %557 = vmatprep.subr.mxu0 0.0
    %558 = vmatpush1.msra.mxu0 %v552
    %559 = vmatprep.subr.mxu0 0.0
    %560 = vmatpush1.msra.mxu0 0.0
    %561 = vmatprep.subr.mxu0 0.0
    %562 = vmatpush1.msra.mxu0 0.0
    %563 = vmatprep.subr.mxu0 0.0
    %564 = vmatpush1.msra.mxu0 0.0
    %565 = vmatprep.subr.mxu0 0.0
    %566 = vmatpush1.msra.mxu0 0.0
    %567 = vmatprep.subr.mxu0 0.0
    %568 = vmatpush1.msra.mxu0 0.0
    %569 = vmatprep.subr.mxu0 0.0
    %570 = vmatpush1.msra.mxu0 0.0
    %571 = vmatprep.subr.mxu0 0.0
    %572 = vmatpush1.msra.mxu0 0.0
    %573 = vmatprep.subr.mxu0 0.0
    %574 = vmatpush1.msra.mxu0 0.0
    %575 = vmatprep.subr.mxu0 0.0
    %576 = vmatpush1.msra.mxu0 0.0
    %577 = vmatprep.subr.mxu0 0.0
    %578 = vmatpush1.msra.mxu0 0.0
    %579 = vmatprep.subr.mxu0 0.0
    %580 = vmatpush1.msra.mxu0 0.0
    %581 = vmatprep.subr.mxu0 0.0
    %582 = vmatpush1.msra.mxu0 0.0
    %583 = vmatprep.subr.mxu0 0.0
    %584 = vmatpush1.msra.mxu0 0.0
    %585 = vmatprep.subr.mxu0 0.0
    %586 = vmatpush1.msra.mxu0 0.0
    %587 = vmatprep.subr.mxu0 0.0
    %588 = vmatpush1.msra.mxu0 0.0
    %589 = vmatprep.subr.mxu0 0.0
    %590 = vmatpush1.msra.mxu0 0.0
    %591 = vmatprep.subr.mxu0 0.0
    %592 = vmatpush1.msra.mxu0 0.0
    %593 = vmatprep.subr.mxu0 0.0
    %594 = vmatpush1.msra.mxu0 0.0
    %595 = vmatprep.subr.mxu0 0.0
    %596 = vmatpush1.msra.mxu0 0.0
    %597 = vmatprep.subr.mxu0 0.0
    %598 = vmatpush1.msra.mxu0 0.0
    %599 = vmatprep.subr.mxu0 0.0
    %600 = vmatpush1.msra.mxu0 0.0
    %601 = vmatprep.subr.mxu0 0.0
    %602 = vmatpush1.msra.mxu0 0.0
    %603 = vmatprep.subr.mxu0 0.0
    %604 = vmatpush1.msra.mxu0 0.0
    %605 = vmatprep.subr.mxu0 0.0
    %606 = vmatpush1.msra.mxu0 0.0
    %607 = vmatprep.subr.mxu0 0.0
    %608 = vmatpush1.msra.mxu0 0.0
    %609 = vmatprep.subr.mxu0 0.0
    %610 = vmatpush1.msra.mxu0 0.0
    %611 = vmatprep.subr.mxu0 0.0
    %612 = vmatpush1.msra.mxu0 0.0
    %613 = vmatprep.subr.mxu0 0.0
    %614 = vmatpush1.msra.mxu0 0.0
    %615 = vmatprep.subr.mxu0 0.0
    %616 = vmatpush1.msra.mxu0 0.0
    %617 = vmatprep.subr.mxu0 0.0
    %618 = vmatpush1.msra.mxu0 0.0
    %619 = vmatprep.subr.mxu0 0.0
    %620 = vmatpush1.msra.mxu0 0.0
    %621 = vmatprep.mubr.f32.mxu0 0.0
    %622 = vmatmul.mubr.f32.gmra.mrb[0].mxu0 %v555
    %v623 = vpop.f32.mrb[0].mxu0
    %v624 = vadd.f32 0.0, %v623
    %v625 = vpop.f32.mrb[0].mxu0
    %626 = vdwg.mxu0
    %627 = vrot.lane.b32.xlu0 %v187, 112
    %v628 = vpop.permute.xlu0 %627
    %629 = vrot.lane.b32.xlu0 %v188, 112
    %v630 = vpop.permute.xlu0 %629
    %v633 = vsel %vm189, %v628, 0.0
    %634 = vadd.xlane.f32.xlu0 %v633
    %v635 = vpop.xlane.xlu0 %634
    %v636 = vsel %vm189, %v630, 0.0
    %637 = vadd.xlane.f32.xlu0 %v636
    %v638 = vpop.xlane.xlu0 %637
    %v639 = vadd.f32 %v635, 1e-24
    %v640 = vadd.f32 %v638, 1e-24
    %v641 = vrsqrt.pop %v639
    %v642 = vrsqrt.pop %v640
    %v643 = vmul.f32 %v185, %v641
    %v644 = vmul.f32 %v186, %v642
    %645 = vrot.lane.b32.xlu0 %v187, 80
    %v646 = vpop.permute.xlu0 %645
    %647 = vrot.lane.b32.xlu0 %v188, 80
    %v648 = vpop.permute.xlu0 %647
    %v651 = vsel %vm189, %v646, 0.0
    %652 = vadd.xlane.f32.xlu0 %v651
    %v653 = vpop.xlane.xlu0 %652
    %v654 = vsel %vm189, %v648, 0.0
    %655 = vadd.xlane.f32.xlu0 %v654
    %v656 = vpop.xlane.xlu0 %655
    %v657 = vadd.f32 %v653, 1e-24
    %v658 = vadd.f32 %v656, 1e-24
    %v659 = vrsqrt.pop %v657
    %v660 = vrsqrt.pop %v658
    %v661 = vmul.f32 %v185, %v659
    %v662 = vmul.f32 %v186, %v660
    %664 = vrot.lane.b32.xlu0 %v643, 112
    %v665 = vpop.permute.xlu0 %664
    %667 = vrot.lane.b32.xlu0 %v661, 80
    %v668 = vpop.permute.xlu0 %667
    %v669 = vsel %vm189, %v665, 0
    %v671 = vsel %vm189, %v668, 0
    %673 = vmatprep.subr.mxu0 0.0
    %674 = vmatpush1.xpose.msra.mxu0 %v671
    %675 = vmatprep.subr.mxu0 0.0
    %676 = vmatpush1.xpose.msra.mxu0 0.0
    %677 = vmatprep.subr.mxu0 0.0
    %678 = vmatpush1.xpose.msra.mxu0 0.0
    %679 = vmatprep.subr.mxu0 0.0
    %680 = vmatpush1.xpose.msra.mxu0 0.0
    %681 = vmatprep.subr.mxu0 0.0
    %682 = vmatpush1.xpose.msra.mxu0 0.0
    %683 = vmatprep.subr.mxu0 0.0
    %684 = vmatpush1.xpose.msra.mxu0 0.0
    %685 = vmatprep.subr.mxu0 0.0
    %686 = vmatpush1.xpose.msra.mxu0 0.0
    %687 = vmatprep.subr.mxu0 0.0
    %688 = vmatpush1.xpose.msra.mxu0 0.0
    %689 = vmatprep.subr.mxu0 0.0
    %690 = vmatpush1.xpose.msra.mxu0 0.0
    %691 = vmatprep.subr.mxu0 0.0
    %692 = vmatpush1.xpose.msra.mxu0 0.0
    %693 = vmatprep.subr.mxu0 0.0
    %694 = vmatpush1.xpose.msra.mxu0 0.0
    %695 = vmatprep.subr.mxu0 0.0
    %696 = vmatpush1.xpose.msra.mxu0 0.0
    %697 = vmatprep.subr.mxu0 0.0
    %698 = vmatpush1.xpose.msra.mxu0 0.0
    %699 = vmatprep.subr.mxu0 0.0
    %700 = vmatpush1.xpose.msra.mxu0 0.0
    %701 = vmatprep.subr.mxu0 0.0
    %702 = vmatpush1.xpose.msra.mxu0 0.0
    %703 = vmatprep.subr.mxu0 0.0
    %704 = vmatpush1.xpose.msra.mxu0 0.0
    %705 = vmatprep.subr.mxu0 0.0
    %706 = vmatpush1.xpose.msra.mxu0 0.0
    %707 = vmatprep.subr.mxu0 0.0
    %708 = vmatpush1.xpose.msra.mxu0 0.0
    %709 = vmatprep.subr.mxu0 0.0
    %710 = vmatpush1.xpose.msra.mxu0 0.0
    %711 = vmatprep.subr.mxu0 0.0
    %712 = vmatpush1.xpose.msra.mxu0 0.0
    %713 = vmatprep.subr.mxu0 0.0
    %714 = vmatpush1.xpose.msra.mxu0 0.0
    %715 = vmatprep.subr.mxu0 0.0
    %716 = vmatpush1.xpose.msra.mxu0 0.0
    %717 = vmatprep.subr.mxu0 0.0
    %718 = vmatpush1.xpose.msra.mxu0 0.0
    %719 = vmatprep.subr.mxu0 0.0
    %720 = vmatpush1.xpose.msra.mxu0 0.0
    %721 = vmatprep.subr.mxu0 0.0
    %722 = vmatpush1.xpose.msra.mxu0 0.0
    %723 = vmatprep.subr.mxu0 0.0
    %724 = vmatpush1.xpose.msra.mxu0 0.0
    %725 = vmatprep.subr.mxu0 0.0
    %726 = vmatpush1.xpose.msra.mxu0 0.0
    %727 = vmatprep.subr.mxu0 0.0
    %728 = vmatpush1.xpose.msra.mxu0 0.0
    %729 = vmatprep.subr.mxu0 0.0
    %730 = vmatpush1.xpose.msra.mxu0 0.0
    %731 = vmatprep.subr.mxu0 0.0
    %732 = vmatpush1.xpose.msra.mxu0 0.0
    %733 = vmatprep.subr.mxu0 0.0
    %734 = vmatpush1.xpose.msra.mxu0 0.0
    %735 = vmatprep.subr.mxu0 0.0
    %736 = vmatpush1.xpose.msra.mxu0 0.0
    %737 = vmatprep.mubr.f32.mxu0 0.0
    %738 = vmatmul.mubr.f32.gmra.mrb[0].mxu0 %v669
    %v739 = vpop.f32.mrb[0].mxu0
    %v740 = vadd.f32 0.0, %v739
    %v741 = vpop.f32.mrb[0].mxu0
    %742 = vdwg.mxu0
    %744 = vrot.lane.b32.xlu0 %v644, 112
    %v745 = vpop.permute.xlu0 %744
    %747 = vrot.lane.b32.xlu0 %v662, 80
    %v748 = vpop.permute.xlu0 %747
    %v749 = vsel %vm189, %v745, 0
    %v751 = vsel %vm189, %v748, 0
    %753 = vmatprep.subr.mxu0 0.0
    %754 = vmatpush1.xpose.msra.mxu0 %v751
    %755 = vmatprep.subr.mxu0 0.0
    %756 = vmatpush1.xpose.msra.mxu0 0.0
    %757 = vmatprep.subr.mxu0 0.0
    %758 = vmatpush1.xpose.msra.mxu0 0.0
    %759 = vmatprep.subr.mxu0 0.0
    %760 = vmatpush1.xpose.msra.mxu0 0.0
    %761 = vmatprep.subr.mxu0 0.0
    %762 = vmatpush1.xpose.msra.mxu0 0.0
    %763 = vmatprep.subr.mxu0 0.0
    %764 = vmatpush1.xpose.msra.mxu0 0.0
    %765 = vmatprep.subr.mxu0 0.0
    %766 = vmatpush1.xpose.msra.mxu0 0.0
    %767 = vmatprep.subr.mxu0 0.0
    %768 = vmatpush1.xpose.msra.mxu0 0.0
    %769 = vmatprep.subr.mxu0 0.0
    %770 = vmatpush1.xpose.msra.mxu0 0.0
    %771 = vmatprep.subr.mxu0 0.0
    %772 = vmatpush1.xpose.msra.mxu0 0.0
    %773 = vmatprep.subr.mxu0 0.0
    %774 = vmatpush1.xpose.msra.mxu0 0.0
    %775 = vmatprep.subr.mxu0 0.0
    %776 = vmatpush1.xpose.msra.mxu0 0.0
    %777 = vmatprep.subr.mxu0 0.0
    %778 = vmatpush1.xpose.msra.mxu0 0.0
    %779 = vmatprep.subr.mxu0 0.0
    %780 = vmatpush1.xpose.msra.mxu0 0.0
    %781 = vmatprep.subr.mxu0 0.0
    %782 = vmatpush1.xpose.msra.mxu0 0.0
    %783 = vmatprep.subr.mxu0 0.0
    %784 = vmatpush1.xpose.msra.mxu0 0.0
    %785 = vmatprep.subr.mxu0 0.0
    %786 = vmatpush1.xpose.msra.mxu0 0.0
    %787 = vmatprep.subr.mxu0 0.0
    %788 = vmatpush1.xpose.msra.mxu0 0.0
    %789 = vmatprep.subr.mxu0 0.0
    %790 = vmatpush1.xpose.msra.mxu0 0.0
    %791 = vmatprep.subr.mxu0 0.0
    %792 = vmatpush1.xpose.msra.mxu0 0.0
    %793 = vmatprep.subr.mxu0 0.0
    %794 = vmatpush1.xpose.msra.mxu0 0.0
    %795 = vmatprep.subr.mxu0 0.0
    %796 = vmatpush1.xpose.msra.mxu0 0.0
    %797 = vmatprep.subr.mxu0 0.0
    %798 = vmatpush1.xpose.msra.mxu0 0.0
    %799 = vmatprep.subr.mxu0 0.0
    %800 = vmatpush1.xpose.msra.mxu0 0.0
    %801 = vmatprep.subr.mxu0 0.0
    %802 = vmatpush1.xpose.msra.mxu0 0.0
    %803 = vmatprep.subr.mxu0 0.0
    %804 = vmatpush1.xpose.msra.mxu0 0.0
    %805 = vmatprep.subr.mxu0 0.0
    %806 = vmatpush1.xpose.msra.mxu0 0.0
    %807 = vmatprep.subr.mxu0 0.0
    %808 = vmatpush1.xpose.msra.mxu0 0.0
    %809 = vmatprep.subr.mxu0 0.0
    %810 = vmatpush1.xpose.msra.mxu0 0.0
    %811 = vmatprep.subr.mxu0 0.0
    %812 = vmatpush1.xpose.msra.mxu0 0.0
    %813 = vmatprep.subr.mxu0 0.0
    %814 = vmatpush1.xpose.msra.mxu0 0.0
    %815 = vmatprep.subr.mxu0 0.0
    %816 = vmatpush1.xpose.msra.mxu0 0.0
    %817 = vmatprep.mubr.f32.mxu0 0.0
    %818 = vmatmul.mubr.f32.gmra.mrb[0].mxu0 %v749
    %v819 = vpop.f32.mrb[0].mxu0
    %v820 = vadd.f32 0.0, %v819
    %v821 = vpop.f32.mrb[0].mxu0
    %822 = vdwg.mxu0
    %v823 = vmax.f32 %v740, -1.0
    %v824 = vmax.f32 %v820, -1.0
    %v825 = vmin.f32 %v823, 1.0
    %v826 = vmin.f32 %v824, 1.0
    %v827 = vand.u32 2147483647, %v825
    %v828 = vand.u32 2147483647, %v826
    %v829 = vmul.f32 %v825, %v825
    %v830 = vmul.f32 %v826, %v826
    %v831 = vmul.f32 %v825, %v829
    %v832 = vmul.f32 %v826, %v830
    %v833 = vmul.f32 %v829, 0.0421632
    %v834 = vmul.f32 %v830, 0.0421632
    %v835 = vadd.f32 %v833, 0.024181312
    %v836 = vadd.f32 %v834, 0.024181312
    %v837 = vmul.f32 %v835, %v829
    %v838 = vmul.f32 %v836, %v830
    %v839 = vadd.f32 %v837, 0.045470025
    %v840 = vadd.f32 %v838, 0.045470025
    %v841 = vmul.f32 %v839, %v829
    %v842 = vmul.f32 %v840, %v830
    %v843 = vadd.f32 %v841, 0.074953005
    %v844 = vadd.f32 %v842, 0.074953005
    %v845 = vmul.f32 %v843, %v829
    %v846 = vmul.f32 %v844, %v830
    %v847 = vadd.f32 %v845, 0.16666752
    %v848 = vadd.f32 %v846, 0.16666752
    %v849 = vmul.f32 %v831, %v847
    %v850 = vmul.f32 %v832, %v848
    %v851 = vadd.f32 %v825, %v849
    %v852 = vadd.f32 %v826, %v850
    %v853 = vsub.f32 1.5707964, %v851
    %v854 = vsub.f32 1.5707964, %v852
    %v855 = vsub.f32 1.0, %v827
    %v856 = vsub.f32 1.0, %v828
    %v857 = vmul.f32 %v855, 0.5
    %v858 = vmul.f32 %v856, 0.5
    %v859 = vrsqrt.pop %v857
    %v860 = vmul.f32 %v857, %v859
    %vm861 = vcmp.eq.f32.partialorder %v857, inf
    %v862 = vsel %vm861, %v857, %v860
    %vm863 = vcmp.eq.f32.partialorder %v857, 0.0
    %v864 = vand.u32 %v857, 2147483648
    %v865 = vsel %vm863, %v864, %v862
    %v866 = vrsqrt.pop %v858
    %v867 = vmul.f32 %v858, %v866
    %vm868 = vcmp.eq.f32.partialorder %v858, inf
    %v869 = vsel %vm868, %v858, %v867
    %vm870 = vcmp.eq.f32.partialorder %v858, 0.0
    %v871 = vand.u32 %v858, 2147483648
    %v872 = vsel %vm870, %v871, %v869
    %v873 = vmul.f32 %v865, %v857
    %v874 = vmul.f32 %v872, %v858
    %v875 = vmul.f32 %v857, 0.0421632
    %v876 = vmul.f32 %v858, 0.0421632
    %v877 = vadd.f32 %v875, 0.024181312
    %v878 = vadd.f32 %v876, 0.024181312
    %v879 = vmul.f32 %v877, %v857
    %v880 = vmul.f32 %v878, %v858
    %v881 = vadd.f32 %v879, 0.045470025
    %v882 = vadd.f32 %v880, 0.045470025
    %v883 = vmul.f32 %v881, %v857
    %v884 = vmul.f32 %v882, %v858
    %v885 = vadd.f32 %v883, 0.074953005
    %v886 = vadd.f32 %v884, 0.074953005
    %v887 = vmul.f32 %v885, %v857
    %v888 = vmul.f32 %v886, %v858
    %v889 = vadd.f32 %v887, 0.16666752
    %v890 = vadd.f32 %v888, 0.16666752
    %v891 = vmul.f32 %v873, %v889
    %v892 = vmul.f32 %v874, %v890
    %v893 = vadd.f32 %v865, %v891
    %v894 = vadd.f32 %v872, %v892
    %v895 = vmul.f32 %v893, 2.0
    %v896 = vmul.f32 %v894, 2.0
    %vm897 = vcmp.ge.f32.partialorder %v825, 0.0
    %vm898 = vcmp.ge.f32.partialorder %v826, 0.0
    %v899 = vsub.f32 3.1415927, %v895
    %v900 = vsub.f32 3.1415927, %v896
    %v901 = vsel %vm897, %v895, %v899
    %v902 = vsel %vm898, %v896, %v900
    %vm903 = vcmp.le.f32.partialorder %v827, 0.5
    %vm904 = vcmp.le.f32.partialorder %v828, 0.5
    %v905 = vsel %vm903, %v853, %v901
    %v906 = vsel %vm904, %v854, %v902
    %v907 = vmul.f32 %v905, 0.31830987
    %v908 = vmul.f32 %v906, 0.31830987
    %v909 = vsub.f32 1.0, %v907
    %v910 = vsub.f32 1.0, %v908
    %v911 = vmul.f32 %v909, %v909
    %v912 = vmul.f32 %v910, %v910
    %v913 = vmul.f32 %v911, %v911
    %v914 = vmul.f32 %v912, %v912
    %v915 = vmul.f32 %v913, %v913
    %v916 = vmul.f32 %v914, %v914
    %917 = vrot.lane.b32.xlu0 %v185, 48
    %v918 = vpop.permute.xlu0 %917
    %v921 = vsel %vm476, %v915, 0
    %923 = vmatprep.subr.mxu0 0.0
    %924 = vmatpush1.msra.mxu0 %v918
    %925 = vmatprep.subr.mxu0 0.0
    %926 = vmatpush1.msra.mxu0 0.0
    %927 = vmatprep.subr.mxu0 0.0
    %928 = vmatpush1.msra.mxu0 0.0
    %929 = vmatprep.subr.mxu0 0.0
    %930 = vmatpush1.msra.mxu0 0.0
    %931 = vmatprep.subr.mxu0 0.0
    %932 = vmatpush1.msra.mxu0 0.0
    %933 = vmatprep.subr.mxu0 0.0
    %934 = vmatpush1.msra.mxu0 0.0
    %935 = vmatprep.subr.mxu0 0.0
    %936 = vmatpush1.msra.mxu0 0.0
    %937 = vmatprep.subr.mxu0 0.0
    %938 = vmatpush1.msra.mxu0 0.0
    %939 = vmatprep.subr.mxu0 0.0
    %940 = vmatpush1.msra.mxu0 0.0
    %941 = vmatprep.subr.mxu0 0.0
    %942 = vmatpush1.msra.mxu0 0.0
    %943 = vmatprep.subr.mxu0 0.0
    %944 = vmatpush1.msra.mxu0 0.0
    %945 = vmatprep.subr.mxu0 0.0
    %946 = vmatpush1.msra.mxu0 0.0
    %947 = vmatprep.subr.mxu0 0.0
    %948 = vmatpush1.msra.mxu0 0.0
    %949 = vmatprep.subr.mxu0 0.0
    %950 = vmatpush1.msra.mxu0 0.0
    %951 = vmatprep.subr.mxu0 0.0
    %952 = vmatpush1.msra.mxu0 0.0
    %953 = vmatprep.subr.mxu0 0.0
    %954 = vmatpush1.msra.mxu0 0.0
    %955 = vmatprep.subr.mxu0 0.0
    %956 = vmatpush1.msra.mxu0 0.0
    %957 = vmatprep.subr.mxu0 0.0
    %958 = vmatpush1.msra.mxu0 0.0
    %959 = vmatprep.subr.mxu0 0.0
    %960 = vmatpush1.msra.mxu0 0.0
    %961 = vmatprep.subr.mxu0 0.0
    %962 = vmatpush1.msra.mxu0 0.0
    %963 = vmatprep.subr.mxu0 0.0
    %964 = vmatpush1.msra.mxu0 0.0
    %965 = vmatprep.subr.mxu0 0.0
    %966 = vmatpush1.msra.mxu0 0.0
    %967 = vmatprep.subr.mxu0 0.0
    %968 = vmatpush1.msra.mxu0 0.0
    %969 = vmatprep.subr.mxu0 0.0
    %970 = vmatpush1.msra.mxu0 0.0
    %971 = vmatprep.subr.mxu0 0.0
    %972 = vmatpush1.msra.mxu0 0.0
    %973 = vmatprep.subr.mxu0 0.0
    %974 = vmatpush1.msra.mxu0 0.0
    %975 = vmatprep.subr.mxu0 0.0
    %976 = vmatpush1.msra.mxu0 0.0
    %977 = vmatprep.subr.mxu0 0.0
    %978 = vmatpush1.msra.mxu0 0.0
    %979 = vmatprep.subr.mxu0 0.0
    %980 = vmatpush1.msra.mxu0 0.0
    %981 = vmatprep.subr.mxu0 0.0
    %982 = vmatpush1.msra.mxu0 0.0
    %983 = vmatprep.subr.mxu0 0.0
    %984 = vmatpush1.msra.mxu0 0.0
    %985 = vmatprep.subr.mxu0 0.0
    %986 = vmatpush1.msra.mxu0 0.0
    %987 = vmatprep.mubr.f32.mxu0 0.0
    %988 = vmatmul.mubr.f32.gmra.mrb[0].mxu0 %v921
    %v989 = vpop.f32.mrb[0].mxu0
    %v990 = vadd.f32 0.0, %v989
    %v991 = vpop.f32.mrb[0].mxu0
    %992 = vdwg.mxu0
    %993 = vrot.lane.b32.xlu0 %v186, 48
    %v994 = vpop.permute.xlu0 %993
    %v997 = vsel %vm476, %v916, 0
    %999 = vmatprep.subr.mxu0 0.0
    %1000 = vmatpush1.msra.mxu0 %v994
    %1001 = vmatprep.subr.mxu0 0.0
    %1002 = vmatpush1.msra.mxu0 0.0
    %1003 = vmatprep.subr.mxu0 0.0
    %1004 = vmatpush1.msra.mxu0 0.0
    %1005 = vmatprep.subr.mxu0 0.0
    %1006 = vmatpush1.msra.mxu0 0.0
    %1007 = vmatprep.subr.mxu0 0.0
    %1008 = vmatpush1.msra.mxu0 0.0
    %1009 = vmatprep.subr.mxu0 0.0
    %1010 = vmatpush1.msra.mxu0 0.0
    %1011 = vmatprep.subr.mxu0 0.0
    %1012 = vmatpush1.msra.mxu0 0.0
    %1013 = vmatprep.subr.mxu0 0.0
    %1014 = vmatpush1.msra.mxu0 0.0
    %1015 = vmatprep.subr.mxu0 0.0
    %1016 = vmatpush1.msra.mxu0 0.0
    %1017 = vmatprep.subr.mxu0 0.0
    %1018 = vmatpush1.msra.mxu0 0.0
    %1019 = vmatprep.subr.mxu0 0.0
    %1020 = vmatpush1.msra.mxu0 0.0
    %1021 = vmatprep.subr.mxu0 0.0
    %1022 = vmatpush1.msra.mxu0 0.0
    %1023 = vmatprep.subr.mxu0 0.0
    %1024 = vmatpush1.msra.mxu0 0.0
    %1025 = vmatprep.subr.mxu0 0.0
    %1026 = vmatpush1.msra.mxu0 0.0
    %1027 = vmatprep.subr.mxu0 0.0
    %1028 = vmatpush1.msra.mxu0 0.0
    %1029 = vmatprep.subr.mxu0 0.0
    %1030 = vmatpush1.msra.mxu0 0.0
    %1031 = vmatprep.subr.mxu0 0.0
    %1032 = vmatpush1.msra.mxu0 0.0
    %1033 = vmatprep.subr.mxu0 0.0
    %1034 = vmatpush1.msra.mxu0 0.0
    %1035 = vmatprep.subr.mxu0 0.0
    %1036 = vmatpush1.msra.mxu0 0.0
    %1037 = vmatprep.subr.mxu0 0.0
    %1038 = vmatpush1.msra.mxu0 0.0
    %1039 = vmatprep.subr.mxu0 0.0
    %1040 = vmatpush1.msra.mxu0 0.0
    %1041 = vmatprep.subr.mxu0 0.0
    %1042 = vmatpush1.msra.mxu0 0.0
    %1043 = vmatprep.subr.mxu0 0.0
    %1044 = vmatpush1.msra.mxu0 0.0
    %1045 = vmatprep.subr.mxu0 0.0
    %1046 = vmatpush1.msra.mxu0 0.0
    %1047 = vmatprep.subr.mxu0 0.0
    %1048 = vmatpush1.msra.mxu0 0.0
    %1049 = vmatprep.subr.mxu0 0.0
    %1050 = vmatpush1.msra.mxu0 0.0
    %1051 = vmatprep.subr.mxu0 0.0
    %1052 = vmatpush1.msra.mxu0 0.0
    %1053 = vmatprep.subr.mxu0 0.0
    %1054 = vmatpush1.msra.mxu0 0.0
    %1055 = vmatprep.subr.mxu0 0.0
    %1056 = vmatpush1.msra.mxu0 0.0
    %1057 = vmatprep.subr.mxu0 0.0
    %1058 = vmatpush1.msra.mxu0 0.0
    %1059 = vmatprep.subr.mxu0 0.0
    %1060 = vmatpush1.msra.mxu0 0.0
    %1061 = vmatprep.subr.mxu0 0.0
    %1062 = vmatpush1.msra.mxu0 0.0
    %1063 = vmatprep.mubr.f32.mxu0 0.0
    %1064 = vmatmul.mubr.f32.gmra.mrb[0].mxu0 %v997
    %v1065 = vpop.f32.mrb[0].mxu0
    %v1066 = vadd.f32 0.0, %v1065
    %v1067 = vpop.f32.mrb[0].mxu0
    %1068 = vdwg.mxu0
    %1071 = vrot.lane.b32.xlu0 %v990, 16
    %v1072 = vpop.permute.xlu0 %1071
    %1073 = vrot.lane.b32.xlu0 %v1066, 16
    %v1074 = vpop.permute.xlu0 %1073
    %v1077 = vsel %vm189, %v547, %v1072
    %v1078 = vsel %vm189, %v624, %v1074
    %v1079 = vld [vmem:[%s3] sm:$0xff]
    %v1080 = vld [vmem:[%s3 + $0x8] sm:$0xff]
    %v1081 = vld [vmem:[%s3 + $0x10] sm:$0xff]
    %v1082 = vld [vmem:[%s3 + $0x18] sm:$0xff]
    %v1083 = vlaneseq
    %v1084 = vshrl.u32 %v1083, 7
    %v1085 = vsub.s32 3, %v1084
    %v1086 = vrot.slane %v45, %v1085
    %v1088 = vsel %vm46, %v1077, 0
    %v1091 = vsel %vm46, %v1078, 0
    %1093 = vmatprep.subr.mxu0 0.0
    %1094 = vmatpush1.msra.mxu0 %v1079
    %1095 = vmatprep.subr.mxu0 0.0
    %1096 = vmatpush1.msra.mxu0 %v1080
    %1097 = vmatprep.subr.mxu0 0.0
    %1098 = vmatpush1.msra.mxu0 %v1081
    %1099 = vmatprep.subr.mxu0 0.0
    %1100 = vmatpush1.msra.mxu0 %v1082
    %1101 = vmatprep.subr.mxu0 0.0
    %1102 = vmatpush1.msra.mxu0 0.0
    %1103 = vmatprep.subr.mxu0 0.0
    %1104 = vmatpush1.msra.mxu0 0.0
    %1105 = vmatprep.subr.mxu0 0.0
    %1106 = vmatpush1.msra.mxu0 0.0
    %1107 = vmatprep.subr.mxu0 0.0
    %1108 = vmatpush1.msra.mxu0 0.0
    %1109 = vmatprep.subr.mxu0 0.0
    %1110 = vmatpush1.msra.mxu0 0.0
    %1111 = vmatprep.subr.mxu0 0.0
    %1112 = vmatpush1.msra.mxu0 0.0
    %1113 = vmatprep.subr.mxu0 0.0
    %1114 = vmatpush1.msra.mxu0 0.0
    %1115 = vmatprep.subr.mxu0 0.0
    %1116 = vmatpush1.msra.mxu0 0.0
    %1117 = vmatprep.subr.mxu0 0.0
    %1118 = vmatpush1.msra.mxu0 0.0
    %1119 = vmatprep.subr.mxu0 0.0
    %1120 = vmatpush1.msra.mxu0 0.0
    %1121 = vmatprep.subr.mxu0 0.0
    %1122 = vmatpush1.msra.mxu0 0.0
    %1123 = vmatprep.subr.mxu0 0.0
    %1124 = vmatpush1.msra.mxu0 0.0
    %1125 = vmatprep.subr.mxu0 0.0
    %1126 = vmatpush1.msra.mxu0 0.0
    %1127 = vmatprep.subr.mxu0 0.0
    %1128 = vmatpush1.msra.mxu0 0.0
    %1129 = vmatprep.subr.mxu0 0.0
    %1130 = vmatpush1.msra.mxu0 0.0
    %1131 = vmatprep.subr.mxu0 0.0
    %1132 = vmatpush1.msra.mxu0 0.0
    %1133 = vmatprep.subr.mxu0 0.0
    %1134 = vmatpush1.msra.mxu0 0.0
    %1135 = vmatprep.subr.mxu0 0.0
    %1136 = vmatpush1.msra.mxu0 0.0
    %1137 = vmatprep.subr.mxu0 0.0
    %1138 = vmatpush1.msra.mxu0 0.0
    %1139 = vmatprep.subr.mxu0 0.0
    %1140 = vmatpush1.msra.mxu0 0.0
    %1141 = vmatprep.subr.mxu0 0.0
    %1142 = vmatpush1.msra.mxu0 0.0
    %1143 = vmatprep.subr.mxu0 0.0
    %1144 = vmatpush1.msra.mxu0 0.0
    %1145 = vmatprep.subr.mxu0 0.0
    %1146 = vmatpush1.msra.mxu0 0.0
    %1147 = vmatprep.subr.mxu0 0.0
    %1148 = vmatpush1.msra.mxu0 0.0
    %1149 = vmatprep.subr.mxu0 0.0
    %1150 = vmatpush1.msra.mxu0 0.0
    %1151 = vmatprep.subr.mxu0 0.0
    %1152 = vmatpush1.msra.mxu0 0.0
    %1153 = vmatprep.subr.mxu0 0.0
    %1154 = vmatpush1.msra.mxu0 0.0
    %1155 = vmatprep.subr.mxu0 0.0
    %1156 = vmatpush1.msra.mxu0 0.0
    %1157 = vmatprep.mubr.f32.mxu0 0.0
    %1158 = vmatmul.mubr.f32.gmra.mrb[0].mxu0 %v1088
    %v1159 = vpop.f32.mrb[0].mxu0
    %v1160 = vadd.f32 %v1086, %v1159
    %v1161 = vpop.f32.mrb[0].mxu0
    %1162 = vmatprep.mubr.f32.mxu0 0.0
    %1163 = vmatmul.mubr.f32.gmra.mrb[0].mxu0 %v1091
    %v1164 = vpop.f32.mrb[0].mxu0
    %v1165 = vadd.f32 %v1086, %v1164
    %v1166 = vpop.f32.mrb[0].mxu0
    %1167 = vdwg.mxu0
    %v1168 = vadd.f32 %v1160, %v41
    %v1169 = vadd.f32 %v1165, %v42
    %v1170 = vsel %vm46, %v1168, 0.0
    %1171 = vadd.xlane.f32.xlu0 %v1170
    %v1172 = vpop.xlane.xlu0 %1171
    %v1173 = vsel %vm46, %v1169, 0.0
    %1174 = vadd.xlane.f32.xlu0 %v1173
    %v1175 = vpop.xlane.xlu0 %1174
    %v1176 = vmul.f32 %v1172, %v53
    %v1177 = vmul.f32 %v1175, %v53
    %v1178 = vsub.f32 %v1168, %v1176
    %v1179 = vsub.f32 %v1169, %v1177
    %v1180 = vmul.f32 %v1178, %v1178
    %v1181 = vmul.f32 %v1179, %v1179
    %v1182 = vsel %vm46, %v1180, 0.0
    %1183 = vadd.xlane.f32.xlu0 %v1182
    %v1184 = vpop.xlane.xlu0 %1183
    %v1185 = vsel %vm46, %v1181, 0.0
    %1186 = vadd.xlane.f32.xlu0 %v1185
    %v1187 = vpop.xlane.xlu0 %1186
    %v1188 = vmul.f32 %v1184, %v53
    %v1189 = vmul.f32 %v1187, %v53
    %v1190 = vadd.f32 %v1188, 1e-05
    %v1191 = vadd.f32 %v1189, 1e-05
    %v1192 = vrsqrt.pop %v1190
    %v1193 = vrsqrt.pop %v1191
    %v1194 = vmul.f32 %v1178, %v1192
    %v1195 = vmul.f32 %v1179, %v1193
    %v1196 = vlaneseq
    %v1197 = vshrl.u32 %v1196, 7
    %v1198 = vsub.s32 4, %v1197
    %v1199 = vrot.slane %v45, %v1198
    %v1200 = vmul.f32 %v1194, %v1199
    %v1201 = vmul.f32 %v1195, %v1199
    %v1202 = vlaneseq
    %v1203 = vshrl.u32 %v1202, 7
    %v1204 = vsub.s32 5, %v1203
    %v1205 = vrot.slane %v45, %v1204
    %v1206 = vadd.f32 %v1200, %v1205
    %v1207 = vadd.f32 %v1201, %v1205
    %v1208 = vld [vmem:[%s4] sm:$0xff]
    %v1209 = vld [vmem:[%s4 + $0x8] sm:$0xff]
    %v1210 = vld [vmem:[%s4 + $0x10] sm:$0xff]
    %v1211 = vld [vmem:[%s4 + $0x18] sm:$0xff]
    %v1212 = vlaneseq
    %v1213 = vshrl.u32 %v1212, 7
    %v1214 = vsub.s32 6, %v1213
    %v1215 = vrot.slane %v45, %v1214
    %v1217 = vsel %vm46, %v1206, 0
    %v1220 = vsel %vm46, %v1207, 0
    %1222 = vmatprep.subr.mxu0 0.0
    %1223 = vmatpush1.msra.mxu0 %v1208
    %1224 = vmatprep.subr.mxu0 0.0
    %1225 = vmatpush1.msra.mxu0 %v1209
    %1226 = vmatprep.subr.mxu0 0.0
    %1227 = vmatpush1.msra.mxu0 %v1210
    %1228 = vmatprep.subr.mxu0 0.0
    %1229 = vmatpush1.msra.mxu0 %v1211
    %1230 = vmatprep.subr.mxu0 0.0
    %1231 = vmatpush1.msra.mxu0 0.0
    %1232 = vmatprep.subr.mxu0 0.0
    %1233 = vmatpush1.msra.mxu0 0.0
    %1234 = vmatprep.subr.mxu0 0.0
    %1235 = vmatpush1.msra.mxu0 0.0
    %1236 = vmatprep.subr.mxu0 0.0
    %1237 = vmatpush1.msra.mxu0 0.0
    %1238 = vmatprep.subr.mxu0 0.0
    %1239 = vmatpush1.msra.mxu0 0.0
    %1240 = vmatprep.subr.mxu0 0.0
    %1241 = vmatpush1.msra.mxu0 0.0
    %1242 = vmatprep.subr.mxu0 0.0
    %1243 = vmatpush1.msra.mxu0 0.0
    %1244 = vmatprep.subr.mxu0 0.0
    %1245 = vmatpush1.msra.mxu0 0.0
    %1246 = vmatprep.subr.mxu0 0.0
    %1247 = vmatpush1.msra.mxu0 0.0
    %1248 = vmatprep.subr.mxu0 0.0
    %1249 = vmatpush1.msra.mxu0 0.0
    %1250 = vmatprep.subr.mxu0 0.0
    %1251 = vmatpush1.msra.mxu0 0.0
    %1252 = vmatprep.subr.mxu0 0.0
    %1253 = vmatpush1.msra.mxu0 0.0
    %1254 = vmatprep.subr.mxu0 0.0
    %1255 = vmatpush1.msra.mxu0 0.0
    %1256 = vmatprep.subr.mxu0 0.0
    %1257 = vmatpush1.msra.mxu0 0.0
    %1258 = vmatprep.subr.mxu0 0.0
    %1259 = vmatpush1.msra.mxu0 0.0
    %1260 = vmatprep.subr.mxu0 0.0
    %1261 = vmatpush1.msra.mxu0 0.0
    %1262 = vmatprep.subr.mxu0 0.0
    %1263 = vmatpush1.msra.mxu0 0.0
    %1264 = vmatprep.subr.mxu0 0.0
    %1265 = vmatpush1.msra.mxu0 0.0
    %1266 = vmatprep.subr.mxu0 0.0
    %1267 = vmatpush1.msra.mxu0 0.0
    %1268 = vmatprep.subr.mxu0 0.0
    %1269 = vmatpush1.msra.mxu0 0.0
    %1270 = vmatprep.subr.mxu0 0.0
    %1271 = vmatpush1.msra.mxu0 0.0
    %1272 = vmatprep.subr.mxu0 0.0
    %1273 = vmatpush1.msra.mxu0 0.0
    %1274 = vmatprep.subr.mxu0 0.0
    %1275 = vmatpush1.msra.mxu0 0.0
    %1276 = vmatprep.subr.mxu0 0.0
    %1277 = vmatpush1.msra.mxu0 0.0
    %1278 = vmatprep.subr.mxu0 0.0
    %1279 = vmatpush1.msra.mxu0 0.0
    %1280 = vmatprep.subr.mxu0 0.0
    %1281 = vmatpush1.msra.mxu0 0.0
    %1282 = vmatprep.subr.mxu0 0.0
    %1283 = vmatpush1.msra.mxu0 0.0
    %1284 = vmatprep.subr.mxu0 0.0
    %1285 = vmatpush1.msra.mxu0 0.0
    %1286 = vmatprep.mubr.f32.mxu0 0.0
    %1287 = vmatmul.mubr.f32.gmra.mrb[0].mxu0 %v1217
    %v1288 = vpop.f32.mrb[0].mxu0
    %v1289 = vadd.f32 %v1215, %v1288
    %v1290 = vpop.f32.mrb[0].mxu0
    %1291 = vmatprep.mubr.f32.mxu0 0.0
    %1292 = vmatmul.mubr.f32.gmra.mrb[0].mxu0 %v1220
    %v1293 = vpop.f32.mrb[0].mxu0
    %v1294 = vadd.f32 %v1215, %v1293
    %v1295 = vpop.f32.mrb[0].mxu0
    %1296 = vdwg.mxu0
    %v1297 = vmul.f32 %v1289, 0.5
    %v1298 = vmul.f32 %v1294, 0.5
    %v1299 = vmul.f32 %v1289, 0.70710677
    %v1300 = vmul.f32 %v1294, 0.70710677
    %v1301 = vand.u32 2147483647, %v1299
    %v1302 = vand.u32 2147483647, %v1300
    %v1303 = vmul.f32 %v1301, 0.3275911
    %v1304 = vmul.f32 %v1302, 0.3275911
    %v1305 = vadd.f32 %v1303, 1.0
    %v1306 = vadd.f32 %v1304, 1.0
    %v1307 = vrcp.pop %v1305
    %v1308 = vmul.f32 1.0, %v1307
    %v1309 = vrcp.pop %v1306
    %v1310 = vmul.f32 1.0, %v1309
    %v1311 = vmul.f32 %v1308, 1.0614054
    %v1312 = vmul.f32 %v1310, 1.0614054
    %v1313 = vadd.f32 %v1311, -1.4531521
    %v1314 = vadd.f32 %v1312, -1.4531521
    %v1315 = vmul.f32 %v1313, %v1308
    %v1316 = vmul.f32 %v1314, %v1310
    %v1317 = vadd.f32 %v1315, 1.4214138
    %v1318 = vadd.f32 %v1316, 1.4214138
    %v1319 = vmul.f32 %v1317, %v1308
    %v1320 = vmul.f32 %v1318, %v1310
    %v1321 = vadd.f32 %v1319, -0.28449672
    %v1322 = vadd.f32 %v1320, -0.28449672
    %v1323 = vmul.f32 %v1321, %v1308
    %v1324 = vmul.f32 %v1322, %v1310
    %v1325 = vadd.f32 %v1323, 0.2548296
    %v1326 = vadd.f32 %v1324, 0.2548296
    %v1327 = vmul.f32 %v1325, %v1308
    %v1328 = vmul.f32 %v1326, %v1310
    %v1329 = vsub.f32 0.0, %v1301
    %v1330 = vsub.f32 0.0, %v1302
    %v1331 = vmul.f32 %v1329, %v1301
    %v1332 = vmul.f32 %v1330, %v1302
    %v1333 = vmul.f32 %v1331, 1.442695
    %v1334 = vpow.pop %v1333
    %v1335 = vmul.f32 %v1332, 1.442695
    %v1336 = vpow.pop %v1335
    %v1337 = vmul.f32 %v1327, %v1334
    %v1338 = vmul.f32 %v1328, %v1336
    %v1339 = vsub.f32 1.0, %v1337
    %v1340 = vsub.f32 1.0, %v1338
    %vm1341 = vcmp.ge.f32.partialorder %v1299, 0.0
    %vm1342 = vcmp.ge.f32.partialorder %v1300, 0.0
    %v1343 = vsub.f32 0.0, %v1339
    %v1344 = vsub.f32 0.0, %v1340
    %v1345 = vsel %vm1341, %v1339, %v1343
    %v1346 = vsel %vm1342, %v1340, %v1344
    %v1347 = vadd.f32 %v1345, 1.0
    %v1348 = vadd.f32 %v1346, 1.0
    %v1349 = vmul.f32 %v1297, %v1347
    %v1350 = vmul.f32 %v1298, %v1348
    %v1351 = vld [vmem:[%s5] sm:$0xff]
    %v1352 = vld [vmem:[%s5 + $0x8] sm:$0xff]
    %v1353 = vld [vmem:[%s5 + $0x10] sm:$0xff]
    %v1354 = vld [vmem:[%s5 + $0x18] sm:$0xff]
    %v1355 = vld [vmem:[%s5 + $0x20] sm:$0xff]
    %v1356 = vld [vmem:[%s5 + $0x28] sm:$0xff]
    %v1357 = vld [vmem:[%s5 + $0x30] sm:$0xff]
    %v1358 = vld [vmem:[%s5 + $0x38] sm:$0xff]
    %v1359 = vlaneseq
    %v1360 = vshrl.u32 %v1359, 7
    %v1361 = vsub.s32 7, %v1360
    %v1362 = vrot.slane %v45, %v1361
    %vm1363 = vcmask 523264
    %v1365 = vsel %vm1363, %v1349, 0
    %v1368 = vsel %vm1363, %v1350, 0
    %1370 = vmatprep.subr.mxu0 0.0
    %1371 = vmatpush1.msra.mxu0 %v1351
    %1372 = vmatprep.subr.mxu0 0.0
    %1373 = vmatpush1.msra.mxu0 %v1352
    %1374 = vmatprep.subr.mxu0 0.0
    %1375 = vmatpush1.msra.mxu0 %v1353
    %1376 = vmatprep.subr.mxu0 0.0
    %1377 = vmatpush1.msra.mxu0 %v1354
    %1378 = vmatprep.subr.mxu0 0.0
    %1379 = vmatpush1.msra.mxu0 %v1355
    %1380 = vmatprep.subr.mxu0 0.0
    %1381 = vmatpush1.msra.mxu0 %v1356
    %1382 = vmatprep.subr.mxu0 0.0
    %1383 = vmatpush1.msra.mxu0 %v1357
    %1384 = vmatprep.subr.mxu0 0.0
    %1385 = vmatpush1.msra.mxu0 %v1358
    %1386 = vmatprep.subr.mxu0 0.0
    %1387 = vmatpush1.msra.mxu0 0.0
    %1388 = vmatprep.subr.mxu0 0.0
    %1389 = vmatpush1.msra.mxu0 0.0
    %1390 = vmatprep.subr.mxu0 0.0
    %1391 = vmatpush1.msra.mxu0 0.0
    %1392 = vmatprep.subr.mxu0 0.0
    %1393 = vmatpush1.msra.mxu0 0.0
    %1394 = vmatprep.subr.mxu0 0.0
    %1395 = vmatpush1.msra.mxu0 0.0
    %1396 = vmatprep.subr.mxu0 0.0
    %1397 = vmatpush1.msra.mxu0 0.0
    %1398 = vmatprep.subr.mxu0 0.0
    %1399 = vmatpush1.msra.mxu0 0.0
    %1400 = vmatprep.subr.mxu0 0.0
    %1401 = vmatpush1.msra.mxu0 0.0
    %1402 = vmatprep.subr.mxu0 0.0
    %1403 = vmatpush1.msra.mxu0 0.0
    %1404 = vmatprep.subr.mxu0 0.0
    %1405 = vmatpush1.msra.mxu0 0.0
    %1406 = vmatprep.subr.mxu0 0.0
    %1407 = vmatpush1.msra.mxu0 0.0
    %1408 = vmatprep.subr.mxu0 0.0
    %1409 = vmatpush1.msra.mxu0 0.0
    %1410 = vmatprep.subr.mxu0 0.0
    %1411 = vmatpush1.msra.mxu0 0.0
    %1412 = vmatprep.subr.mxu0 0.0
    %1413 = vmatpush1.msra.mxu0 0.0
    %1414 = vmatprep.subr.mxu0 0.0
    %1415 = vmatpush1.msra.mxu0 0.0
    %1416 = vmatprep.subr.mxu0 0.0
    %1417 = vmatpush1.msra.mxu0 0.0
    %1418 = vmatprep.subr.mxu0 0.0
    %1419 = vmatpush1.msra.mxu0 0.0
    %1420 = vmatprep.subr.mxu0 0.0
    %1421 = vmatpush1.msra.mxu0 0.0
    %1422 = vmatprep.subr.mxu0 0.0
    %1423 = vmatpush1.msra.mxu0 0.0
    %1424 = vmatprep.subr.mxu0 0.0
    %1425 = vmatpush1.msra.mxu0 0.0
    %1426 = vmatprep.subr.mxu0 0.0
    %1427 = vmatpush1.msra.mxu0 0.0
    %1428 = vmatprep.subr.mxu0 0.0
    %1429 = vmatpush1.msra.mxu0 0.0
    %1430 = vmatprep.subr.mxu0 0.0
    %1431 = vmatpush1.msra.mxu0 0.0
    %1432 = vmatprep.subr.mxu0 0.0
    %1433 = vmatpush1.msra.mxu0 0.0
    %1434 = vmatprep.mubr.f32.mxu0 0.0
    %1435 = vmatmul.mubr.f32.gmra.mrb[0].mxu0 %v1365
    %v1436 = vpop.f32.mrb[0].mxu0
    %v1437 = vadd.f32 %v1362, %v1436
    %v1438 = vpop.f32.mrb[0].mxu0
    %1439 = vmatprep.mubr.f32.mxu0 0.0
    %1440 = vmatmul.mubr.f32.gmra.mrb[0].mxu0 %v1368
    %v1441 = vpop.f32.mrb[0].mxu0
    %v1442 = vadd.f32 %v1362, %v1441
    %v1443 = vpop.f32.mrb[0].mxu0
    %1444 = vdwg.mxu0
    %v1445 = vadd.f32 %v1437, %v1168
    %v1446 = vadd.f32 %v1442, %v1169
    %s1447 = scalar_lea.vmem %s6, 8
    %v1448 = vld [vmem:[%s1447] sm:$0xff]
    %v1449 = vsel %vm46, %v1445, 0.0
    %1450 = vadd.xlane.f32.xlu0 %v1449
    %v1451 = vpop.xlane.xlu0 %1450
    %v1452 = vsel %vm46, %v1446, 0.0
    %1453 = vadd.xlane.f32.xlu0 %v1452
    %v1454 = vpop.xlane.xlu0 %1453
    %v1455 = vmul.f32 %v1451, %v53
    %v1456 = vmul.f32 %v1454, %v53
    %v1457 = vsub.f32 %v1445, %v1455
    %v1458 = vsub.f32 %v1446, %v1456
    %v1459 = vmul.f32 %v1457, %v1457
    %v1460 = vmul.f32 %v1458, %v1458
    %v1461 = vsel %vm46, %v1459, 0.0
    %1462 = vadd.xlane.f32.xlu0 %v1461
    %v1463 = vpop.xlane.xlu0 %1462
    %v1464 = vsel %vm46, %v1460, 0.0
    %1465 = vadd.xlane.f32.xlu0 %v1464
    %v1466 = vpop.xlane.xlu0 %1465
    %v1467 = vmul.f32 %v1463, %v53
    %v1468 = vmul.f32 %v1466, %v53
    %v1469 = vadd.f32 %v1467, 1e-05
    %v1470 = vadd.f32 %v1468, 1e-05
    %v1471 = vrsqrt.pop %v1469
    %v1472 = vrsqrt.pop %v1470
    %v1473 = vmul.f32 %v1457, %v1471
    %v1474 = vmul.f32 %v1458, %v1472
    %v1475 = vlaneseq
    %v1476 = vshrl.u32 %v1475, 7
    %v1477 = vsub.s32 0, %v1476
    %v1478 = vrot.slane %v1448, %v1477
    %v1479 = vmul.f32 %v1473, %v1478
    %v1480 = vmul.f32 %v1474, %v1478
    %v1481 = vlaneseq
    %v1482 = vshrl.u32 %v1481, 7
    %v1483 = vsub.s32 1, %v1482
    %v1484 = vrot.slane %v1448, %v1483
    %v1485 = vadd.f32 %v1479, %v1484
    %v1486 = vadd.f32 %v1480, %v1484
    %s1487 = scalar_lea.vmem %s2, 32
    %v1488 = vld [vmem:[%s1487] sm:$0xff]
    %v1489 = vld [vmem:[%s1487 + $0x8] sm:$0xff]
    %v1490 = vld [vmem:[%s1487 + $0x10] sm:$0xff]
    %v1491 = vld [vmem:[%s1487 + $0x18] sm:$0xff]
    %v1492 = vlaneseq
    %v1493 = vshrl.u32 %v1492, 7
    %v1494 = vsub.s32 2, %v1493
    %v1495 = vrot.slane %v1448, %v1494
    %v1497 = vsel %vm46, %v1485, 0
    %v1500 = vsel %vm46, %v1486, 0
    %1502 = vmatprep.subr.mxu0 0.0
    %1503 = vmatpush1.msra.mxu0 %v1488
    %1504 = vmatprep.subr.mxu0 0.0
    %1505 = vmatpush1.msra.mxu0 %v1489
    %1506 = vmatprep.subr.mxu0 0.0
    %1507 = vmatpush1.msra.mxu0 %v1490
    %1508 = vmatprep.subr.mxu0 0.0
    %1509 = vmatpush1.msra.mxu0 %v1491
    %1510 = vmatprep.subr.mxu0 0.0
    %1511 = vmatpush1.msra.mxu0 0.0
    %1512 = vmatprep.subr.mxu0 0.0
    %1513 = vmatpush1.msra.mxu0 0.0
    %1514 = vmatprep.subr.mxu0 0.0
    %1515 = vmatpush1.msra.mxu0 0.0
    %1516 = vmatprep.subr.mxu0 0.0
    %1517 = vmatpush1.msra.mxu0 0.0
    %1518 = vmatprep.subr.mxu0 0.0
    %1519 = vmatpush1.msra.mxu0 0.0
    %1520 = vmatprep.subr.mxu0 0.0
    %1521 = vmatpush1.msra.mxu0 0.0
    %1522 = vmatprep.subr.mxu0 0.0
    %1523 = vmatpush1.msra.mxu0 0.0
    %1524 = vmatprep.subr.mxu0 0.0
    %1525 = vmatpush1.msra.mxu0 0.0
    %1526 = vmatprep.subr.mxu0 0.0
    %1527 = vmatpush1.msra.mxu0 0.0
    %1528 = vmatprep.subr.mxu0 0.0
    %1529 = vmatpush1.msra.mxu0 0.0
    %1530 = vmatprep.subr.mxu0 0.0
    %1531 = vmatpush1.msra.mxu0 0.0
    %1532 = vmatprep.subr.mxu0 0.0
    %1533 = vmatpush1.msra.mxu0 0.0
    %1534 = vmatprep.subr.mxu0 0.0
    %1535 = vmatpush1.msra.mxu0 0.0
    %1536 = vmatprep.subr.mxu0 0.0
    %1537 = vmatpush1.msra.mxu0 0.0
    %1538 = vmatprep.subr.mxu0 0.0
    %1539 = vmatpush1.msra.mxu0 0.0
    %1540 = vmatprep.subr.mxu0 0.0
    %1541 = vmatpush1.msra.mxu0 0.0
    %1542 = vmatprep.subr.mxu0 0.0
    %1543 = vmatpush1.msra.mxu0 0.0
    %1544 = vmatprep.subr.mxu0 0.0
    %1545 = vmatpush1.msra.mxu0 0.0
    %1546 = vmatprep.subr.mxu0 0.0
    %1547 = vmatpush1.msra.mxu0 0.0
    %1548 = vmatprep.subr.mxu0 0.0
    %1549 = vmatpush1.msra.mxu0 0.0
    %1550 = vmatprep.subr.mxu0 0.0
    %1551 = vmatpush1.msra.mxu0 0.0
    %1552 = vmatprep.subr.mxu0 0.0
    %1553 = vmatpush1.msra.mxu0 0.0
    %1554 = vmatprep.subr.mxu0 0.0
    %1555 = vmatpush1.msra.mxu0 0.0
    %1556 = vmatprep.subr.mxu0 0.0
    %1557 = vmatpush1.msra.mxu0 0.0
    %1558 = vmatprep.subr.mxu0 0.0
    %1559 = vmatpush1.msra.mxu0 0.0
    %1560 = vmatprep.subr.mxu0 0.0
    %1561 = vmatpush1.msra.mxu0 0.0
    %1562 = vmatprep.subr.mxu0 0.0
    %1563 = vmatpush1.msra.mxu0 0.0
    %1564 = vmatprep.subr.mxu0 0.0
    %1565 = vmatpush1.msra.mxu0 0.0
    %1566 = vmatprep.mubr.f32.mxu0 0.0
    %1567 = vmatmul.mubr.f32.gmra.mrb[0].mxu0 %v1497
    %v1568 = vpop.f32.mrb[0].mxu0
    %v1569 = vadd.f32 %v1495, %v1568
    %v1570 = vpop.f32.mrb[0].mxu0
    %1571 = vmatprep.mubr.f32.mxu0 0.0
    %1572 = vmatmul.mubr.f32.gmra.mrb[0].mxu0 %v1500
    %v1573 = vpop.f32.mrb[0].mxu0
    %v1574 = vadd.f32 %v1495, %v1573
    %v1575 = vpop.f32.mrb[0].mxu0
    %1576 = vdwg.mxu0
    %v1577 = vmul.f32 %v1569, %v178
    %v1578 = vmul.f32 %v1574, %v183
    %v1579 = vmul.f32 %v1577, %v1577
    %v1580 = vmul.f32 %v1578, %v1578
    %v1581 = vsel %vm189, %v1579, 0.0
    %1582 = vadd.xlane.f32.xlu0 %v1581
    %v1583 = vpop.xlane.xlu0 %1582
    %v1584 = vsel %vm189, %v1580, 0.0
    %1585 = vadd.xlane.f32.xlu0 %v1584
    %v1586 = vpop.xlane.xlu0 %1585
    %v1587 = vadd.f32 %v1583, 1e-24
    %v1588 = vadd.f32 %v1586, 1e-24
    %v1589 = vrsqrt.pop %v1587
    %v1590 = vrsqrt.pop %v1588
    %v1591 = vmul.f32 %v1577, %v1589
    %v1592 = vmul.f32 %v1578, %v1590
    %1595 = vrot.lane.b32.xlu0 %v1579, 96
    %v1596 = vpop.permute.xlu0 %1595
    %1597 = vrot.lane.b32.xlu0 %v1580, 96
    %v1598 = vpop.permute.xlu0 %1597
    %v1601 = vsel %vm189, %v1596, 0.0
    %1602 = vadd.xlane.f32.xlu0 %v1601
    %v1603 = vpop.xlane.xlu0 %1602
    %v1604 = vsel %vm189, %v1598, 0.0
    %1605 = vadd.xlane.f32.xlu0 %v1604
    %v1606 = vpop.xlane.xlu0 %1605
    %v1607 = vadd.f32 %v1603, 1e-24
    %v1608 = vadd.f32 %v1606, 1e-24
    %v1609 = vrsqrt.pop %v1607
    %v1610 = vrsqrt.pop %v1608
    %v1611 = vmul.f32 %v1577, %v1609
    %v1612 = vmul.f32 %v1578, %v1610
    %1614 = vrot.lane.b32.xlu0 %v1611, 96
    %v1615 = vpop.permute.xlu0 %1614
    %v1617 = vsel %vm189, %v1591, 0
    %v1619 = vsel %vm189, %v1615, 0
    %1621 = vmatprep.subr.mxu0 0.0
    %1622 = vmatpush1.xpose.msra.mxu0 %v1619
    %1623 = vmatprep.subr.mxu0 0.0
    %1624 = vmatpush1.xpose.msra.mxu0 0.0
    %1625 = vmatprep.subr.mxu0 0.0
    %1626 = vmatpush1.xpose.msra.mxu0 0.0
    %1627 = vmatprep.subr.mxu0 0.0
    %1628 = vmatpush1.xpose.msra.mxu0 0.0
    %1629 = vmatprep.subr.mxu0 0.0
    %1630 = vmatpush1.xpose.msra.mxu0 0.0
    %1631 = vmatprep.subr.mxu0 0.0
    %1632 = vmatpush1.xpose.msra.mxu0 0.0
    %1633 = vmatprep.subr.mxu0 0.0
    %1634 = vmatpush1.xpose.msra.mxu0 0.0
    %1635 = vmatprep.subr.mxu0 0.0
    %1636 = vmatpush1.xpose.msra.mxu0 0.0
    %1637 = vmatprep.subr.mxu0 0.0
    %1638 = vmatpush1.xpose.msra.mxu0 0.0
    %1639 = vmatprep.subr.mxu0 0.0
    %1640 = vmatpush1.xpose.msra.mxu0 0.0
    %1641 = vmatprep.subr.mxu0 0.0
    %1642 = vmatpush1.xpose.msra.mxu0 0.0
    %1643 = vmatprep.subr.mxu0 0.0
    %1644 = vmatpush1.xpose.msra.mxu0 0.0
    %1645 = vmatprep.subr.mxu0 0.0
    %1646 = vmatpush1.xpose.msra.mxu0 0.0
    %1647 = vmatprep.subr.mxu0 0.0
    %1648 = vmatpush1.xpose.msra.mxu0 0.0
    %1649 = vmatprep.subr.mxu0 0.0
    %1650 = vmatpush1.xpose.msra.mxu0 0.0
    %1651 = vmatprep.subr.mxu0 0.0
    %1652 = vmatpush1.xpose.msra.mxu0 0.0
    %1653 = vmatprep.subr.mxu0 0.0
    %1654 = vmatpush1.xpose.msra.mxu0 0.0
    %1655 = vmatprep.subr.mxu0 0.0
    %1656 = vmatpush1.xpose.msra.mxu0 0.0
    %1657 = vmatprep.subr.mxu0 0.0
    %1658 = vmatpush1.xpose.msra.mxu0 0.0
    %1659 = vmatprep.subr.mxu0 0.0
    %1660 = vmatpush1.xpose.msra.mxu0 0.0
    %1661 = vmatprep.subr.mxu0 0.0
    %1662 = vmatpush1.xpose.msra.mxu0 0.0
    %1663 = vmatprep.subr.mxu0 0.0
    %1664 = vmatpush1.xpose.msra.mxu0 0.0
    %1665 = vmatprep.subr.mxu0 0.0
    %1666 = vmatpush1.xpose.msra.mxu0 0.0
    %1667 = vmatprep.subr.mxu0 0.0
    %1668 = vmatpush1.xpose.msra.mxu0 0.0
    %1669 = vmatprep.subr.mxu0 0.0
    %1670 = vmatpush1.xpose.msra.mxu0 0.0
    %1671 = vmatprep.subr.mxu0 0.0
    %1672 = vmatpush1.xpose.msra.mxu0 0.0
    %1673 = vmatprep.subr.mxu0 0.0
    %1674 = vmatpush1.xpose.msra.mxu0 0.0
    %1675 = vmatprep.subr.mxu0 0.0
    %1676 = vmatpush1.xpose.msra.mxu0 0.0
    %1677 = vmatprep.subr.mxu0 0.0
    %1678 = vmatpush1.xpose.msra.mxu0 0.0
    %1679 = vmatprep.subr.mxu0 0.0
    %1680 = vmatpush1.xpose.msra.mxu0 0.0
    %1681 = vmatprep.subr.mxu0 0.0
    %1682 = vmatpush1.xpose.msra.mxu0 0.0
    %1683 = vmatprep.subr.mxu0 0.0
    %1684 = vmatpush1.xpose.msra.mxu0 0.0
    %1685 = vmatprep.mubr.f32.mxu0 0.0
    %1686 = vmatmul.mubr.f32.gmra.mrb[0].mxu0 %v1617
    %v1687 = vpop.f32.mrb[0].mxu0
    %v1688 = vadd.f32 0.0, %v1687
    %v1689 = vpop.f32.mrb[0].mxu0
    %1690 = vdwg.mxu0
    %1692 = vrot.lane.b32.xlu0 %v1612, 96
    %v1693 = vpop.permute.xlu0 %1692
    %v1695 = vsel %vm189, %v1592, 0
    %v1697 = vsel %vm189, %v1693, 0
    %1699 = vmatprep.subr.mxu0 0.0
    %1700 = vmatpush1.xpose.msra.mxu0 %v1697
    %1701 = vmatprep.subr.mxu0 0.0
    %1702 = vmatpush1.xpose.msra.mxu0 0.0
    %1703 = vmatprep.subr.mxu0 0.0
    %1704 = vmatpush1.xpose.msra.mxu0 0.0
    %1705 = vmatprep.subr.mxu0 0.0
    %1706 = vmatpush1.xpose.msra.mxu0 0.0
    %1707 = vmatprep.subr.mxu0 0.0
    %1708 = vmatpush1.xpose.msra.mxu0 0.0
    %1709 = vmatprep.subr.mxu0 0.0
    %1710 = vmatpush1.xpose.msra.mxu0 0.0
    %1711 = vmatprep.subr.mxu0 0.0
    %1712 = vmatpush1.xpose.msra.mxu0 0.0
    %1713 = vmatprep.subr.mxu0 0.0
    %1714 = vmatpush1.xpose.msra.mxu0 0.0
    %1715 = vmatprep.subr.mxu0 0.0
    %1716 = vmatpush1.xpose.msra.mxu0 0.0
    %1717 = vmatprep.subr.mxu0 0.0
    %1718 = vmatpush1.xpose.msra.mxu0 0.0
    %1719 = vmatprep.subr.mxu0 0.0
    %1720 = vmatpush1.xpose.msra.mxu0 0.0
    %1721 = vmatprep.subr.mxu0 0.0
    %1722 = vmatpush1.xpose.msra.mxu0 0.0
    %1723 = vmatprep.subr.mxu0 0.0
    %1724 = vmatpush1.xpose.msra.mxu0 0.0
    %1725 = vmatprep.subr.mxu0 0.0
    %1726 = vmatpush1.xpose.msra.mxu0 0.0
    %1727 = vmatprep.subr.mxu0 0.0
    %1728 = vmatpush1.xpose.msra.mxu0 0.0
    %1729 = vmatprep.subr.mxu0 0.0
    %1730 = vmatpush1.xpose.msra.mxu0 0.0
    %1731 = vmatprep.subr.mxu0 0.0
    %1732 = vmatpush1.xpose.msra.mxu0 0.0
    %1733 = vmatprep.subr.mxu0 0.0
    %1734 = vmatpush1.xpose.msra.mxu0 0.0
    %1735 = vmatprep.subr.mxu0 0.0
    %1736 = vmatpush1.xpose.msra.mxu0 0.0
    %1737 = vmatprep.subr.mxu0 0.0
    %1738 = vmatpush1.xpose.msra.mxu0 0.0
    %1739 = vmatprep.subr.mxu0 0.0
    %1740 = vmatpush1.xpose.msra.mxu0 0.0
    %1741 = vmatprep.subr.mxu0 0.0
    %1742 = vmatpush1.xpose.msra.mxu0 0.0
    %1743 = vmatprep.subr.mxu0 0.0
    %1744 = vmatpush1.xpose.msra.mxu0 0.0
    %1745 = vmatprep.subr.mxu0 0.0
    %1746 = vmatpush1.xpose.msra.mxu0 0.0
    %1747 = vmatprep.subr.mxu0 0.0
    %1748 = vmatpush1.xpose.msra.mxu0 0.0
    %1749 = vmatprep.subr.mxu0 0.0
    %1750 = vmatpush1.xpose.msra.mxu0 0.0
    %1751 = vmatprep.subr.mxu0 0.0
    %1752 = vmatpush1.xpose.msra.mxu0 0.0
    %1753 = vmatprep.subr.mxu0 0.0
    %1754 = vmatpush1.xpose.msra.mxu0 0.0
    %1755 = vmatprep.subr.mxu0 0.0
    %1756 = vmatpush1.xpose.msra.mxu0 0.0
    %1757 = vmatprep.subr.mxu0 0.0
    %1758 = vmatpush1.xpose.msra.mxu0 0.0
    %1759 = vmatprep.subr.mxu0 0.0
    %1760 = vmatpush1.xpose.msra.mxu0 0.0
    %1761 = vmatprep.subr.mxu0 0.0
    %1762 = vmatpush1.xpose.msra.mxu0 0.0
    %1763 = vmatprep.mubr.f32.mxu0 0.0
    %1764 = vmatmul.mubr.f32.gmra.mrb[0].mxu0 %v1695
    %v1765 = vpop.f32.mrb[0].mxu0
    %v1766 = vadd.f32 0.0, %v1765
    %v1767 = vpop.f32.mrb[0].mxu0
    %1768 = vdwg.mxu0
    %v1769 = vmax.f32 %v1688, -1.0
    %v1770 = vmax.f32 %v1766, -1.0
    %v1771 = vmin.f32 %v1769, 1.0
    %v1772 = vmin.f32 %v1770, 1.0
    %v1773 = vand.u32 2147483647, %v1771
    %v1774 = vand.u32 2147483647, %v1772
    %v1775 = vmul.f32 %v1771, %v1771
    %v1776 = vmul.f32 %v1772, %v1772
    %v1777 = vmul.f32 %v1771, %v1775
    %v1778 = vmul.f32 %v1772, %v1776
    %v1779 = vmul.f32 %v1775, 0.0421632
    %v1780 = vmul.f32 %v1776, 0.0421632
    %v1781 = vadd.f32 %v1779, 0.024181312
    %v1782 = vadd.f32 %v1780, 0.024181312
    %v1783 = vmul.f32 %v1781, %v1775
    %v1784 = vmul.f32 %v1782, %v1776
    %v1785 = vadd.f32 %v1783, 0.045470025
    %v1786 = vadd.f32 %v1784, 0.045470025
    %v1787 = vmul.f32 %v1785, %v1775
    %v1788 = vmul.f32 %v1786, %v1776
    %v1789 = vadd.f32 %v1787, 0.074953005
    %v1790 = vadd.f32 %v1788, 0.074953005
    %v1791 = vmul.f32 %v1789, %v1775
    %v1792 = vmul.f32 %v1790, %v1776
    %v1793 = vadd.f32 %v1791, 0.16666752
    %v1794 = vadd.f32 %v1792, 0.16666752
    %v1795 = vmul.f32 %v1777, %v1793
    %v1796 = vmul.f32 %v1778, %v1794
    %v1797 = vadd.f32 %v1771, %v1795
    %v1798 = vadd.f32 %v1772, %v1796
    %v1799 = vsub.f32 1.5707964, %v1797
    %v1800 = vsub.f32 1.5707964, %v1798
    %v1801 = vsub.f32 1.0, %v1773
    %v1802 = vsub.f32 1.0, %v1774
    %v1803 = vmul.f32 %v1801, 0.5
    %v1804 = vmul.f32 %v1802, 0.5
    %v1805 = vrsqrt.pop %v1803
    %v1806 = vmul.f32 %v1803, %v1805
    %vm1807 = vcmp.eq.f32.partialorder %v1803, inf
    %v1808 = vsel %vm1807, %v1803, %v1806
    %vm1809 = vcmp.eq.f32.partialorder %v1803, 0.0
    %v1810 = vand.u32 %v1803, 2147483648
    %v1811 = vsel %vm1809, %v1810, %v1808
    %v1812 = vrsqrt.pop %v1804
    %v1813 = vmul.f32 %v1804, %v1812
    %vm1814 = vcmp.eq.f32.partialorder %v1804, inf
    %v1815 = vsel %vm1814, %v1804, %v1813
    %vm1816 = vcmp.eq.f32.partialorder %v1804, 0.0
    %v1817 = vand.u32 %v1804, 2147483648
    %v1818 = vsel %vm1816, %v1817, %v1815
    %v1819 = vmul.f32 %v1811, %v1803
    %v1820 = vmul.f32 %v1818, %v1804
    %v1821 = vmul.f32 %v1803, 0.0421632
    %v1822 = vmul.f32 %v1804, 0.0421632
    %v1823 = vadd.f32 %v1821, 0.024181312
    %v1824 = vadd.f32 %v1822, 0.024181312
    %v1825 = vmul.f32 %v1823, %v1803
    %v1826 = vmul.f32 %v1824, %v1804
    %v1827 = vadd.f32 %v1825, 0.045470025
    %v1828 = vadd.f32 %v1826, 0.045470025
    %v1829 = vmul.f32 %v1827, %v1803
    %v1830 = vmul.f32 %v1828, %v1804
    %v1831 = vadd.f32 %v1829, 0.074953005
    %v1832 = vadd.f32 %v1830, 0.074953005
    %v1833 = vmul.f32 %v1831, %v1803
    %v1834 = vmul.f32 %v1832, %v1804
    %v1835 = vadd.f32 %v1833, 0.16666752
    %v1836 = vadd.f32 %v1834, 0.16666752
    %v1837 = vmul.f32 %v1819, %v1835
    %v1838 = vmul.f32 %v1820, %v1836
    %v1839 = vadd.f32 %v1811, %v1837
    %v1840 = vadd.f32 %v1818, %v1838
    %v1841 = vmul.f32 %v1839, 2.0
    %v1842 = vmul.f32 %v1840, 2.0
    %vm1843 = vcmp.ge.f32.partialorder %v1771, 0.0
    %vm1844 = vcmp.ge.f32.partialorder %v1772, 0.0
    %v1845 = vsub.f32 3.1415927, %v1841
    %v1846 = vsub.f32 3.1415927, %v1842
    %v1847 = vsel %vm1843, %v1841, %v1845
    %v1848 = vsel %vm1844, %v1842, %v1846
    %vm1849 = vcmp.le.f32.partialorder %v1773, 0.5
    %vm1850 = vcmp.le.f32.partialorder %v1774, 0.5
    %v1851 = vsel %vm1849, %v1799, %v1847
    %v1852 = vsel %vm1850, %v1800, %v1848
    %v1853 = vmul.f32 %v1851, 0.31830987
    %v1854 = vmul.f32 %v1852, 0.31830987
    %v1855 = vsub.f32 1.0, %v1853
    %v1856 = vsub.f32 1.0, %v1854
    %v1857 = vmul.f32 %v1855, %v1855
    %v1858 = vmul.f32 %v1856, %v1856
    %v1859 = vmul.f32 %v1857, %v1857
    %v1860 = vmul.f32 %v1858, %v1858
    %v1861 = vmul.f32 %v1859, %v1859
    %v1862 = vmul.f32 %v1860, %v1860
    %1864 = vrot.lane.b32.xlu0 %v1577, 64
    %v1865 = vpop.permute.xlu0 %1864
    %v1868 = vsel %vm476, %v1861, 0
    %1870 = vmatprep.subr.mxu0 0.0
    %1871 = vmatpush1.msra.mxu0 %v1865
    %1872 = vmatprep.subr.mxu0 0.0
    %1873 = vmatpush1.msra.mxu0 0.0
    %1874 = vmatprep.subr.mxu0 0.0
    %1875 = vmatpush1.msra.mxu0 0.0
    %1876 = vmatprep.subr.mxu0 0.0
    %1877 = vmatpush1.msra.mxu0 0.0
    %1878 = vmatprep.subr.mxu0 0.0
    %1879 = vmatpush1.msra.mxu0 0.0
    %1880 = vmatprep.subr.mxu0 0.0
    %1881 = vmatpush1.msra.mxu0 0.0
    %1882 = vmatprep.subr.mxu0 0.0
    %1883 = vmatpush1.msra.mxu0 0.0
    %1884 = vmatprep.subr.mxu0 0.0
    %1885 = vmatpush1.msra.mxu0 0.0
    %1886 = vmatprep.subr.mxu0 0.0
    %1887 = vmatpush1.msra.mxu0 0.0
    %1888 = vmatprep.subr.mxu0 0.0
    %1889 = vmatpush1.msra.mxu0 0.0
    %1890 = vmatprep.subr.mxu0 0.0
    %1891 = vmatpush1.msra.mxu0 0.0
    %1892 = vmatprep.subr.mxu0 0.0
    %1893 = vmatpush1.msra.mxu0 0.0
    %1894 = vmatprep.subr.mxu0 0.0
    %1895 = vmatpush1.msra.mxu0 0.0
    %1896 = vmatprep.subr.mxu0 0.0
    %1897 = vmatpush1.msra.mxu0 0.0
    %1898 = vmatprep.subr.mxu0 0.0
    %1899 = vmatpush1.msra.mxu0 0.0
    %1900 = vmatprep.subr.mxu0 0.0
    %1901 = vmatpush1.msra.mxu0 0.0
    %1902 = vmatprep.subr.mxu0 0.0
    %1903 = vmatpush1.msra.mxu0 0.0
    %1904 = vmatprep.subr.mxu0 0.0
    %1905 = vmatpush1.msra.mxu0 0.0
    %1906 = vmatprep.subr.mxu0 0.0
    %1907 = vmatpush1.msra.mxu0 0.0
    %1908 = vmatprep.subr.mxu0 0.0
    %1909 = vmatpush1.msra.mxu0 0.0
    %1910 = vmatprep.subr.mxu0 0.0
    %1911 = vmatpush1.msra.mxu0 0.0
    %1912 = vmatprep.subr.mxu0 0.0
    %1913 = vmatpush1.msra.mxu0 0.0
    %1914 = vmatprep.subr.mxu0 0.0
    %1915 = vmatpush1.msra.mxu0 0.0
    %1916 = vmatprep.subr.mxu0 0.0
    %1917 = vmatpush1.msra.mxu0 0.0
    %1918 = vmatprep.subr.mxu0 0.0
    %1919 = vmatpush1.msra.mxu0 0.0
    %1920 = vmatprep.subr.mxu0 0.0
    %1921 = vmatpush1.msra.mxu0 0.0
    %1922 = vmatprep.subr.mxu0 0.0
    %1923 = vmatpush1.msra.mxu0 0.0
    %1924 = vmatprep.subr.mxu0 0.0
    %1925 = vmatpush1.msra.mxu0 0.0
    %1926 = vmatprep.subr.mxu0 0.0
    %1927 = vmatpush1.msra.mxu0 0.0
    %1928 = vmatprep.subr.mxu0 0.0
    %1929 = vmatpush1.msra.mxu0 0.0
    %1930 = vmatprep.subr.mxu0 0.0
    %1931 = vmatpush1.msra.mxu0 0.0
    %1932 = vmatprep.subr.mxu0 0.0
    %1933 = vmatpush1.msra.mxu0 0.0
    %1934 = vmatprep.mubr.f32.mxu0 0.0
    %1935 = vmatmul.mubr.f32.gmra.mrb[0].mxu0 %v1868
    %v1936 = vpop.f32.mrb[0].mxu0
    %v1937 = vadd.f32 0.0, %v1936
    %v1938 = vpop.f32.mrb[0].mxu0
    %1939 = vdwg.mxu0
    %1941 = vrot.lane.b32.xlu0 %v1578, 64
    %v1942 = vpop.permute.xlu0 %1941
    %v1945 = vsel %vm476, %v1862, 0
    %1947 = vmatprep.subr.mxu0 0.0
    %1948 = vmatpush1.msra.mxu0 %v1942
    %1949 = vmatprep.subr.mxu0 0.0
    %1950 = vmatpush1.msra.mxu0 0.0
    %1951 = vmatprep.subr.mxu0 0.0
    %1952 = vmatpush1.msra.mxu0 0.0
    %1953 = vmatprep.subr.mxu0 0.0
    %1954 = vmatpush1.msra.mxu0 0.0
    %1955 = vmatprep.subr.mxu0 0.0
    %1956 = vmatpush1.msra.mxu0 0.0
    %1957 = vmatprep.subr.mxu0 0.0
    %1958 = vmatpush1.msra.mxu0 0.0
    %1959 = vmatprep.subr.mxu0 0.0
    %1960 = vmatpush1.msra.mxu0 0.0
    %1961 = vmatprep.subr.mxu0 0.0
    %1962 = vmatpush1.msra.mxu0 0.0
    %1963 = vmatprep.subr.mxu0 0.0
    %1964 = vmatpush1.msra.mxu0 0.0
    %1965 = vmatprep.subr.mxu0 0.0
    %1966 = vmatpush1.msra.mxu0 0.0
    %1967 = vmatprep.subr.mxu0 0.0
    %1968 = vmatpush1.msra.mxu0 0.0
    %1969 = vmatprep.subr.mxu0 0.0
    %1970 = vmatpush1.msra.mxu0 0.0
    %1971 = vmatprep.subr.mxu0 0.0
    %1972 = vmatpush1.msra.mxu0 0.0
    %1973 = vmatprep.subr.mxu0 0.0
    %1974 = vmatpush1.msra.mxu0 0.0
    %1975 = vmatprep.subr.mxu0 0.0
    %1976 = vmatpush1.msra.mxu0 0.0
    %1977 = vmatprep.subr.mxu0 0.0
    %1978 = vmatpush1.msra.mxu0 0.0
    %1979 = vmatprep.subr.mxu0 0.0
    %1980 = vmatpush1.msra.mxu0 0.0
    %1981 = vmatprep.subr.mxu0 0.0
    %1982 = vmatpush1.msra.mxu0 0.0
    %1983 = vmatprep.subr.mxu0 0.0
    %1984 = vmatpush1.msra.mxu0 0.0
    %1985 = vmatprep.subr.mxu0 0.0
    %1986 = vmatpush1.msra.mxu0 0.0
    %1987 = vmatprep.subr.mxu0 0.0
    %1988 = vmatpush1.msra.mxu0 0.0
    %1989 = vmatprep.subr.mxu0 0.0
    %1990 = vmatpush1.msra.mxu0 0.0
    %1991 = vmatprep.subr.mxu0 0.0
    %1992 = vmatpush1.msra.mxu0 0.0
    %1993 = vmatprep.subr.mxu0 0.0
    %1994 = vmatpush1.msra.mxu0 0.0
    %1995 = vmatprep.subr.mxu0 0.0
    %1996 = vmatpush1.msra.mxu0 0.0
    %1997 = vmatprep.subr.mxu0 0.0
    %1998 = vmatpush1.msra.mxu0 0.0
    %1999 = vmatprep.subr.mxu0 0.0
    %2000 = vmatpush1.msra.mxu0 0.0
    %2001 = vmatprep.subr.mxu0 0.0
    %2002 = vmatpush1.msra.mxu0 0.0
    %2003 = vmatprep.subr.mxu0 0.0
    %2004 = vmatpush1.msra.mxu0 0.0
    %2005 = vmatprep.subr.mxu0 0.0
    %2006 = vmatpush1.msra.mxu0 0.0
    %2007 = vmatprep.subr.mxu0 0.0
    %2008 = vmatpush1.msra.mxu0 0.0
    %2009 = vmatprep.subr.mxu0 0.0
    %2010 = vmatpush1.msra.mxu0 0.0
    %2011 = vmatprep.mubr.f32.mxu0 0.0
    %2012 = vmatmul.mubr.f32.gmra.mrb[0].mxu0 %v1945
    %v2013 = vpop.f32.mrb[0].mxu0
    %v2014 = vadd.f32 0.0, %v2013
    %v2015 = vpop.f32.mrb[0].mxu0
    %2016 = vdwg.mxu0
    %2017 = vrot.lane.b32.xlu0 %v1579, 112
    %v2018 = vpop.permute.xlu0 %2017
    %2019 = vrot.lane.b32.xlu0 %v1580, 112
    %v2020 = vpop.permute.xlu0 %2019
    %v2023 = vsel %vm189, %v2018, 0.0
    %2024 = vadd.xlane.f32.xlu0 %v2023
    %v2025 = vpop.xlane.xlu0 %2024
    %v2026 = vsel %vm189, %v2020, 0.0
    %2027 = vadd.xlane.f32.xlu0 %v2026
    %v2028 = vpop.xlane.xlu0 %2027
    %v2029 = vadd.f32 %v2025, 1e-24
    %v2030 = vadd.f32 %v2028, 1e-24
    %v2031 = vrsqrt.pop %v2029
    %v2032 = vrsqrt.pop %v2030
    %v2033 = vmul.f32 %v1577, %v2031
    %v2034 = vmul.f32 %v1578, %v2032
    %2035 = vrot.lane.b32.xlu0 %v1579, 80
    %v2036 = vpop.permute.xlu0 %2035
    %2037 = vrot.lane.b32.xlu0 %v1580, 80
    %v2038 = vpop.permute.xlu0 %2037
    %v2041 = vsel %vm189, %v2036, 0.0
    %2042 = vadd.xlane.f32.xlu0 %v2041
    %v2043 = vpop.xlane.xlu0 %2042
    %v2044 = vsel %vm189, %v2038, 0.0
    %2045 = vadd.xlane.f32.xlu0 %v2044
    %v2046 = vpop.xlane.xlu0 %2045
    %v2047 = vadd.f32 %v2043, 1e-24
    %v2048 = vadd.f32 %v2046, 1e-24
    %v2049 = vrsqrt.pop %v2047
    %v2050 = vrsqrt.pop %v2048
    %v2051 = vmul.f32 %v1577, %v2049
    %v2052 = vmul.f32 %v1578, %v2050
    %2054 = vrot.lane.b32.xlu0 %v2033, 112
    %v2055 = vpop.permute.xlu0 %2054
    %2057 = vrot.lane.b32.xlu0 %v2051, 80
    %v2058 = vpop.permute.xlu0 %2057
    %v2059 = vsel %vm189, %v2055, 0
    %v2061 = vsel %vm189, %v2058, 0
    %2063 = vmatprep.subr.mxu0 0.0
    %2064 = vmatpush1.xpose.msra.mxu0 %v2061
    %2065 = vmatprep.subr.mxu0 0.0
    %2066 = vmatpush1.xpose.msra.mxu0 0.0
    %2067 = vmatprep.subr.mxu0 0.0
    %2068 = vmatpush1.xpose.msra.mxu0 0.0
    %2069 = vmatprep.subr.mxu0 0.0
    %2070 = vmatpush1.xpose.msra.mxu0 0.0
    %2071 = vmatprep.subr.mxu0 0.0
    %2072 = vmatpush1.xpose.msra.mxu0 0.0
    %2073 = vmatprep.subr.mxu0 0.0
    %2074 = vmatpush1.xpose.msra.mxu0 0.0
    %2075 = vmatprep.subr.mxu0 0.0
    %2076 = vmatpush1.xpose.msra.mxu0 0.0
    %2077 = vmatprep.subr.mxu0 0.0
    %2078 = vmatpush1.xpose.msra.mxu0 0.0
    %2079 = vmatprep.subr.mxu0 0.0
    %2080 = vmatpush1.xpose.msra.mxu0 0.0
    %2081 = vmatprep.subr.mxu0 0.0
    %2082 = vmatpush1.xpose.msra.mxu0 0.0
    %2083 = vmatprep.subr.mxu0 0.0
    %2084 = vmatpush1.xpose.msra.mxu0 0.0
    %2085 = vmatprep.subr.mxu0 0.0
    %2086 = vmatpush1.xpose.msra.mxu0 0.0
    %2087 = vmatprep.subr.mxu0 0.0
    %2088 = vmatpush1.xpose.msra.mxu0 0.0
    %2089 = vmatprep.subr.mxu0 0.0
    %2090 = vmatpush1.xpose.msra.mxu0 0.0
    %2091 = vmatprep.subr.mxu0 0.0
    %2092 = vmatpush1.xpose.msra.mxu0 0.0
    %2093 = vmatprep.subr.mxu0 0.0
    %2094 = vmatpush1.xpose.msra.mxu0 0.0
    %2095 = vmatprep.subr.mxu0 0.0
    %2096 = vmatpush1.xpose.msra.mxu0 0.0
    %2097 = vmatprep.subr.mxu0 0.0
    %2098 = vmatpush1.xpose.msra.mxu0 0.0
    %2099 = vmatprep.subr.mxu0 0.0
    %2100 = vmatpush1.xpose.msra.mxu0 0.0
    %2101 = vmatprep.subr.mxu0 0.0
    %2102 = vmatpush1.xpose.msra.mxu0 0.0
    %2103 = vmatprep.subr.mxu0 0.0
    %2104 = vmatpush1.xpose.msra.mxu0 0.0
    %2105 = vmatprep.subr.mxu0 0.0
    %2106 = vmatpush1.xpose.msra.mxu0 0.0
    %2107 = vmatprep.subr.mxu0 0.0
    %2108 = vmatpush1.xpose.msra.mxu0 0.0
    %2109 = vmatprep.subr.mxu0 0.0
    %2110 = vmatpush1.xpose.msra.mxu0 0.0
    %2111 = vmatprep.subr.mxu0 0.0
    %2112 = vmatpush1.xpose.msra.mxu0 0.0
    %2113 = vmatprep.subr.mxu0 0.0
    %2114 = vmatpush1.xpose.msra.mxu0 0.0
    %2115 = vmatprep.subr.mxu0 0.0
    %2116 = vmatpush1.xpose.msra.mxu0 0.0
    %2117 = vmatprep.subr.mxu0 0.0
    %2118 = vmatpush1.xpose.msra.mxu0 0.0
    %2119 = vmatprep.subr.mxu0 0.0
    %2120 = vmatpush1.xpose.msra.mxu0 0.0
    %2121 = vmatprep.subr.mxu0 0.0
    %2122 = vmatpush1.xpose.msra.mxu0 0.0
    %2123 = vmatprep.subr.mxu0 0.0
    %2124 = vmatpush1.xpose.msra.mxu0 0.0
    %2125 = vmatprep.subr.mxu0 0.0
    %2126 = vmatpush1.xpose.msra.mxu0 0.0
    %2127 = vmatprep.mubr.f32.mxu0 0.0
    %2128 = vmatmul.mubr.f32.gmra.mrb[0].mxu0 %v2059
    %v2129 = vpop.f32.mrb[0].mxu0
    %v2130 = vadd.f32 0.0, %v2129
    %v2131 = vpop.f32.mrb[0].mxu0
    %2132 = vdwg.mxu0
    %2134 = vrot.lane.b32.xlu0 %v2034, 112
    %v2135 = vpop.permute.xlu0 %2134
    %2137 = vrot.lane.b32.xlu0 %v2052, 80
    %v2138 = vpop.permute.xlu0 %2137
    %v2139 = vsel %vm189, %v2135, 0
    %v2141 = vsel %vm189, %v2138, 0
    %2143 = vmatprep.subr.mxu0 0.0
    %2144 = vmatpush1.xpose.msra.mxu0 %v2141
    %2145 = vmatprep.subr.mxu0 0.0
    %2146 = vmatpush1.xpose.msra.mxu0 0.0
    %2147 = vmatprep.subr.mxu0 0.0
    %2148 = vmatpush1.xpose.msra.mxu0 0.0
    %2149 = vmatprep.subr.mxu0 0.0
    %2150 = vmatpush1.xpose.msra.mxu0 0.0
    %2151 = vmatprep.subr.mxu0 0.0
    %2152 = vmatpush1.xpose.msra.mxu0 0.0
    %2153 = vmatprep.subr.mxu0 0.0
    %2154 = vmatpush1.xpose.msra.mxu0 0.0
    %2155 = vmatprep.subr.mxu0 0.0
    %2156 = vmatpush1.xpose.msra.mxu0 0.0
    %2157 = vmatprep.subr.mxu0 0.0
    %2158 = vmatpush1.xpose.msra.mxu0 0.0
    %2159 = vmatprep.subr.mxu0 0.0
    %2160 = vmatpush1.xpose.msra.mxu0 0.0
    %2161 = vmatprep.subr.mxu0 0.0
    %2162 = vmatpush1.xpose.msra.mxu0 0.0
    %2163 = vmatprep.subr.mxu0 0.0
    %2164 = vmatpush1.xpose.msra.mxu0 0.0
    %2165 = vmatprep.subr.mxu0 0.0
    %2166 = vmatpush1.xpose.msra.mxu0 0.0
    %2167 = vmatprep.subr.mxu0 0.0
    %2168 = vmatpush1.xpose.msra.mxu0 0.0
    %2169 = vmatprep.subr.mxu0 0.0
    %2170 = vmatpush1.xpose.msra.mxu0 0.0
    %2171 = vmatprep.subr.mxu0 0.0
    %2172 = vmatpush1.xpose.msra.mxu0 0.0
    %2173 = vmatprep.subr.mxu0 0.0
    %2174 = vmatpush1.xpose.msra.mxu0 0.0
    %2175 = vmatprep.subr.mxu0 0.0
    %2176 = vmatpush1.xpose.msra.mxu0 0.0
    %2177 = vmatprep.subr.mxu0 0.0
    %2178 = vmatpush1.xpose.msra.mxu0 0.0
    %2179 = vmatprep.subr.mxu0 0.0
    %2180 = vmatpush1.xpose.msra.mxu0 0.0
    %2181 = vmatprep.subr.mxu0 0.0
    %2182 = vmatpush1.xpose.msra.mxu0 0.0
    %2183 = vmatprep.subr.mxu0 0.0
    %2184 = vmatpush1.xpose.msra.mxu0 0.0
    %2185 = vmatprep.subr.mxu0 0.0
    %2186 = vmatpush1.xpose.msra.mxu0 0.0
    %2187 = vmatprep.subr.mxu0 0.0
    %2188 = vmatpush1.xpose.msra.mxu0 0.0
    %2189 = vmatprep.subr.mxu0 0.0
    %2190 = vmatpush1.xpose.msra.mxu0 0.0
    %2191 = vmatprep.subr.mxu0 0.0
    %2192 = vmatpush1.xpose.msra.mxu0 0.0
    %2193 = vmatprep.subr.mxu0 0.0
    %2194 = vmatpush1.xpose.msra.mxu0 0.0
    %2195 = vmatprep.subr.mxu0 0.0
    %2196 = vmatpush1.xpose.msra.mxu0 0.0
    %2197 = vmatprep.subr.mxu0 0.0
    %2198 = vmatpush1.xpose.msra.mxu0 0.0
    %2199 = vmatprep.subr.mxu0 0.0
    %2200 = vmatpush1.xpose.msra.mxu0 0.0
    %2201 = vmatprep.subr.mxu0 0.0
    %2202 = vmatpush1.xpose.msra.mxu0 0.0
    %2203 = vmatprep.subr.mxu0 0.0
    %2204 = vmatpush1.xpose.msra.mxu0 0.0
    %2205 = vmatprep.subr.mxu0 0.0
    %2206 = vmatpush1.xpose.msra.mxu0 0.0
    %2207 = vmatprep.mubr.f32.mxu0 0.0
    %2208 = vmatmul.mubr.f32.gmra.mrb[0].mxu0 %v2139
    %v2209 = vpop.f32.mrb[0].mxu0
    %v2210 = vadd.f32 0.0, %v2209
    %v2211 = vpop.f32.mrb[0].mxu0
    %2212 = vdwg.mxu0
    %v2213 = vmax.f32 %v2130, -1.0
    %v2214 = vmax.f32 %v2210, -1.0
    %v2215 = vmin.f32 %v2213, 1.0
    %v2216 = vmin.f32 %v2214, 1.0
    %v2217 = vand.u32 2147483647, %v2215
    %v2218 = vand.u32 2147483647, %v2216
    %v2219 = vmul.f32 %v2215, %v2215
    %v2220 = vmul.f32 %v2216, %v2216
    %v2221 = vmul.f32 %v2215, %v2219
    %v2222 = vmul.f32 %v2216, %v2220
    %v2223 = vmul.f32 %v2219, 0.0421632
    %v2224 = vmul.f32 %v2220, 0.0421632
    %v2225 = vadd.f32 %v2223, 0.024181312
    %v2226 = vadd.f32 %v2224, 0.024181312
    %v2227 = vmul.f32 %v2225, %v2219
    %v2228 = vmul.f32 %v2226, %v2220
    %v2229 = vadd.f32 %v2227, 0.045470025
    %v2230 = vadd.f32 %v2228, 0.045470025
    %v2231 = vmul.f32 %v2229, %v2219
    %v2232 = vmul.f32 %v2230, %v2220
    %v2233 = vadd.f32 %v2231, 0.074953005
    %v2234 = vadd.f32 %v2232, 0.074953005
    %v2235 = vmul.f32 %v2233, %v2219
    %v2236 = vmul.f32 %v2234, %v2220
    %v2237 = vadd.f32 %v2235, 0.16666752
    %v2238 = vadd.f32 %v2236, 0.16666752
    %v2239 = vmul.f32 %v2221, %v2237
    %v2240 = vmul.f32 %v2222, %v2238
    %v2241 = vadd.f32 %v2215, %v2239
    %v2242 = vadd.f32 %v2216, %v2240
    %v2243 = vsub.f32 1.5707964, %v2241
    %v2244 = vsub.f32 1.5707964, %v2242
    %v2245 = vsub.f32 1.0, %v2217
    %v2246 = vsub.f32 1.0, %v2218
    %v2247 = vmul.f32 %v2245, 0.5
    %v2248 = vmul.f32 %v2246, 0.5
    %v2249 = vrsqrt.pop %v2247
    %v2250 = vmul.f32 %v2247, %v2249
    %vm2251 = vcmp.eq.f32.partialorder %v2247, inf
    %v2252 = vsel %vm2251, %v2247, %v2250
    %vm2253 = vcmp.eq.f32.partialorder %v2247, 0.0
    %v2254 = vand.u32 %v2247, 2147483648
    %v2255 = vsel %vm2253, %v2254, %v2252
    %v2256 = vrsqrt.pop %v2248
    %v2257 = vmul.f32 %v2248, %v2256
    %vm2258 = vcmp.eq.f32.partialorder %v2248, inf
    %v2259 = vsel %vm2258, %v2248, %v2257
    %vm2260 = vcmp.eq.f32.partialorder %v2248, 0.0
    %v2261 = vand.u32 %v2248, 2147483648
    %v2262 = vsel %vm2260, %v2261, %v2259
    %v2263 = vmul.f32 %v2255, %v2247
    %v2264 = vmul.f32 %v2262, %v2248
    %v2265 = vmul.f32 %v2247, 0.0421632
    %v2266 = vmul.f32 %v2248, 0.0421632
    %v2267 = vadd.f32 %v2265, 0.024181312
    %v2268 = vadd.f32 %v2266, 0.024181312
    %v2269 = vmul.f32 %v2267, %v2247
    %v2270 = vmul.f32 %v2268, %v2248
    %v2271 = vadd.f32 %v2269, 0.045470025
    %v2272 = vadd.f32 %v2270, 0.045470025
    %v2273 = vmul.f32 %v2271, %v2247
    %v2274 = vmul.f32 %v2272, %v2248
    %v2275 = vadd.f32 %v2273, 0.074953005
    %v2276 = vadd.f32 %v2274, 0.074953005
    %v2277 = vmul.f32 %v2275, %v2247
    %v2278 = vmul.f32 %v2276, %v2248
    %v2279 = vadd.f32 %v2277, 0.16666752
    %v2280 = vadd.f32 %v2278, 0.16666752
    %v2281 = vmul.f32 %v2263, %v2279
    %v2282 = vmul.f32 %v2264, %v2280
    %v2283 = vadd.f32 %v2255, %v2281
    %v2284 = vadd.f32 %v2262, %v2282
    %v2285 = vmul.f32 %v2283, 2.0
    %v2286 = vmul.f32 %v2284, 2.0
    %vm2287 = vcmp.ge.f32.partialorder %v2215, 0.0
    %vm2288 = vcmp.ge.f32.partialorder %v2216, 0.0
    %v2289 = vsub.f32 3.1415927, %v2285
    %v2290 = vsub.f32 3.1415927, %v2286
    %v2291 = vsel %vm2287, %v2285, %v2289
    %v2292 = vsel %vm2288, %v2286, %v2290
    %vm2293 = vcmp.le.f32.partialorder %v2217, 0.5
    %vm2294 = vcmp.le.f32.partialorder %v2218, 0.5
    %v2295 = vsel %vm2293, %v2243, %v2291
    %v2296 = vsel %vm2294, %v2244, %v2292
    %v2297 = vmul.f32 %v2295, 0.31830987
    %v2298 = vmul.f32 %v2296, 0.31830987
    %v2299 = vsub.f32 1.0, %v2297
    %v2300 = vsub.f32 1.0, %v2298
    %v2301 = vmul.f32 %v2299, %v2299
    %v2302 = vmul.f32 %v2300, %v2300
    %v2303 = vmul.f32 %v2301, %v2301
    %v2304 = vmul.f32 %v2302, %v2302
    %v2305 = vmul.f32 %v2303, %v2303
    %v2306 = vmul.f32 %v2304, %v2304
    %2307 = vrot.lane.b32.xlu0 %v1577, 48
    %v2308 = vpop.permute.xlu0 %2307
    %v2311 = vsel %vm476, %v2305, 0
    %2313 = vmatprep.subr.mxu0 0.0
    %2314 = vmatpush1.msra.mxu0 %v2308
    %2315 = vmatprep.subr.mxu0 0.0
    %2316 = vmatpush1.msra.mxu0 0.0
    %2317 = vmatprep.subr.mxu0 0.0
    %2318 = vmatpush1.msra.mxu0 0.0
    %2319 = vmatprep.subr.mxu0 0.0
    %2320 = vmatpush1.msra.mxu0 0.0
    %2321 = vmatprep.subr.mxu0 0.0
    %2322 = vmatpush1.msra.mxu0 0.0
    %2323 = vmatprep.subr.mxu0 0.0
    %2324 = vmatpush1.msra.mxu0 0.0
    %2325 = vmatprep.subr.mxu0 0.0
    %2326 = vmatpush1.msra.mxu0 0.0
    %2327 = vmatprep.subr.mxu0 0.0
    %2328 = vmatpush1.msra.mxu0 0.0
    %2329 = vmatprep.subr.mxu0 0.0
    %2330 = vmatpush1.msra.mxu0 0.0
    %2331 = vmatprep.subr.mxu0 0.0
    %2332 = vmatpush1.msra.mxu0 0.0
    %2333 = vmatprep.subr.mxu0 0.0
    %2334 = vmatpush1.msra.mxu0 0.0
    %2335 = vmatprep.subr.mxu0 0.0
    %2336 = vmatpush1.msra.mxu0 0.0
    %2337 = vmatprep.subr.mxu0 0.0
    %2338 = vmatpush1.msra.mxu0 0.0
    %2339 = vmatprep.subr.mxu0 0.0
    %2340 = vmatpush1.msra.mxu0 0.0
    %2341 = vmatprep.subr.mxu0 0.0
    %2342 = vmatpush1.msra.mxu0 0.0
    %2343 = vmatprep.subr.mxu0 0.0
    %2344 = vmatpush1.msra.mxu0 0.0
    %2345 = vmatprep.subr.mxu0 0.0
    %2346 = vmatpush1.msra.mxu0 0.0
    %2347 = vmatprep.subr.mxu0 0.0
    %2348 = vmatpush1.msra.mxu0 0.0
    %2349 = vmatprep.subr.mxu0 0.0
    %2350 = vmatpush1.msra.mxu0 0.0
    %2351 = vmatprep.subr.mxu0 0.0
    %2352 = vmatpush1.msra.mxu0 0.0
    %2353 = vmatprep.subr.mxu0 0.0
    %2354 = vmatpush1.msra.mxu0 0.0
    %2355 = vmatprep.subr.mxu0 0.0
    %2356 = vmatpush1.msra.mxu0 0.0
    %2357 = vmatprep.subr.mxu0 0.0
    %2358 = vmatpush1.msra.mxu0 0.0
    %2359 = vmatprep.subr.mxu0 0.0
    %2360 = vmatpush1.msra.mxu0 0.0
    %2361 = vmatprep.subr.mxu0 0.0
    %2362 = vmatpush1.msra.mxu0 0.0
    %2363 = vmatprep.subr.mxu0 0.0
    %2364 = vmatpush1.msra.mxu0 0.0
    %2365 = vmatprep.subr.mxu0 0.0
    %2366 = vmatpush1.msra.mxu0 0.0
    %2367 = vmatprep.subr.mxu0 0.0
    %2368 = vmatpush1.msra.mxu0 0.0
    %2369 = vmatprep.subr.mxu0 0.0
    %2370 = vmatpush1.msra.mxu0 0.0
    %2371 = vmatprep.subr.mxu0 0.0
    %2372 = vmatpush1.msra.mxu0 0.0
    %2373 = vmatprep.subr.mxu0 0.0
    %2374 = vmatpush1.msra.mxu0 0.0
    %2375 = vmatprep.subr.mxu0 0.0
    %2376 = vmatpush1.msra.mxu0 0.0
    %2377 = vmatprep.mubr.f32.mxu0 0.0
    %2378 = vmatmul.mubr.f32.gmra.mrb[0].mxu0 %v2311
    %v2379 = vpop.f32.mrb[0].mxu0
    %v2380 = vadd.f32 0.0, %v2379
    %v2381 = vpop.f32.mrb[0].mxu0
    %2382 = vdwg.mxu0
    %2383 = vrot.lane.b32.xlu0 %v1578, 48
    %v2384 = vpop.permute.xlu0 %2383
    %v2387 = vsel %vm476, %v2306, 0
    %2389 = vmatprep.subr.mxu0 0.0
    %2390 = vmatpush1.msra.mxu0 %v2384
    %2391 = vmatprep.subr.mxu0 0.0
    %2392 = vmatpush1.msra.mxu0 0.0
    %2393 = vmatprep.subr.mxu0 0.0
    %2394 = vmatpush1.msra.mxu0 0.0
    %2395 = vmatprep.subr.mxu0 0.0
    %2396 = vmatpush1.msra.mxu0 0.0
    %2397 = vmatprep.subr.mxu0 0.0
    %2398 = vmatpush1.msra.mxu0 0.0
    %2399 = vmatprep.subr.mxu0 0.0
    %2400 = vmatpush1.msra.mxu0 0.0
    %2401 = vmatprep.subr.mxu0 0.0
    %2402 = vmatpush1.msra.mxu0 0.0
    %2403 = vmatprep.subr.mxu0 0.0
    %2404 = vmatpush1.msra.mxu0 0.0
    %2405 = vmatprep.subr.mxu0 0.0
    %2406 = vmatpush1.msra.mxu0 0.0
    %2407 = vmatprep.subr.mxu0 0.0
    %2408 = vmatpush1.msra.mxu0 0.0
    %2409 = vmatprep.subr.mxu0 0.0
    %2410 = vmatpush1.msra.mxu0 0.0
    %2411 = vmatprep.subr.mxu0 0.0
    %2412 = vmatpush1.msra.mxu0 0.0
    %2413 = vmatprep.subr.mxu0 0.0
    %2414 = vmatpush1.msra.mxu0 0.0
    %2415 = vmatprep.subr.mxu0 0.0
    %2416 = vmatpush1.msra.mxu0 0.0
    %2417 = vmatprep.subr.mxu0 0.0
    %2418 = vmatpush1.msra.mxu0 0.0
    %2419 = vmatprep.subr.mxu0 0.0
    %2420 = vmatpush1.msra.mxu0 0.0
    %2421 = vmatprep.subr.mxu0 0.0
    %2422 = vmatpush1.msra.mxu0 0.0
    %2423 = vmatprep.subr.mxu0 0.0
    %2424 = vmatpush1.msra.mxu0 0.0
    %2425 = vmatprep.subr.mxu0 0.0
    %2426 = vmatpush1.msra.mxu0 0.0
    %2427 = vmatprep.subr.mxu0 0.0
    %2428 = vmatpush1.msra.mxu0 0.0
    %2429 = vmatprep.subr.mxu0 0.0
    %2430 = vmatpush1.msra.mxu0 0.0
    %2431 = vmatprep.subr.mxu0 0.0
    %2432 = vmatpush1.msra.mxu0 0.0
    %2433 = vmatprep.subr.mxu0 0.0
    %2434 = vmatpush1.msra.mxu0 0.0
    %2435 = vmatprep.subr.mxu0 0.0
    %2436 = vmatpush1.msra.mxu0 0.0
    %2437 = vmatprep.subr.mxu0 0.0
    %2438 = vmatpush1.msra.mxu0 0.0
    %2439 = vmatprep.subr.mxu0 0.0
    %2440 = vmatpush1.msra.mxu0 0.0
    %2441 = vmatprep.subr.mxu0 0.0
    %2442 = vmatpush1.msra.mxu0 0.0
    %2443 = vmatprep.subr.mxu0 0.0
    %2444 = vmatpush1.msra.mxu0 0.0
    %2445 = vmatprep.subr.mxu0 0.0
    %2446 = vmatpush1.msra.mxu0 0.0
    %2447 = vmatprep.subr.mxu0 0.0
    %2448 = vmatpush1.msra.mxu0 0.0
    %2449 = vmatprep.subr.mxu0 0.0
    %2450 = vmatpush1.msra.mxu0 0.0
    %2451 = vmatprep.subr.mxu0 0.0
    %2452 = vmatpush1.msra.mxu0 0.0
    %2453 = vmatprep.mubr.f32.mxu0 0.0
    %2454 = vmatmul.mubr.f32.gmra.mrb[0].mxu0 %v2387
    %v2455 = vpop.f32.mrb[0].mxu0
    %v2456 = vadd.f32 0.0, %v2455
    %v2457 = vpop.f32.mrb[0].mxu0
    %2458 = vdwg.mxu0
    %2461 = vrot.lane.b32.xlu0 %v2380, 16
    %v2462 = vpop.permute.xlu0 %2461
    %2463 = vrot.lane.b32.xlu0 %v2456, 16
    %v2464 = vpop.permute.xlu0 %2463
    %v2467 = vsel %vm189, %v1937, %v2462
    %v2468 = vsel %vm189, %v2014, %v2464
    %s2469 = scalar_lea.vmem %s3, 32
    %v2470 = vld [vmem:[%s2469] sm:$0xff]
    %v2471 = vld [vmem:[%s2469 + $0x8] sm:$0xff]
    %v2472 = vld [vmem:[%s2469 + $0x10] sm:$0xff]
    %v2473 = vld [vmem:[%s2469 + $0x18] sm:$0xff]
    %v2474 = vlaneseq
    %v2475 = vshrl.u32 %v2474, 7
    %v2476 = vsub.s32 3, %v2475
    %v2477 = vrot.slane %v1448, %v2476
    %v2479 = vsel %vm46, %v2467, 0
    %v2482 = vsel %vm46, %v2468, 0
    %2484 = vmatprep.subr.mxu0 0.0
    %2485 = vmatpush1.msra.mxu0 %v2470
    %2486 = vmatprep.subr.mxu0 0.0
    %2487 = vmatpush1.msra.mxu0 %v2471
    %2488 = vmatprep.subr.mxu0 0.0
    %2489 = vmatpush1.msra.mxu0 %v2472
    %2490 = vmatprep.subr.mxu0 0.0
    %2491 = vmatpush1.msra.mxu0 %v2473
    %2492 = vmatprep.subr.mxu0 0.0
    %2493 = vmatpush1.msra.mxu0 0.0
    %2494 = vmatprep.subr.mxu0 0.0
    %2495 = vmatpush1.msra.mxu0 0.0
    %2496 = vmatprep.subr.mxu0 0.0
    %2497 = vmatpush1.msra.mxu0 0.0
    %2498 = vmatprep.subr.mxu0 0.0
    %2499 = vmatpush1.msra.mxu0 0.0
    %2500 = vmatprep.subr.mxu0 0.0
    %2501 = vmatpush1.msra.mxu0 0.0
    %2502 = vmatprep.subr.mxu0 0.0
    %2503 = vmatpush1.msra.mxu0 0.0
    %2504 = vmatprep.subr.mxu0 0.0
    %2505 = vmatpush1.msra.mxu0 0.0
    %2506 = vmatprep.subr.mxu0 0.0
    %2507 = vmatpush1.msra.mxu0 0.0
    %2508 = vmatprep.subr.mxu0 0.0
    %2509 = vmatpush1.msra.mxu0 0.0
    %2510 = vmatprep.subr.mxu0 0.0
    %2511 = vmatpush1.msra.mxu0 0.0
    %2512 = vmatprep.subr.mxu0 0.0
    %2513 = vmatpush1.msra.mxu0 0.0
    %2514 = vmatprep.subr.mxu0 0.0
    %2515 = vmatpush1.msra.mxu0 0.0
    %2516 = vmatprep.subr.mxu0 0.0
    %2517 = vmatpush1.msra.mxu0 0.0
    %2518 = vmatprep.subr.mxu0 0.0
    %2519 = vmatpush1.msra.mxu0 0.0
    %2520 = vmatprep.subr.mxu0 0.0
    %2521 = vmatpush1.msra.mxu0 0.0
    %2522 = vmatprep.subr.mxu0 0.0
    %2523 = vmatpush1.msra.mxu0 0.0
    %2524 = vmatprep.subr.mxu0 0.0
    %2525 = vmatpush1.msra.mxu0 0.0
    %2526 = vmatprep.subr.mxu0 0.0
    %2527 = vmatpush1.msra.mxu0 0.0
    %2528 = vmatprep.subr.mxu0 0.0
    %2529 = vmatpush1.msra.mxu0 0.0
    %2530 = vmatprep.subr.mxu0 0.0
    %2531 = vmatpush1.msra.mxu0 0.0
    %2532 = vmatprep.subr.mxu0 0.0
    %2533 = vmatpush1.msra.mxu0 0.0
    %2534 = vmatprep.subr.mxu0 0.0
    %2535 = vmatpush1.msra.mxu0 0.0
    %2536 = vmatprep.subr.mxu0 0.0
    %2537 = vmatpush1.msra.mxu0 0.0
    %2538 = vmatprep.subr.mxu0 0.0
    %2539 = vmatpush1.msra.mxu0 0.0
    %2540 = vmatprep.subr.mxu0 0.0
    %2541 = vmatpush1.msra.mxu0 0.0
    %2542 = vmatprep.subr.mxu0 0.0
    %2543 = vmatpush1.msra.mxu0 0.0
    %2544 = vmatprep.subr.mxu0 0.0
    %2545 = vmatpush1.msra.mxu0 0.0
    %2546 = vmatprep.subr.mxu0 0.0
    %2547 = vmatpush1.msra.mxu0 0.0
    %2548 = vmatprep.mubr.f32.mxu0 0.0
    %2549 = vmatmul.mubr.f32.gmra.mrb[0].mxu0 %v2479
    %v2550 = vpop.f32.mrb[0].mxu0
    %v2551 = vadd.f32 %v2477, %v2550
    %v2552 = vpop.f32.mrb[0].mxu0
    %2553 = vmatprep.mubr.f32.mxu0 0.0
    %2554 = vmatmul.mubr.f32.gmra.mrb[0].mxu0 %v2482
    %v2555 = vpop.f32.mrb[0].mxu0
    %v2556 = vadd.f32 %v2477, %v2555
    %v2557 = vpop.f32.mrb[0].mxu0
    %2558 = vdwg.mxu0
    %v2559 = vadd.f32 %v2551, %v1445
    %v2560 = vadd.f32 %v2556, %v1446
    %v2561 = vsel %vm46, %v2559, 0.0
    %2562 = vadd.xlane.f32.xlu0 %v2561
    %v2563 = vpop.xlane.xlu0 %2562
    %v2564 = vsel %vm46, %v2560, 0.0
    %2565 = vadd.xlane.f32.xlu0 %v2564
    %v2566 = vpop.xlane.xlu0 %2565
    %v2567 = vmul.f32 %v2563, %v53
    %v2568 = vmul.f32 %v2566, %v53
    %v2569 = vsub.f32 %v2559, %v2567
    %v2570 = vsub.f32 %v2560, %v2568
    %v2571 = vmul.f32 %v2569, %v2569
    %v2572 = vmul.f32 %v2570, %v2570
    %v2573 = vsel %vm46, %v2571, 0.0
    %2574 = vadd.xlane.f32.xlu0 %v2573
    %v2575 = vpop.xlane.xlu0 %2574
    %v2576 = vsel %vm46, %v2572, 0.0
    %2577 = vadd.xlane.f32.xlu0 %v2576
    %v2578 = vpop.xlane.xlu0 %2577
    %v2579 = vmul.f32 %v2575, %v53
    %v2580 = vmul.f32 %v2578, %v53
    %v2581 = vadd.f32 %v2579, 1e-05
    %v2582 = vadd.f32 %v2580, 1e-05
    %v2583 = vrsqrt.pop %v2581
    %v2584 = vrsqrt.pop %v2582
    %v2585 = vmul.f32 %v2569, %v2583
    %v2586 = vmul.f32 %v2570, %v2584
    %v2587 = vlaneseq
    %v2588 = vshrl.u32 %v2587, 7
    %v2589 = vsub.s32 4, %v2588
    %v2590 = vrot.slane %v1448, %v2589
    %v2591 = vmul.f32 %v2585, %v2590
    %v2592 = vmul.f32 %v2586, %v2590
    %v2593 = vlaneseq
    %v2594 = vshrl.u32 %v2593, 7
    %v2595 = vsub.s32 5, %v2594
    %v2596 = vrot.slane %v1448, %v2595
    %v2597 = vadd.f32 %v2591, %v2596
    %v2598 = vadd.f32 %v2592, %v2596
    %s2599 = scalar_lea.vmem %s4, 32
    %v2600 = vld [vmem:[%s2599] sm:$0xff]
    %v2601 = vld [vmem:[%s2599 + $0x8] sm:$0xff]
    %v2602 = vld [vmem:[%s2599 + $0x10] sm:$0xff]
    %v2603 = vld [vmem:[%s2599 + $0x18] sm:$0xff]
    %v2604 = vlaneseq
    %v2605 = vshrl.u32 %v2604, 7
    %v2606 = vsub.s32 6, %v2605
    %v2607 = vrot.slane %v1448, %v2606
    %v2609 = vsel %vm46, %v2597, 0
    %v2612 = vsel %vm46, %v2598, 0
    %2614 = vmatprep.subr.mxu0 0.0
    %2615 = vmatpush1.msra.mxu0 %v2600
    %2616 = vmatprep.subr.mxu0 0.0
    %2617 = vmatpush1.msra.mxu0 %v2601
    %2618 = vmatprep.subr.mxu0 0.0
    %2619 = vmatpush1.msra.mxu0 %v2602
    %2620 = vmatprep.subr.mxu0 0.0
    %2621 = vmatpush1.msra.mxu0 %v2603
    %2622 = vmatprep.subr.mxu0 0.0
    %2623 = vmatpush1.msra.mxu0 0.0
    %2624 = vmatprep.subr.mxu0 0.0
    %2625 = vmatpush1.msra.mxu0 0.0
    %2626 = vmatprep.subr.mxu0 0.0
    %2627 = vmatpush1.msra.mxu0 0.0
    %2628 = vmatprep.subr.mxu0 0.0
    %2629 = vmatpush1.msra.mxu0 0.0
    %2630 = vmatprep.subr.mxu0 0.0
    %2631 = vmatpush1.msra.mxu0 0.0
    %2632 = vmatprep.subr.mxu0 0.0
    %2633 = vmatpush1.msra.mxu0 0.0
    %2634 = vmatprep.subr.mxu0 0.0
    %2635 = vmatpush1.msra.mxu0 0.0
    %2636 = vmatprep.subr.mxu0 0.0
    %2637 = vmatpush1.msra.mxu0 0.0
    %2638 = vmatprep.subr.mxu0 0.0
    %2639 = vmatpush1.msra.mxu0 0.0
    %2640 = vmatprep.subr.mxu0 0.0
    %2641 = vmatpush1.msra.mxu0 0.0
    %2642 = vmatprep.subr.mxu0 0.0
    %2643 = vmatpush1.msra.mxu0 0.0
    %2644 = vmatprep.subr.mxu0 0.0
    %2645 = vmatpush1.msra.mxu0 0.0
    %2646 = vmatprep.subr.mxu0 0.0
    %2647 = vmatpush1.msra.mxu0 0.0
    %2648 = vmatprep.subr.mxu0 0.0
    %2649 = vmatpush1.msra.mxu0 0.0
    %2650 = vmatprep.subr.mxu0 0.0
    %2651 = vmatpush1.msra.mxu0 0.0
    %2652 = vmatprep.subr.mxu0 0.0
    %2653 = vmatpush1.msra.mxu0 0.0
    %2654 = vmatprep.subr.mxu0 0.0
    %2655 = vmatpush1.msra.mxu0 0.0
    %2656 = vmatprep.subr.mxu0 0.0
    %2657 = vmatpush1.msra.mxu0 0.0
    %2658 = vmatprep.subr.mxu0 0.0
    %2659 = vmatpush1.msra.mxu0 0.0
    %2660 = vmatprep.subr.mxu0 0.0
    %2661 = vmatpush1.msra.mxu0 0.0
    %2662 = vmatprep.subr.mxu0 0.0
    %2663 = vmatpush1.msra.mxu0 0.0
    %2664 = vmatprep.subr.mxu0 0.0
    %2665 = vmatpush1.msra.mxu0 0.0
    %2666 = vmatprep.subr.mxu0 0.0
    %2667 = vmatpush1.msra.mxu0 0.0
    %2668 = vmatprep.subr.mxu0 0.0
    %2669 = vmatpush1.msra.mxu0 0.0
    %2670 = vmatprep.subr.mxu0 0.0
    %2671 = vmatpush1.msra.mxu0 0.0
    %2672 = vmatprep.subr.mxu0 0.0
    %2673 = vmatpush1.msra.mxu0 0.0
    %2674 = vmatprep.subr.mxu0 0.0
    %2675 = vmatpush1.msra.mxu0 0.0
    %2676 = vmatprep.subr.mxu0 0.0
    %2677 = vmatpush1.msra.mxu0 0.0
    %2678 = vmatprep.mubr.f32.mxu0 0.0
    %2679 = vmatmul.mubr.f32.gmra.mrb[0].mxu0 %v2609
    %v2680 = vpop.f32.mrb[0].mxu0
    %v2681 = vadd.f32 %v2607, %v2680
    %v2682 = vpop.f32.mrb[0].mxu0
    %2683 = vmatprep.mubr.f32.mxu0 0.0
    %2684 = vmatmul.mubr.f32.gmra.mrb[0].mxu0 %v2612
    %v2685 = vpop.f32.mrb[0].mxu0
    %v2686 = vadd.f32 %v2607, %v2685
    %v2687 = vpop.f32.mrb[0].mxu0
    %2688 = vdwg.mxu0
    %v2689 = vmul.f32 %v2681, 0.5
    %v2690 = vmul.f32 %v2686, 0.5
    %v2691 = vmul.f32 %v2681, 0.70710677
    %v2692 = vmul.f32 %v2686, 0.70710677
    %v2693 = vand.u32 2147483647, %v2691
    %v2694 = vand.u32 2147483647, %v2692
    %v2695 = vmul.f32 %v2693, 0.3275911
    %v2696 = vmul.f32 %v2694, 0.3275911
    %v2697 = vadd.f32 %v2695, 1.0
    %v2698 = vadd.f32 %v2696, 1.0
    %v2699 = vrcp.pop %v2697
    %v2700 = vmul.f32 1.0, %v2699
    %v2701 = vrcp.pop %v2698
    %v2702 = vmul.f32 1.0, %v2701
    %v2703 = vmul.f32 %v2700, 1.0614054
    %v2704 = vmul.f32 %v2702, 1.0614054
    %v2705 = vadd.f32 %v2703, -1.4531521
    %v2706 = vadd.f32 %v2704, -1.4531521
    %v2707 = vmul.f32 %v2705, %v2700
    %v2708 = vmul.f32 %v2706, %v2702
    %v2709 = vadd.f32 %v2707, 1.4214138
    %v2710 = vadd.f32 %v2708, 1.4214138
    %v2711 = vmul.f32 %v2709, %v2700
    %v2712 = vmul.f32 %v2710, %v2702
    %v2713 = vadd.f32 %v2711, -0.28449672
    %v2714 = vadd.f32 %v2712, -0.28449672
    %v2715 = vmul.f32 %v2713, %v2700
    %v2716 = vmul.f32 %v2714, %v2702
    %v2717 = vadd.f32 %v2715, 0.2548296
    %v2718 = vadd.f32 %v2716, 0.2548296
    %v2719 = vmul.f32 %v2717, %v2700
    %v2720 = vmul.f32 %v2718, %v2702
    %v2721 = vsub.f32 0.0, %v2693
    %v2722 = vsub.f32 0.0, %v2694
    %v2723 = vmul.f32 %v2721, %v2693
    %v2724 = vmul.f32 %v2722, %v2694
    %v2725 = vmul.f32 %v2723, 1.442695
    %v2726 = vpow.pop %v2725
    %v2727 = vmul.f32 %v2724, 1.442695
    %v2728 = vpow.pop %v2727
    %v2729 = vmul.f32 %v2719, %v2726
    %v2730 = vmul.f32 %v2720, %v2728
    %v2731 = vsub.f32 1.0, %v2729
    %v2732 = vsub.f32 1.0, %v2730
    %vm2733 = vcmp.ge.f32.partialorder %v2691, 0.0
    %vm2734 = vcmp.ge.f32.partialorder %v2692, 0.0
    %v2735 = vsub.f32 0.0, %v2731
    %v2736 = vsub.f32 0.0, %v2732
    %v2737 = vsel %vm2733, %v2731, %v2735
    %v2738 = vsel %vm2734, %v2732, %v2736
    %v2739 = vadd.f32 %v2737, 1.0
    %v2740 = vadd.f32 %v2738, 1.0
    %v2741 = vmul.f32 %v2689, %v2739
    %v2742 = vmul.f32 %v2690, %v2740
    %s2743 = scalar_lea.vmem %s5, 64
    %v2744 = vld [vmem:[%s2743] sm:$0xff]
    %v2745 = vld [vmem:[%s2743 + $0x8] sm:$0xff]
    %v2746 = vld [vmem:[%s2743 + $0x10] sm:$0xff]
    %v2747 = vld [vmem:[%s2743 + $0x18] sm:$0xff]
    %v2748 = vld [vmem:[%s2743 + $0x20] sm:$0xff]
    %v2749 = vld [vmem:[%s2743 + $0x28] sm:$0xff]
    %v2750 = vld [vmem:[%s2743 + $0x30] sm:$0xff]
    %v2751 = vld [vmem:[%s2743 + $0x38] sm:$0xff]
    %v2752 = vlaneseq
    %v2753 = vshrl.u32 %v2752, 7
    %v2754 = vsub.s32 7, %v2753
    %v2755 = vrot.slane %v1448, %v2754
    %v2757 = vsel %vm1363, %v2741, 0
    %v2760 = vsel %vm1363, %v2742, 0
    %2762 = vmatprep.subr.mxu0 0.0
    %2763 = vmatpush1.msra.mxu0 %v2744
    %2764 = vmatprep.subr.mxu0 0.0
    %2765 = vmatpush1.msra.mxu0 %v2745
    %2766 = vmatprep.subr.mxu0 0.0
    %2767 = vmatpush1.msra.mxu0 %v2746
    %2768 = vmatprep.subr.mxu0 0.0
    %2769 = vmatpush1.msra.mxu0 %v2747
    %2770 = vmatprep.subr.mxu0 0.0
    %2771 = vmatpush1.msra.mxu0 %v2748
    %2772 = vmatprep.subr.mxu0 0.0
    %2773 = vmatpush1.msra.mxu0 %v2749
    %2774 = vmatprep.subr.mxu0 0.0
    %2775 = vmatpush1.msra.mxu0 %v2750
    %2776 = vmatprep.subr.mxu0 0.0
    %2777 = vmatpush1.msra.mxu0 %v2751
    %2778 = vmatprep.subr.mxu0 0.0
    %2779 = vmatpush1.msra.mxu0 0.0
    %2780 = vmatprep.subr.mxu0 0.0
    %2781 = vmatpush1.msra.mxu0 0.0
    %2782 = vmatprep.subr.mxu0 0.0
    %2783 = vmatpush1.msra.mxu0 0.0
    %2784 = vmatprep.subr.mxu0 0.0
    %2785 = vmatpush1.msra.mxu0 0.0
    %2786 = vmatprep.subr.mxu0 0.0
    %2787 = vmatpush1.msra.mxu0 0.0
    %2788 = vmatprep.subr.mxu0 0.0
    %2789 = vmatpush1.msra.mxu0 0.0
    %2790 = vmatprep.subr.mxu0 0.0
    %2791 = vmatpush1.msra.mxu0 0.0
    %2792 = vmatprep.subr.mxu0 0.0
    %2793 = vmatpush1.msra.mxu0 0.0
    %2794 = vmatprep.subr.mxu0 0.0
    %2795 = vmatpush1.msra.mxu0 0.0
    %2796 = vmatprep.subr.mxu0 0.0
    %2797 = vmatpush1.msra.mxu0 0.0
    %2798 = vmatprep.subr.mxu0 0.0
    %2799 = vmatpush1.msra.mxu0 0.0
    %2800 = vmatprep.subr.mxu0 0.0
    %2801 = vmatpush1.msra.mxu0 0.0
    %2802 = vmatprep.subr.mxu0 0.0
    %2803 = vmatpush1.msra.mxu0 0.0
    %2804 = vmatprep.subr.mxu0 0.0
    %2805 = vmatpush1.msra.mxu0 0.0
    %2806 = vmatprep.subr.mxu0 0.0
    %2807 = vmatpush1.msra.mxu0 0.0
    %2808 = vmatprep.subr.mxu0 0.0
    %2809 = vmatpush1.msra.mxu0 0.0
    %2810 = vmatprep.subr.mxu0 0.0
    %2811 = vmatpush1.msra.mxu0 0.0
    %2812 = vmatprep.subr.mxu0 0.0
    %2813 = vmatpush1.msra.mxu0 0.0
    %2814 = vmatprep.subr.mxu0 0.0
    %2815 = vmatpush1.msra.mxu0 0.0
    %2816 = vmatprep.subr.mxu0 0.0
    %2817 = vmatpush1.msra.mxu0 0.0
    %2818 = vmatprep.subr.mxu0 0.0
    %2819 = vmatpush1.msra.mxu0 0.0
    %2820 = vmatprep.subr.mxu0 0.0
    %2821 = vmatpush1.msra.mxu0 0.0
    %2822 = vmatprep.subr.mxu0 0.0
    %2823 = vmatpush1.msra.mxu0 0.0
    %2824 = vmatprep.subr.mxu0 0.0
    %2825 = vmatpush1.msra.mxu0 0.0
    %2826 = vmatprep.mubr.f32.mxu0 0.0
    %2827 = vmatmul.mubr.f32.gmra.mrb[0].mxu0 %v2757
    %v2828 = vpop.f32.mrb[0].mxu0
    %v2829 = vadd.f32 %v2755, %v2828
    %v2830 = vpop.f32.mrb[0].mxu0
    %2831 = vmatprep.mubr.f32.mxu0 0.0
    %2832 = vmatmul.mubr.f32.gmra.mrb[0].mxu0 %v2760
    %v2833 = vpop.f32.mrb[0].mxu0
    %v2834 = vadd.f32 %v2755, %v2833
    %v2835 = vpop.f32.mrb[0].mxu0
    %2836 = vdwg.mxu0
    %v2837 = vadd.f32 %v2829, %v2559
    %v2838 = vadd.f32 %v2834, %v2560
    %s2839 = scalar_lea.vmem %s6, 16
    %v2840 = vld [vmem:[%s2839] sm:$0xff]
    %v2841 = vsel %vm46, %v2837, 0.0
    %2842 = vadd.xlane.f32.xlu0 %v2841
    %v2843 = vpop.xlane.xlu0 %2842
    %v2844 = vsel %vm46, %v2838, 0.0
    %2845 = vadd.xlane.f32.xlu0 %v2844
    %v2846 = vpop.xlane.xlu0 %2845
    %v2847 = vmul.f32 %v2843, %v53
    %v2848 = vmul.f32 %v2846, %v53
    %v2849 = vsub.f32 %v2837, %v2847
    %v2850 = vsub.f32 %v2838, %v2848
    %v2851 = vmul.f32 %v2849, %v2849
    %v2852 = vmul.f32 %v2850, %v2850
    %v2853 = vsel %vm46, %v2851, 0.0
    %2854 = vadd.xlane.f32.xlu0 %v2853
    %v2855 = vpop.xlane.xlu0 %2854
    %v2856 = vsel %vm46, %v2852, 0.0
    %2857 = vadd.xlane.f32.xlu0 %v2856
    %v2858 = vpop.xlane.xlu0 %2857
    %v2859 = vmul.f32 %v2855, %v53
    %v2860 = vmul.f32 %v2858, %v53
    %v2861 = vadd.f32 %v2859, 1e-05
    %v2862 = vadd.f32 %v2860, 1e-05
    %v2863 = vrsqrt.pop %v2861
    %v2864 = vrsqrt.pop %v2862
    %v2865 = vmul.f32 %v2849, %v2863
    %v2866 = vmul.f32 %v2850, %v2864
    %v2867 = vlaneseq
    %v2868 = vshrl.u32 %v2867, 7
    %v2869 = vsub.s32 0, %v2868
    %v2870 = vrot.slane %v2840, %v2869
    %v2871 = vmul.f32 %v2865, %v2870
    %v2872 = vmul.f32 %v2866, %v2870
    %v2873 = vlaneseq
    %v2874 = vshrl.u32 %v2873, 7
    %v2875 = vsub.s32 1, %v2874
    %v2876 = vrot.slane %v2840, %v2875
    %v2877 = vadd.f32 %v2871, %v2876
    %v2878 = vadd.f32 %v2872, %v2876
    %v2879 = vmul.f32 %v2877, %v178
    %v2880 = vmul.f32 %v2878, %v183
    %2881 = vst.msk [vmem:[#allocation5] sm:$0xff] %vm46, %v2879
    %2882 = vst.msk [vmem:[#allocation5 + $0x8] sm:$0xff] %vm46, %v2880
    // Predicated region
    $region34: #{tpu_custom_call.1} parent=1 // pred_check
      _
    $region35: #{tpu_custom_call.1} parent=1 // pred_check_branch
      %2884 = sbr.rel (0) target = $region37
    $region36: #{tpu_custom_call.1} parent=1 // pred_region
      %s2886 = ssub.s32 256, 256
      %2887 = vsyncadd [#allocation4], %s2886
      %s2888 = sshll.u32 [#allocation5], 4
      %s2889 = int_to_ptr.vmem [resolvable:$true] %s2888
      %2894 = dma.vmem_to_hbm [thread:$0]  %s2889, 256, %s7, [#allocation4], 128, 128, 8
    $region37: #{tpu_custom_call.1} parent=1 // pred_fallthru
      _
    // Predicated region
    $region38: #{tpu_custom_call.1} parent=1 // pred_check
      _
    $region39: #{tpu_custom_call.1} parent=1 // pred_check_branch
      %2896 = sbr.rel (0) target = $region41
    $region40: #{tpu_custom_call.1} parent=1 // pred_region
      %2897 = dma.done [#allocation4], 256
    $region41: #{tpu_custom_call.1} parent=1 // pred_fallthru
      _
    %2898 = vsyncpa [#allocation3], 1
    %2899 = vsyncpa [#allocation4], 1

</llo_original>
